<compile_context>
chip_gen: v7x
topology: tpu7x:2x2x1
jax: 0.10.0
libtpu: 0.0.40
codegen_flags: <defaults>
</compile_context>

<pallas_src>
import jax
import jax.numpy as jnp
from jax.experimental import pallas as pl
from jax.experimental.pallas import tpu as pltpu

HIDDEN_DIM = 200            # cfg.hidden_dim
IN_FEATURES = 80 * 80       # fixed by the module (nn.Linear(80*80, hidden_dim))
NUM_OUTPUTS = 6             # Pong action space size
PADDED_OUT = 128            # lane-dense output width; real logits in cols [:6]
TILE_B = 256                # batch tile (raise to 512-1024 on v5e/v6e if desired)
NEG_PAD = -1e30             # bias for padded logit lanes -> ignored by logsumexp


def _round_up(n, m):
    return ((n + m - 1) // m) * m


def mlp_policy_kernel(x_ref, w1_ref, b1_ref, w2_ref, b2_ref,
                      logits_ref, logprobs_ref):
    # ---- feature = x_tile @ W1 + b1 : bf16 operands, f32 accumulate (MXU) ----
    feat = jnp.dot(x_ref[...], w1_ref[...],
                   preferred_element_type=jnp.float32) + b1_ref[...]   # (tb, H)

    # ---- logits = feature @ W2_pad + b2_pad (128 lane-dense columns) ----
    # Padded columns have zero weights and NEG_PAD bias, so they never win the
    # max and contribute exactly 0 to the exp-sum.
    logits = jnp.dot(feat, w2_ref[...],
                     preferred_element_type=jnp.float32) + b2_ref[...]  # (tb, 128)
    logits_ref[...] = logits

    # ---- Categorical(logits=...): logits - logsumexp(logits) ----
    m = jnp.max(logits, axis=-1, keepdims=True)
    z = jnp.sum(jnp.exp(logits - m), axis=-1, keepdims=True)
    logprobs_ref[...] = logits - m - jnp.log(z)


def mlp_policy_forward(x, w1, b1, w2, b2):
    """x: (B, 80, 80) f32 -> (logits, log_probs), each (B, NUM_OUTPUTS) f32."""
    B = x.shape[0]
    x_flat = x.reshape(B, IN_FEATURES)                       # nn.Flatten()

    # Batch tiling: pad B up to a multiple of the tile (rows padded with zeros
    # are sliced away at the end).
    tile_b = min(TILE_B, _round_up(B, 8))
    b_pad = _round_up(B, tile_b)
    if b_pad != B:
        x_flat = jnp.pad(x_flat, ((0, b_pad - B), (0, 0)))

    # Bandwidth-heavy operands in bf16 (f32 accumulation inside the kernel).
    x_bf16 = x_flat.astype(jnp.bfloat16)
    w1_bf16 = w1.astype(jnp.bfloat16)

    # Lane-dense actor weights: pad N from 6 -> 128. Padded columns: zero
    # weights, NEG_PAD bias.
    w2_pad = jnp.zeros((HIDDEN_DIM, PADDED_OUT), jnp.float32)
    w2_pad = w2_pad.at[:, :NUM_OUTPUTS].set(w2.astype(jnp.float32))
    b2_pad = jnp.full((1, PADDED_OUT), NEG_PAD, jnp.float32)
    b2_pad = b2_pad.at[0, :NUM_OUTPUTS].set(b2.astype(jnp.float32))
    b1_2d = b1.reshape(1, HIDDEN_DIM).astype(jnp.float32)

    grid = (b_pad // tile_b,)

    cost = pl.CostEstimate(
        flops=2 * b_pad * (IN_FEATURES * HIDDEN_DIM + HIDDEN_DIM * PADDED_OUT),
        transcendentals=b_pad * (PADDED_OUT + 1),
        bytes_accessed=(x_bf16.size * 2 + w1_bf16.size * 2
                        + w2_pad.size * 4 + b1_2d.size * 4 + b2_pad.size * 4
                        + 2 * b_pad * PADDED_OUT * 4),
    )

    logits_pad, logprobs_pad = pl.pallas_call(
        mlp_policy_kernel,
        out_shape=(
            jax.ShapeDtypeStruct((b_pad, PADDED_OUT), jnp.float32),  # logits
            jax.ShapeDtypeStruct((b_pad, PADDED_OUT), jnp.float32),  # log_probs
        ),
        grid_spec=pltpu.PrefetchScalarGridSpec(
            num_scalar_prefetch=0,
            grid=grid,
            in_specs=[
                # x: tiled over batch, double-buffered behind the matmul.
                pl.BlockSpec((tile_b, IN_FEATURES), lambda i: (i, 0)),
                # Weights/biases: resident across all grid iterations.
                pl.BlockSpec((IN_FEATURES, HIDDEN_DIM), lambda i: (0, 0)),
                pl.BlockSpec((1, HIDDEN_DIM), lambda i: (0, 0)),
                pl.BlockSpec((HIDDEN_DIM, PADDED_OUT), lambda i: (0, 0)),
                pl.BlockSpec((1, PADDED_OUT), lambda i: (0, 0)),
            ],
            out_specs=[
                pl.BlockSpec((tile_b, PADDED_OUT), lambda i: (i, 0)),
                pl.BlockSpec((tile_b, PADDED_OUT), lambda i: (i, 0)),
            ],
        ),
        compiler_params=pltpu.CompilerParams(
            dimension_semantics=("parallel",),   # shards batch across TCs (v7x)
            vmem_limit_bytes=32 << 20,           # safe on v7x's 64 MiB VMEM
        ),
        cost_estimate=cost,
    )(x_bf16, w1_bf16, b1_2d, w2_pad, b2_pad)

    # Drop batch padding and the padded logit lanes.
    return logits_pad[:B, :NUM_OUTPUTS], logprobs_pad[:B, :NUM_OUTPUTS]


def init_params(key):
    """Deterministic init mirroring torch.nn.Linear default U(-1/sqrt(fan_in))."""
    k1, k2, k3, k4 = jax.random.split(key, 4)
    lim1 = 1.0 / jnp.sqrt(IN_FEATURES)
    lim2 = 1.0 / jnp.sqrt(HIDDEN_DIM)
    w1 = jax.random.uniform(k1, (IN_FEATURES, HIDDEN_DIM), jnp.float32,
                            -lim1, lim1)
    b1 = jax.random.uniform(k2, (HIDDEN_DIM,), jnp.float32, -lim1, lim1)
    w2 = jax.random.uniform(k3, (HIDDEN_DIM, NUM_OUTPUTS), jnp.float32,
                            -lim2, lim2)
    b2 = jax.random.uniform(k4, (NUM_OUTPUTS,), jnp.float32, -lim2, lim2)
    return w1, b1, w2, b2


if __name__ == "__main__":
    key = jax.random.PRNGKey(0)
    k_x, k_p = jax.random.split(key)

    batch = 2
    x = jax.random.normal(k_x, (batch, 80, 80), jnp.float32)
    w1, b1, w2, b2 = init_params(k_p)

    logits, log_probs = jax.jit(mlp_policy_forward)(x, w1, b1, w2, b2)
    jax.block_until_ready((logits, log_probs))

    # Reference matching the kernel's numerics (bf16 x / W1, f32 accumulate).
    x_bf = x.reshape(batch, -1).astype(jnp.bfloat16).astype(jnp.float32)
    w1_bf = w1.astype(jnp.bfloat16).astype(jnp.float32)
    feat_ref = x_bf @ w1_bf + b1
    logits_ref = feat_ref @ w2 + b2
    logprobs_ref = logits_ref - jax.scipy.special.logsumexp(
        logits_ref, axis=-1, keepdims=True)
    assert logits.shape == (batch, NUM_OUTPUTS)
    assert log_probs.shape == (batch, NUM_OUTPUTS)
    assert jnp.allclose(logits, logits_ref, atol=1e-2, rtol=1e-2)
    assert jnp.allclose(log_probs, logprobs_ref, atol=1e-2, rtol=1e-2)

    # TODO(synk): Categorical.sample() (stateful torch RNG draw) is not
    # reproduced; logits + normalized log-probs fully define the distribution.
    print("KERNEL_OK")
</pallas_src>

<mosaic_0001>
module attributes {stable_mosaic.version = 11 : i64} {
  func.func @mlp_policy_kernel(%arg0: i32, %arg1: memref<8x6400xbf16, #tpu.memory_space<vmem>>, %arg2: memref<6400x200xbf16, #tpu.memory_space<vmem>>, %arg3: memref<1x200xf32, #tpu.memory_space<vmem>>, %arg4: memref<200x128xf32, #tpu.memory_space<vmem>>, %arg5: memref<1x128xf32, #tpu.memory_space<vmem>>, %arg6: memref<8x128xf32, #tpu.memory_space<vmem>>, %arg7: memref<8x128xf32, #tpu.memory_space<vmem>>) attributes {dimension_semantics = [#tpu.dimension_semantics<parallel>], iteration_bounds = array<i64: 1>, scalar_prefetch = 0 : i64, scratch_operands = 0 : i64, tpu.core_type = #tpu.core_type<tc>, window_params = [{transform_indices = @transform_0, window_bounds = array<i64: 8, 6400>}, {pipeline_mode = #tpu.pipeline_mode<synchronous>, transform_indices = @transform_1, window_bounds = array<i64: 6400, 200>}, {pipeline_mode = #tpu.pipeline_mode<synchronous>, transform_indices = @transform_2, window_bounds = array<i64: 1, 200>}, {pipeline_mode = #tpu.pipeline_mode<synchronous>, transform_indices = @transform_3, window_bounds = array<i64: 200, 128>}, {pipeline_mode = #tpu.pipeline_mode<synchronous>, transform_indices = @transform_4, window_bounds = array<i64: 1, 128>}, {transform_indices = @transform_5, window_bounds = array<i64: 8, 128>}, {transform_indices = @transform_6, window_bounds = array<i64: 8, 128>}]} {
    %c0 = arith.constant 0 : index
    %c0_0 = arith.constant 0 : index
    %0 = vector.load %arg1[%c0, %c0_0] : memref<8x6400xbf16, #tpu.memory_space<vmem>>, vector<8x6400xbf16>
    %c0_1 = arith.constant 0 : index
    %c0_2 = arith.constant 0 : index
    %1 = vector.load %arg2[%c0_1, %c0_2] : memref<6400x200xbf16, #tpu.memory_space<vmem>>, vector<6400x200xbf16>
    %cst = arith.constant dense<0.000000e+00> : vector<8x200xf32>
    %2 = tpu.matmul %0, %1, %cst {dimension_numbers = #tpu.dot_dimension_numbers<[1], [0], [0], [1], [0, 0, 1, 1], [], []>} : vector<8x6400xbf16>, vector<6400x200xbf16>, vector<8x200xf32> -> vector<8x200xf32>
    %c0_3 = arith.constant 0 : index
    %c0_4 = arith.constant 0 : index
    %3 = vector.load %arg3[%c0_3, %c0_4] : memref<1x200xf32, #tpu.memory_space<vmem>>, vector<1x200xf32>
    %4 = vector.broadcast %3 : vector<1x200xf32> to vector<8x200xf32>
    %5 = arith.addf %2, %4 : vector<8x200xf32>
    %c0_5 = arith.constant 0 : index
    %c0_6 = arith.constant 0 : index
    %6 = vector.load %arg4[%c0_5, %c0_6] : memref<200x128xf32, #tpu.memory_space<vmem>>, vector<200x128xf32>
    %cst_7 = arith.constant dense<0.000000e+00> : vector<8x128xf32>
    %7 = tpu.matmul %5, %6, %cst_7 {dimension_numbers = #tpu.dot_dimension_numbers<[1], [0], [0], [1], [0, 0, 1, 1], [], []>} : vector<8x200xf32>, vector<200x128xf32>, vector<8x128xf32> -> vector<8x128xf32>
    %c0_8 = arith.constant 0 : index
    %c0_9 = arith.constant 0 : index
    %8 = vector.load %arg5[%c0_8, %c0_9] : memref<1x128xf32, #tpu.memory_space<vmem>>, vector<1x128xf32>
    %9 = vector.broadcast %8 : vector<1x128xf32> to vector<8x128xf32>
    %10 = arith.addf %7, %9 : vector<8x128xf32>
    %c0_10 = arith.constant 0 : index
    %c0_11 = arith.constant 0 : index
    %11 = vector.load %arg6[%c0_10, %c0_11] : memref<8x128xf32, #tpu.memory_space<vmem>>, vector<8x128xf32>
    tpu.vector_store %arg6[%c0_10, %c0_11], %10 {strides = array<i32>} : memref<8x128xf32, #tpu.memory_space<vmem>>, vector<8x128xf32>,
    %cst_12 = arith.constant dense<0xFF800000> : vector<8xf32>
    %12 = vector.multi_reduction <maximumf>, %10, %cst_12 [1] : vector<8x128xf32> to vector<8xf32>
    %13 = vector.shape_cast %12 : vector<8xf32> to vector<8x1xf32>
    %14 = vector.broadcast %13 : vector<8x1xf32> to vector<8x128xf32>
    %15 = arith.subf %10, %14 : vector<8x128xf32>
    %16 = math.exp %15 : vector<8x128xf32>
    %cst_13 = arith.constant dense<0.000000e+00> : vector<8xf32>
    %17 = vector.multi_reduction <add>, %16, %cst_13 [1] : vector<8x128xf32> to vector<8xf32>
    %18 = vector.shape_cast %17 : vector<8xf32> to vector<8x1xf32>
    %19 = vector.broadcast %13 : vector<8x1xf32> to vector<8x128xf32>
    %20 = arith.subf %10, %19 : vector<8x128xf32>
    %21 = math.log %18 : vector<8x1xf32>
    %22 = vector.broadcast %21 : vector<8x1xf32> to vector<8x128xf32>
    %23 = arith.subf %20, %22 : vector<8x128xf32>
    %c0_14 = arith.constant 0 : index
    %c0_15 = arith.constant 0 : index
    %24 = vector.load %arg7[%c0_14, %c0_15] : memref<8x128xf32, #tpu.memory_space<vmem>>, vector<8x128xf32>
    tpu.vector_store %arg7[%c0_14, %c0_15], %23 {strides = array<i32>} : memref<8x128xf32, #tpu.memory_space<vmem>>, vector<8x128xf32>,
    return
  }
  func.func @transform_0(%arg0: i32) -> (i32, i32) {
    %c0_i32 = arith.constant 0 : i32
    %c0_i32_0 = arith.constant 0 : i32
    return %arg0, %c0_i32 : i32, i32
  }
  func.func @transform_1(%arg0: i32) -> (i32, i32) {
    %c0_i32 = arith.constant 0 : i32
    %c0_i32_0 = arith.constant 0 : i32
    %c0_i32_1 = arith.constant 0 : i32
    return %c0_i32, %c0_i32_0 : i32, i32
  }
  func.func @transform_2(%arg0: i32) -> (i32, i32) {
    %c0_i32 = arith.constant 0 : i32
    %c0_i32_0 = arith.constant 0 : i32
    %c0_i32_1 = arith.constant 0 : i32
    return %c0_i32, %c0_i32_0 : i32, i32
  }
  func.func @transform_3(%arg0: i32) -> (i32, i32) {
    %c0_i32 = arith.constant 0 : i32
    %c0_i32_0 = arith.constant 0 : i32
    %c0_i32_1 = arith.constant 0 : i32
    return %c0_i32, %c0_i32_0 : i32, i32
  }
  func.func @transform_4(%arg0: i32) -> (i32, i32) {
    %c0_i32 = arith.constant 0 : i32
    %c0_i32_0 = arith.constant 0 : i32
    %c0_i32_1 = arith.constant 0 : i32
    return %c0_i32, %c0_i32_0 : i32, i32
  }
  func.func @transform_5(%arg0: i32) -> (i32, i32) {
    %c0_i32 = arith.constant 0 : i32
    %c0_i32_0 = arith.constant 0 : i32
    return %arg0, %c0_i32 : i32, i32
  }
  func.func @transform_6(%arg0: i32) -> (i32, i32) {
    %c0_i32 = arith.constant 0 : i32
    %c0_i32_0 = arith.constant 0 : i32
    return %arg0, %c0_i32 : i32, i32
  }
}

</mosaic_0001>

<llo_original>
// kernel: mlp_policy_forward.1
$region0: #{mlp_policy_forward.1}
  #allocation0 [shape = 'u32[]', space=smem, size = 0x4, offset = 0x4, fixed_abs, tag = 'smem constant byte address 0x4 - core index']
  #allocation1 [shape = 'u32[144,128]{1,0:T(1,128)}', space=vmem, size = 0x12000, scoped, tag = 'internal scratch']
  %s0 = inlined_call_operand.vmem [shape: bf16[8,6400], index: 0, kind: input, shape index: {}]
  %s1 = inlined_call_operand.vmem [shape: bf16[6400,200], index: 1, kind: input, shape index: {}]
  %s2 = inlined_call_operand.vmem [shape: f32[1,200], index: 2, kind: input, shape index: {}]
  %s3 = inlined_call_operand.vmem [shape: f32[200,128], index: 3, kind: input, shape index: {}]
  %s4 = inlined_call_operand.vmem [shape: f32[1,128], index: 4, kind: input, shape index: {}]
  %s5 = inlined_call_operand.vmem [shape: f32[8,128], index: 5, kind: output, shape index: {0}]
  %s6 = inlined_call_operand.vmem [shape: f32[8,128], index: 6, kind: output, shape index: {1}]
  %7 = xla_tuple %s5, %s6
  %s8 = sld [smem:[#allocation0]]
  $region38: #{mlp_policy_forward.1} parent=0
    _
  %s10 = ssub.s32 1, %s8
  %s11 = scalar_select 0, %s10, %s8
  // Predicated region
  $region2: #{mlp_policy_forward.1} parent=0 // pred_check
    _
  $region3: #{mlp_policy_forward.1} parent=0 // pred_check_branch
    %13 = sbr.rel (0) target = $region5
  $region4: #{mlp_policy_forward.1} parent=0 // pred_region
    _
  $region5: #{mlp_policy_forward.1} parent=0 // pred_fallthru
    _
  // Predicated region
  $region6: #{mlp_policy_forward.1} parent=0 // pred_check
    _
  $region7: #{mlp_policy_forward.1} parent=0 // pred_check_branch
    %15 = sbr.rel (0) target = $region9
  $region8: #{mlp_policy_forward.1} parent=0 // pred_region
    _
  $region9: #{mlp_policy_forward.1} parent=0 // pred_fallthru
    _
  // Predicated region
  $region10: #{mlp_policy_forward.1} parent=0 // pred_check
    _
  $region11: #{mlp_policy_forward.1} parent=0 // pred_check_branch
    %17 = sbr.rel (0) target = $region13
  $region12: #{mlp_policy_forward.1} parent=0 // pred_region
    _
  $region13: #{mlp_policy_forward.1} parent=0 // pred_fallthru
    _
  // Predicated region
  $region14: #{mlp_policy_forward.1} parent=0 // pred_check
    _
  $region15: #{mlp_policy_forward.1} parent=0 // pred_check_branch
    %19 = sbr.rel (0) target = $region17
  $region16: #{mlp_policy_forward.1} parent=0 // pred_region
    _
  $region17: #{mlp_policy_forward.1} parent=0 // pred_fallthru
    _
  // Predicated region
  $region18: #{mlp_policy_forward.1} parent=0 // pred_check
    _
  $region19: #{mlp_policy_forward.1} parent=0 // pred_check_branch
    %21 = sbr.rel (0) target = $region21
  $region20: #{mlp_policy_forward.1} parent=0 // pred_region
    _
  $region21: #{mlp_policy_forward.1} parent=0 // pred_fallthru
    _
  %v22 = vld [vmem:[%s0] sm:$0xff]
  %v23 = vld [vmem:[%s0 + $0x8] sm:$0xff]
  %v24 = vld [vmem:[%s0 + $0x10] sm:$0xff]
  %v25 = vld [vmem:[%s0 + $0x18] sm:$0xff]
  %v26 = vld [vmem:[%s0 + $0x20] sm:$0xff]
  %v27 = vld [vmem:[%s0 + $0x28] sm:$0xff]
  %v28 = vld [vmem:[%s0 + $0x30] sm:$0xff]
  %v29 = vld [vmem:[%s0 + $0x38] sm:$0xff]
  %v30 = vld [vmem:[%s0 + $0x40] sm:$0xff]
  %v31 = vld [vmem:[%s0 + $0x48] sm:$0xff]
  %v32 = vld [vmem:[%s0 + $0x50] sm:$0xff]
  %v33 = vld [vmem:[%s0 + $0x58] sm:$0xff]
  %v34 = vld [vmem:[%s0 + $0x60] sm:$0xff]
  %v35 = vld [vmem:[%s0 + $0x68] sm:$0xff]
  %v36 = vld [vmem:[%s0 + $0x70] sm:$0xff]
  %v37 = vld [vmem:[%s0 + $0x78] sm:$0xff]
  %v38 = vld [vmem:[%s0 + $0x80] sm:$0xff]
  %v39 = vld [vmem:[%s0 + $0x88] sm:$0xff]
  %v40 = vld [vmem:[%s0 + $0x90] sm:$0xff]
  %v41 = vld [vmem:[%s0 + $0x98] sm:$0xff]
  %v42 = vld [vmem:[%s0 + $0xa0] sm:$0xff]
  %v43 = vld [vmem:[%s0 + $0xa8] sm:$0xff]
  %v44 = vld [vmem:[%s0 + $0xb0] sm:$0xff]
  %v45 = vld [vmem:[%s0 + $0xb8] sm:$0xff]
  %v46 = vld [vmem:[%s0 + $0xc0] sm:$0xff]
  %v47 = vld [vmem:[%s1] sm:$0xff]
  %v48 = vld [vmem:[%s1 + $0x8] sm:$0xff]
  %v49 = vld [vmem:[%s1 + $0x10] sm:$0xff]
  %v50 = vld [vmem:[%s1 + $0x18] sm:$0xff]
  %v51 = vld [vmem:[%s1 + $0x20] sm:$0xff]
  %v52 = vld [vmem:[%s1 + $0x28] sm:$0xff]
  %v53 = vld [vmem:[%s1 + $0x30] sm:$0xff]
  %v54 = vld [vmem:[%s1 + $0x38] sm:$0xff]
  %v55 = vld [vmem:[%s1 + $0x40] sm:$0xff]
  %v56 = vld [vmem:[%s1 + $0x48] sm:$0xff]
  %v57 = vld [vmem:[%s1 + $0x50] sm:$0xff]
  %v58 = vld [vmem:[%s1 + $0x58] sm:$0xff]
  %v59 = vld [vmem:[%s1 + $0x60] sm:$0xff]
  %v60 = vld [vmem:[%s1 + $0x68] sm:$0xff]
  %v61 = vld [vmem:[%s1 + $0x70] sm:$0xff]
  %v62 = vld [vmem:[%s1 + $0x78] sm:$0xff]
  %v63 = vld [vmem:[%s1 + $0x80] sm:$0xff]
  %v64 = vld [vmem:[%s1 + $0x88] sm:$0xff]
  %v65 = vld [vmem:[%s1 + $0x90] sm:$0xff]
  %v66 = vld [vmem:[%s1 + $0x98] sm:$0xff]
  %v67 = vld [vmem:[%s1 + $0xa0] sm:$0xff]
  %v68 = vld [vmem:[%s1 + $0xa8] sm:$0xff]
  %v69 = vld [vmem:[%s1 + $0xb0] sm:$0xff]
  %v70 = vld [vmem:[%s1 + $0xb8] sm:$0xff]
  %v71 = vld [vmem:[%s1 + $0xc0] sm:$0xff]
  %v72 = vld [vmem:[%s1 + $0xc8] sm:$0xff]
  %v73 = vld [vmem:[%s1 + $0xd0] sm:$0xff]
  %v74 = vld [vmem:[%s1 + $0xd8] sm:$0xff]
  %v75 = vld [vmem:[%s1 + $0xe0] sm:$0xff]
  %v76 = vld [vmem:[%s1 + $0xe8] sm:$0xff]
  %v77 = vld [vmem:[%s1 + $0xf0] sm:$0xff]
  %v78 = vld [vmem:[%s1 + $0xf8] sm:$0xff]
  %v79 = vld [vmem:[%s1 + $0x100] sm:$0xff]
  %v80 = vld [vmem:[%s1 + $0x108] sm:$0xff]
  %v81 = vld [vmem:[%s1 + $0x110] sm:$0xff]
  %v82 = vld [vmem:[%s1 + $0x118] sm:$0xff]
  %v83 = vld [vmem:[%s1 + $0x120] sm:$0xff]
  %v84 = vld [vmem:[%s1 + $0x128] sm:$0xff]
  %v85 = vld [vmem:[%s1 + $0x130] sm:$0xff]
  %v86 = vld [vmem:[%s1 + $0x138] sm:$0xff]
  %v87 = vld [vmem:[%s1 + $0x140] sm:$0xff]
  %v88 = vld [vmem:[%s1 + $0x148] sm:$0xff]
  %v89 = vld [vmem:[%s1 + $0x150] sm:$0xff]
  %v90 = vld [vmem:[%s1 + $0x158] sm:$0xff]
  %v91 = vld [vmem:[%s1 + $0x160] sm:$0xff]
  %v92 = vld [vmem:[%s1 + $0x168] sm:$0xff]
  %v93 = vld [vmem:[%s1 + $0x170] sm:$0xff]
  %v94 = vld [vmem:[%s1 + $0x178] sm:$0xff]
  %v95 = vld [vmem:[%s1 + $0x180] sm:$0xff]
  %v96 = vld [vmem:[%s1 + $0x188] sm:$0xff]
  %v97 = vld [vmem:[%s1 + $0x190] sm:$0xff]
  %v98 = vld [vmem:[%s1 + $0x198] sm:$0xff]
  %v99 = vld [vmem:[%s1 + $0x1a0] sm:$0xff]
  %v100 = vld [vmem:[%s1 + $0x1a8] sm:$0xff]
  %v101 = vld [vmem:[%s1 + $0x1b0] sm:$0xff]
  %v102 = vld [vmem:[%s1 + $0x1b8] sm:$0xff]
  %v103 = vld [vmem:[%s1 + $0x1c0] sm:$0xff]
  %v104 = vld [vmem:[%s1 + $0x1c8] sm:$0xff]
  %v105 = vld [vmem:[%s1 + $0x1d0] sm:$0xff]
  %v106 = vld [vmem:[%s1 + $0x1d8] sm:$0xff]
  %v107 = vld [vmem:[%s1 + $0x1e0] sm:$0xff]
  %v108 = vld [vmem:[%s1 + $0x1e8] sm:$0xff]
  %v109 = vld [vmem:[%s1 + $0x1f0] sm:$0xff]
  %v110 = vld [vmem:[%s1 + $0x1f8] sm:$0xff]
  %v111 = vld [vmem:[%s1 + $0x200] sm:$0xff]
  %v112 = vld [vmem:[%s1 + $0x208] sm:$0xff]
  %v113 = vld [vmem:[%s1 + $0x210] sm:$0xff]
  %v114 = vld [vmem:[%s1 + $0x218] sm:$0xff]
  %v115 = vld [vmem:[%s1 + $0x220] sm:$0xff]
  %v116 = vld [vmem:[%s1 + $0x228] sm:$0xff]
  %v117 = vld [vmem:[%s1 + $0x230] sm:$0xff]
  %v118 = vld [vmem:[%s1 + $0x238] sm:$0xff]
  %v119 = vld [vmem:[%s1 + $0x240] sm:$0xff]
  %v120 = vld [vmem:[%s1 + $0x248] sm:$0xff]
  %v121 = vld [vmem:[%s1 + $0x250] sm:$0xff]
  %v122 = vld [vmem:[%s1 + $0x258] sm:$0xff]
  %v123 = vld [vmem:[%s1 + $0x260] sm:$0xff]
  %v124 = vld [vmem:[%s1 + $0x268] sm:$0xff]
  %v125 = vld [vmem:[%s1 + $0x270] sm:$0xff]
  %v126 = vld [vmem:[%s1 + $0x278] sm:$0xff]
  %v127 = vld [vmem:[%s1 + $0x280] sm:$0xff]
  %v128 = vld [vmem:[%s1 + $0x288] sm:$0xff]
  %v129 = vld [vmem:[%s1 + $0x290] sm:$0xff]
  %v130 = vld [vmem:[%s1 + $0x298] sm:$0xff]
  %v131 = vld [vmem:[%s1 + $0x2a0] sm:$0xff]
  %v132 = vld [vmem:[%s1 + $0x2a8] sm:$0xff]
  %v133 = vld [vmem:[%s1 + $0x2b0] sm:$0xff]
  %v134 = vld [vmem:[%s1 + $0x2b8] sm:$0xff]
  %v135 = vld [vmem:[%s1 + $0x2c0] sm:$0xff]
  %v136 = vld [vmem:[%s1 + $0x2c8] sm:$0xff]
  %v137 = vld [vmem:[%s1 + $0x2d0] sm:$0xff]
  %v138 = vld [vmem:[%s1 + $0x2d8] sm:$0xff]
  %v139 = vld [vmem:[%s1 + $0x2e0] sm:$0xff]
  %v140 = vld [vmem:[%s1 + $0x2e8] sm:$0xff]
  %v141 = vld [vmem:[%s1 + $0x2f0] sm:$0xff]
  %v142 = vld [vmem:[%s1 + $0x2f8] sm:$0xff]
  %v143 = vld [vmem:[%s1 + $0x300] sm:$0xff]
  %v144 = vld [vmem:[%s1 + $0x308] sm:$0xff]
  %v145 = vld [vmem:[%s1 + $0x310] sm:$0xff]
  %v146 = vld [vmem:[%s1 + $0x318] sm:$0xff]
  %v147 = vld [vmem:[%s1 + $0x320] sm:$0xff]
  %v148 = vld [vmem:[%s1 + $0x328] sm:$0xff]
  %v149 = vld [vmem:[%s1 + $0x330] sm:$0xff]
  %v150 = vld [vmem:[%s1 + $0x338] sm:$0xff]
  %v151 = vld [vmem:[%s1 + $0x340] sm:$0xff]
  %v152 = vld [vmem:[%s1 + $0x348] sm:$0xff]
  %v153 = vld [vmem:[%s1 + $0x350] sm:$0xff]
  %v154 = vld [vmem:[%s1 + $0x358] sm:$0xff]
  %v155 = vld [vmem:[%s1 + $0x360] sm:$0xff]
  %v156 = vld [vmem:[%s1 + $0x368] sm:$0xff]
  %v157 = vld [vmem:[%s1 + $0x370] sm:$0xff]
  %v158 = vld [vmem:[%s1 + $0x378] sm:$0xff]
  %v159 = vld [vmem:[%s1 + $0x380] sm:$0xff]
  %v160 = vld [vmem:[%s1 + $0x388] sm:$0xff]
  %v161 = vld [vmem:[%s1 + $0x390] sm:$0xff]
  %v162 = vld [vmem:[%s1 + $0x398] sm:$0xff]
  %v163 = vld [vmem:[%s1 + $0x3a0] sm:$0xff]
  %v164 = vld [vmem:[%s1 + $0x3a8] sm:$0xff]
  %v165 = vld [vmem:[%s1 + $0x3b0] sm:$0xff]
  %v166 = vld [vmem:[%s1 + $0x3b8] sm:$0xff]
  %v167 = vld [vmem:[%s1 + $0x3c0] sm:$0xff]
  %v168 = vld [vmem:[%s1 + $0x3c8] sm:$0xff]
  %v169 = vld [vmem:[%s1 + $0x3d0] sm:$0xff]
  %v170 = vld [vmem:[%s1 + $0x3d8] sm:$0xff]
  %v171 = vld [vmem:[%s1 + $0x3e0] sm:$0xff]
  %v172 = vld [vmem:[%s1 + $0x3e8] sm:$0xff]
  %v173 = vld [vmem:[%s1 + $0x3f0] sm:$0xff]
  %v174 = vld [vmem:[%s1 + $0x3f8] sm:$0xff]
  %v175 = vld [vmem:[%s1 + $0x400] sm:$0xff]
  %v176 = vld [vmem:[%s1 + $0x408] sm:$0xff]
  %v177 = vld [vmem:[%s1 + $0x410] sm:$0xff]
  %v178 = vld [vmem:[%s1 + $0x418] sm:$0xff]
  %v179 = vld [vmem:[%s1 + $0x420] sm:$0xff]
  %v180 = vld [vmem:[%s1 + $0x428] sm:$0xff]
  %v181 = vld [vmem:[%s1 + $0x430] sm:$0xff]
  %v182 = vld [vmem:[%s1 + $0x438] sm:$0xff]
  %v183 = vld [vmem:[%s1 + $0x440] sm:$0xff]
  %v184 = vld [vmem:[%s1 + $0x448] sm:$0xff]
  %v185 = vld [vmem:[%s1 + $0x450] sm:$0xff]
  %v186 = vld [vmem:[%s1 + $0x458] sm:$0xff]
  %v187 = vld [vmem:[%s1 + $0x460] sm:$0xff]
  %v188 = vld [vmem:[%s1 + $0x468] sm:$0xff]
  %v189 = vld [vmem:[%s1 + $0x470] sm:$0xff]
  %v190 = vld [vmem:[%s1 + $0x478] sm:$0xff]
  %v191 = vld [vmem:[%s1 + $0x480] sm:$0xff]
  %v192 = vld [vmem:[%s1 + $0x488] sm:$0xff]
  %v193 = vld [vmem:[%s1 + $0x490] sm:$0xff]
  %v194 = vld [vmem:[%s1 + $0x498] sm:$0xff]
  %v195 = vld [vmem:[%s1 + $0x4a0] sm:$0xff]
  %v196 = vld [vmem:[%s1 + $0x4a8] sm:$0xff]
  %v197 = vld [vmem:[%s1 + $0x4b0] sm:$0xff]
  %v198 = vld [vmem:[%s1 + $0x4b8] sm:$0xff]
  %v199 = vld [vmem:[%s1 + $0x4c0] sm:$0xff]
  %v200 = vld [vmem:[%s1 + $0x4c8] sm:$0xff]
  %v201 = vld [vmem:[%s1 + $0x4d0] sm:$0xff]
  %v202 = vld [vmem:[%s1 + $0x4d8] sm:$0xff]
  %v203 = vld [vmem:[%s1 + $0x4e0] sm:$0xff]
  %v204 = vld [vmem:[%s1 + $0x4e8] sm:$0xff]
  %v205 = vld [vmem:[%s1 + $0x4f0] sm:$0xff]
  %v206 = vld [vmem:[%s1 + $0x4f8] sm:$0xff]
  %v207 = vld [vmem:[%s1 + $0x500] sm:$0xff]
  %v208 = vld [vmem:[%s1 + $0x508] sm:$0xff]
  %v209 = vld [vmem:[%s1 + $0x510] sm:$0xff]
  %v210 = vld [vmem:[%s1 + $0x518] sm:$0xff]
  %v211 = vld [vmem:[%s1 + $0x520] sm:$0xff]
  %v212 = vld [vmem:[%s1 + $0x528] sm:$0xff]
  %v213 = vld [vmem:[%s1 + $0x530] sm:$0xff]
  %v214 = vld [vmem:[%s1 + $0x538] sm:$0xff]
  %v215 = vld [vmem:[%s1 + $0x540] sm:$0xff]
  %v216 = vld [vmem:[%s1 + $0x548] sm:$0xff]
  %v217 = vld [vmem:[%s1 + $0x550] sm:$0xff]
  %v218 = vld [vmem:[%s1 + $0x558] sm:$0xff]
  %v219 = vld [vmem:[%s1 + $0x560] sm:$0xff]
  %v220 = vld [vmem:[%s1 + $0x568] sm:$0xff]
  %v221 = vld [vmem:[%s1 + $0x570] sm:$0xff]
  %v222 = vld [vmem:[%s1 + $0x578] sm:$0xff]
  %v223 = vld [vmem:[%s1 + $0x580] sm:$0xff]
  %v224 = vld [vmem:[%s1 + $0x588] sm:$0xff]
  %v225 = vld [vmem:[%s1 + $0x590] sm:$0xff]
  %v226 = vld [vmem:[%s1 + $0x598] sm:$0xff]
  %v227 = vld [vmem:[%s1 + $0x5a0] sm:$0xff]
  %v228 = vld [vmem:[%s1 + $0x5a8] sm:$0xff]
  %v229 = vld [vmem:[%s1 + $0x5b0] sm:$0xff]
  %v230 = vld [vmem:[%s1 + $0x5b8] sm:$0xff]
  %v231 = vld [vmem:[%s1 + $0x5c0] sm:$0xff]
  %v232 = vld [vmem:[%s1 + $0x5c8] sm:$0xff]
  %v233 = vld [vmem:[%s1 + $0x5d0] sm:$0xff]
  %v234 = vld [vmem:[%s1 + $0x5d8] sm:$0xff]
  %v235 = vld [vmem:[%s1 + $0x5e0] sm:$0xff]
  %v236 = vld [vmem:[%s1 + $0x5e8] sm:$0xff]
  %v237 = vld [vmem:[%s1 + $0x5f0] sm:$0xff]
  %v238 = vld [vmem:[%s1 + $0x5f8] sm:$0xff]
  %v239 = vld [vmem:[%s1 + $0x600] sm:$0xff]
  %v240 = vld [vmem:[%s1 + $0x608] sm:$0xff]
  %v241 = vld [vmem:[%s1 + $0x610] sm:$0xff]
  %v242 = vld [vmem:[%s1 + $0x618] sm:$0xff]
  %v243 = vld [vmem:[%s1 + $0x620] sm:$0xff]
  %v244 = vld [vmem:[%s1 + $0x628] sm:$0xff]
  %v245 = vld [vmem:[%s1 + $0x630] sm:$0xff]
  %v246 = vld [vmem:[%s1 + $0x638] sm:$0xff]
  %v247 = vld [vmem:[%s1 + $0x640] sm:$0xff]
  %v248 = vld [vmem:[%s1 + $0x648] sm:$0xff]
  %v249 = vld [vmem:[%s1 + $0x650] sm:$0xff]
  %v250 = vld [vmem:[%s1 + $0x658] sm:$0xff]
  %v251 = vld [vmem:[%s1 + $0x660] sm:$0xff]
  %v252 = vld [vmem:[%s1 + $0x668] sm:$0xff]
  %v253 = vld [vmem:[%s1 + $0x670] sm:$0xff]
  %v254 = vld [vmem:[%s1 + $0x678] sm:$0xff]
  %v255 = vld [vmem:[%s1 + $0x680] sm:$0xff]
  %v256 = vld [vmem:[%s1 + $0x688] sm:$0xff]
  %v257 = vld [vmem:[%s1 + $0x690] sm:$0xff]
  %v258 = vld [vmem:[%s1 + $0x698] sm:$0xff]
  %v259 = vld [vmem:[%s1 + $0x6a0] sm:$0xff]
  %v260 = vld [vmem:[%s1 + $0x6a8] sm:$0xff]
  %v261 = vld [vmem:[%s1 + $0x6b0] sm:$0xff]
  %v262 = vld [vmem:[%s1 + $0x6b8] sm:$0xff]
  %v263 = vld [vmem:[%s1 + $0x6c0] sm:$0xff]
  %v264 = vld [vmem:[%s1 + $0x6c8] sm:$0xff]
  %v265 = vld [vmem:[%s1 + $0x6d0] sm:$0xff]
  %v266 = vld [vmem:[%s1 + $0x6d8] sm:$0xff]
  %v267 = vld [vmem:[%s1 + $0x6e0] sm:$0xff]
  %v268 = vld [vmem:[%s1 + $0x6e8] sm:$0xff]
  %v269 = vld [vmem:[%s1 + $0x6f0] sm:$0xff]
  %v270 = vld [vmem:[%s1 + $0x6f8] sm:$0xff]
  %v271 = vld [vmem:[%s1 + $0x700] sm:$0xff]
  %v272 = vld [vmem:[%s1 + $0x708] sm:$0xff]
  %v273 = vld [vmem:[%s1 + $0x710] sm:$0xff]
  %v274 = vld [vmem:[%s1 + $0x718] sm:$0xff]
  %v275 = vld [vmem:[%s1 + $0x720] sm:$0xff]
  %v276 = vld [vmem:[%s1 + $0x728] sm:$0xff]
  %v277 = vld [vmem:[%s1 + $0x730] sm:$0xff]
  %v278 = vld [vmem:[%s1 + $0x738] sm:$0xff]
  %v279 = vld [vmem:[%s1 + $0x740] sm:$0xff]
  %v280 = vld [vmem:[%s1 + $0x748] sm:$0xff]
  %v281 = vld [vmem:[%s1 + $0x750] sm:$0xff]
  %v282 = vld [vmem:[%s1 + $0x758] sm:$0xff]
  %v283 = vld [vmem:[%s1 + $0x760] sm:$0xff]
  %v284 = vld [vmem:[%s1 + $0x768] sm:$0xff]
  %v285 = vld [vmem:[%s1 + $0x770] sm:$0xff]
  %v286 = vld [vmem:[%s1 + $0x778] sm:$0xff]
  %v287 = vld [vmem:[%s1 + $0x780] sm:$0xff]
  %v288 = vld [vmem:[%s1 + $0x788] sm:$0xff]
  %v289 = vld [vmem:[%s1 + $0x790] sm:$0xff]
  %v290 = vld [vmem:[%s1 + $0x798] sm:$0xff]
  %v291 = vld [vmem:[%s1 + $0x7a0] sm:$0xff]
  %v292 = vld [vmem:[%s1 + $0x7a8] sm:$0xff]
  %v293 = vld [vmem:[%s1 + $0x7b0] sm:$0xff]
  %v294 = vld [vmem:[%s1 + $0x7b8] sm:$0xff]
  %v295 = vld [vmem:[%s1 + $0x7c0] sm:$0xff]
  %v296 = vld [vmem:[%s1 + $0x7c8] sm:$0xff]
  %v297 = vld [vmem:[%s1 + $0x7d0] sm:$0xff]
  %v298 = vld [vmem:[%s1 + $0x7d8] sm:$0xff]
  %v299 = vld [vmem:[%s1 + $0x7e0] sm:$0xff]
  %v300 = vld [vmem:[%s1 + $0x7e8] sm:$0xff]
  %v301 = vld [vmem:[%s1 + $0x7f0] sm:$0xff]
  %v302 = vld [vmem:[%s1 + $0x7f8] sm:$0xff]
  %v303 = vld [vmem:[%s1 + $0x800] sm:$0xff]
  %v304 = vld [vmem:[%s1 + $0x808] sm:$0xff]
  %v305 = vld [vmem:[%s1 + $0x810] sm:$0xff]
  %v306 = vld [vmem:[%s1 + $0x818] sm:$0xff]
  %v307 = vld [vmem:[%s1 + $0x820] sm:$0xff]
  %v308 = vld [vmem:[%s1 + $0x828] sm:$0xff]
  %v309 = vld [vmem:[%s1 + $0x830] sm:$0xff]
  %v310 = vld [vmem:[%s1 + $0x838] sm:$0xff]
  %v311 = vld [vmem:[%s1 + $0x840] sm:$0xff]
  %v312 = vld [vmem:[%s1 + $0x848] sm:$0xff]
  %v313 = vld [vmem:[%s1 + $0x850] sm:$0xff]
  %v314 = vld [vmem:[%s1 + $0x858] sm:$0xff]
  %v315 = vld [vmem:[%s1 + $0x860] sm:$0xff]
  %v316 = vld [vmem:[%s1 + $0x868] sm:$0xff]
  %v317 = vld [vmem:[%s1 + $0x870] sm:$0xff]
  %v318 = vld [vmem:[%s1 + $0x878] sm:$0xff]
  %v319 = vld [vmem:[%s1 + $0x880] sm:$0xff]
  %v320 = vld [vmem:[%s1 + $0x888] sm:$0xff]
  %v321 = vld [vmem:[%s1 + $0x890] sm:$0xff]
  %v322 = vld [vmem:[%s1 + $0x898] sm:$0xff]
  %v323 = vld [vmem:[%s1 + $0x8a0] sm:$0xff]
  %v324 = vld [vmem:[%s1 + $0x8a8] sm:$0xff]
  %v325 = vld [vmem:[%s1 + $0x8b0] sm:$0xff]
  %v326 = vld [vmem:[%s1 + $0x8b8] sm:$0xff]
  %v327 = vld [vmem:[%s1 + $0x8c0] sm:$0xff]
  %v328 = vld [vmem:[%s1 + $0x8c8] sm:$0xff]
  %v329 = vld [vmem:[%s1 + $0x8d0] sm:$0xff]
  %v330 = vld [vmem:[%s1 + $0x8d8] sm:$0xff]
  %v331 = vld [vmem:[%s1 + $0x8e0] sm:$0xff]
  %v332 = vld [vmem:[%s1 + $0x8e8] sm:$0xff]
  %v333 = vld [vmem:[%s1 + $0x8f0] sm:$0xff]
  %v334 = vld [vmem:[%s1 + $0x8f8] sm:$0xff]
  %v335 = vld [vmem:[%s1 + $0x900] sm:$0xff]
  %v336 = vld [vmem:[%s1 + $0x908] sm:$0xff]
  %v337 = vld [vmem:[%s1 + $0x910] sm:$0xff]
  %v338 = vld [vmem:[%s1 + $0x918] sm:$0xff]
  %v339 = vld [vmem:[%s1 + $0x920] sm:$0xff]
  %v340 = vld [vmem:[%s1 + $0x928] sm:$0xff]
  %v341 = vld [vmem:[%s1 + $0x930] sm:$0xff]
  %v342 = vld [vmem:[%s1 + $0x938] sm:$0xff]
  %v343 = vld [vmem:[%s1 + $0x940] sm:$0xff]
  %v344 = vld [vmem:[%s1 + $0x948] sm:$0xff]
  %v345 = vld [vmem:[%s1 + $0x950] sm:$0xff]
  %v346 = vld [vmem:[%s1 + $0x958] sm:$0xff]
  %v347 = vld [vmem:[%s1 + $0x960] sm:$0xff]
  %v348 = vld [vmem:[%s1 + $0x968] sm:$0xff]
  %v349 = vld [vmem:[%s1 + $0x970] sm:$0xff]
  %v350 = vld [vmem:[%s1 + $0x978] sm:$0xff]
  %v351 = vld [vmem:[%s1 + $0x980] sm:$0xff]
  %v352 = vld [vmem:[%s1 + $0x988] sm:$0xff]
  %v353 = vld [vmem:[%s1 + $0x990] sm:$0xff]
  %v354 = vld [vmem:[%s1 + $0x998] sm:$0xff]
  %v355 = vld [vmem:[%s1 + $0x9a0] sm:$0xff]
  %v356 = vld [vmem:[%s1 + $0x9a8] sm:$0xff]
  %v357 = vld [vmem:[%s1 + $0x9b0] sm:$0xff]
  %v358 = vld [vmem:[%s1 + $0x9b8] sm:$0xff]
  %v359 = vld [vmem:[%s1 + $0x9c0] sm:$0xff]
  %v360 = vld [vmem:[%s1 + $0x9c8] sm:$0xff]
  %v361 = vld [vmem:[%s1 + $0x9d0] sm:$0xff]
  %v362 = vld [vmem:[%s1 + $0x9d8] sm:$0xff]
  %v363 = vld [vmem:[%s1 + $0x9e0] sm:$0xff]
  %v364 = vld [vmem:[%s1 + $0x9e8] sm:$0xff]
  %v365 = vld [vmem:[%s1 + $0x9f0] sm:$0xff]
  %v366 = vld [vmem:[%s1 + $0x9f8] sm:$0xff]
  %v367 = vld [vmem:[%s1 + $0xa00] sm:$0xff]
  %v368 = vld [vmem:[%s1 + $0xa08] sm:$0xff]
  %v369 = vld [vmem:[%s1 + $0xa10] sm:$0xff]
  %v370 = vld [vmem:[%s1 + $0xa18] sm:$0xff]
  %v371 = vld [vmem:[%s1 + $0xa20] sm:$0xff]
  %v372 = vld [vmem:[%s1 + $0xa28] sm:$0xff]
  %v373 = vld [vmem:[%s1 + $0xa30] sm:$0xff]
  %v374 = vld [vmem:[%s1 + $0xa38] sm:$0xff]
  %v375 = vld [vmem:[%s1 + $0xa40] sm:$0xff]
  %v376 = vld [vmem:[%s1 + $0xa48] sm:$0xff]
  %v377 = vld [vmem:[%s1 + $0xa50] sm:$0xff]
  %v378 = vld [vmem:[%s1 + $0xa58] sm:$0xff]
  %v379 = vld [vmem:[%s1 + $0xa60] sm:$0xff]
  %v380 = vld [vmem:[%s1 + $0xa68] sm:$0xff]
  %v381 = vld [vmem:[%s1 + $0xa70] sm:$0xff]
  %v382 = vld [vmem:[%s1 + $0xa78] sm:$0xff]
  %v383 = vld [vmem:[%s1 + $0xa80] sm:$0xff]
  %v384 = vld [vmem:[%s1 + $0xa88] sm:$0xff]
  %v385 = vld [vmem:[%s1 + $0xa90] sm:$0xff]
  %v386 = vld [vmem:[%s1 + $0xa98] sm:$0xff]
  %v387 = vld [vmem:[%s1 + $0xaa0] sm:$0xff]
  %v388 = vld [vmem:[%s1 + $0xaa8] sm:$0xff]
  %v389 = vld [vmem:[%s1 + $0xab0] sm:$0xff]
  %v390 = vld [vmem:[%s1 + $0xab8] sm:$0xff]
  %v391 = vld [vmem:[%s1 + $0xac0] sm:$0xff]
  %v392 = vld [vmem:[%s1 + $0xac8] sm:$0xff]
  %v393 = vld [vmem:[%s1 + $0xad0] sm:$0xff]
  %v394 = vld [vmem:[%s1 + $0xad8] sm:$0xff]
  %v395 = vld [vmem:[%s1 + $0xae0] sm:$0xff]
  %v396 = vld [vmem:[%s1 + $0xae8] sm:$0xff]
  %v397 = vld [vmem:[%s1 + $0xaf0] sm:$0xff]
  %v398 = vld [vmem:[%s1 + $0xaf8] sm:$0xff]
  %v399 = vld [vmem:[%s1 + $0xb00] sm:$0xff]
  %v400 = vld [vmem:[%s1 + $0xb08] sm:$0xff]
  %v401 = vld [vmem:[%s1 + $0xb10] sm:$0xff]
  %v402 = vld [vmem:[%s1 + $0xb18] sm:$0xff]
  %v403 = vld [vmem:[%s1 + $0xb20] sm:$0xff]
  %v404 = vld [vmem:[%s1 + $0xb28] sm:$0xff]
  %v405 = vld [vmem:[%s1 + $0xb30] sm:$0xff]
  %v406 = vld [vmem:[%s1 + $0xb38] sm:$0xff]
  %v407 = vld [vmem:[%s1 + $0xb40] sm:$0xff]
  %v408 = vld [vmem:[%s1 + $0xb48] sm:$0xff]
  %v409 = vld [vmem:[%s1 + $0xb50] sm:$0xff]
  %v410 = vld [vmem:[%s1 + $0xb58] sm:$0xff]
  %v411 = vld [vmem:[%s1 + $0xb60] sm:$0xff]
  %v412 = vld [vmem:[%s1 + $0xb68] sm:$0xff]
  %v413 = vld [vmem:[%s1 + $0xb70] sm:$0xff]
  %v414 = vld [vmem:[%s1 + $0xb78] sm:$0xff]
  %v415 = vld [vmem:[%s1 + $0xb80] sm:$0xff]
  %v416 = vld [vmem:[%s1 + $0xb88] sm:$0xff]
  %v417 = vld [vmem:[%s1 + $0xb90] sm:$0xff]
  %v418 = vld [vmem:[%s1 + $0xb98] sm:$0xff]
  %v419 = vld [vmem:[%s1 + $0xba0] sm:$0xff]
  %v420 = vld [vmem:[%s1 + $0xba8] sm:$0xff]
  %v421 = vld [vmem:[%s1 + $0xbb0] sm:$0xff]
  %v422 = vld [vmem:[%s1 + $0xbb8] sm:$0xff]
  %v423 = vld [vmem:[%s1 + $0xbc0] sm:$0xff]
  %v424 = vld [vmem:[%s1 + $0xbc8] sm:$0xff]
  %v425 = vld [vmem:[%s1 + $0xbd0] sm:$0xff]
  %v426 = vld [vmem:[%s1 + $0xbd8] sm:$0xff]
  %v427 = vld [vmem:[%s1 + $0xbe0] sm:$0xff]
  %v428 = vld [vmem:[%s1 + $0xbe8] sm:$0xff]
  %v429 = vld [vmem:[%s1 + $0xbf0] sm:$0xff]
  %v430 = vld [vmem:[%s1 + $0xbf8] sm:$0xff]
  %v431 = vld [vmem:[%s1 + $0xc00] sm:$0xff]
  %v432 = vld [vmem:[%s1 + $0xc08] sm:$0xff]
  %v433 = vld [vmem:[%s1 + $0xc10] sm:$0xff]
  %v434 = vld [vmem:[%s1 + $0xc18] sm:$0xff]
  %v435 = vld [vmem:[%s1 + $0xc20] sm:$0xff]
  %v436 = vld [vmem:[%s1 + $0xc28] sm:$0xff]
  %v437 = vld [vmem:[%s1 + $0xc30] sm:$0xff]
  %v438 = vld [vmem:[%s1 + $0xc38] sm:$0xff]
  %v439 = vld [vmem:[%s1 + $0xc40] sm:$0xff]
  %v440 = vld [vmem:[%s1 + $0xc48] sm:$0xff]
  %v441 = vld [vmem:[%s1 + $0xc50] sm:$0xff]
  %v442 = vld [vmem:[%s1 + $0xc58] sm:$0xff]
  %v443 = vld [vmem:[%s1 + $0xc60] sm:$0xff]
  %v444 = vld [vmem:[%s1 + $0xc68] sm:$0xff]
  %v445 = vld [vmem:[%s1 + $0xc70] sm:$0xff]
  %v446 = vld [vmem:[%s1 + $0xc78] sm:$0xff]
  %v447 = vld [vmem:[%s1 + $0xc80] sm:$0xff]
  %v448 = vld [vmem:[%s1 + $0xc88] sm:$0xff]
  %v449 = vld [vmem:[%s1 + $0xc90] sm:$0xff]
  %v450 = vld [vmem:[%s1 + $0xc98] sm:$0xff]
  %v451 = vld [vmem:[%s1 + $0xca0] sm:$0xff]
  %v452 = vld [vmem:[%s1 + $0xca8] sm:$0xff]
  %v453 = vld [vmem:[%s1 + $0xcb0] sm:$0xff]
  %v454 = vld [vmem:[%s1 + $0xcb8] sm:$0xff]
  %v455 = vld [vmem:[%s1 + $0xcc0] sm:$0xff]
  %v456 = vld [vmem:[%s1 + $0xcc8] sm:$0xff]
  %v457 = vld [vmem:[%s1 + $0xcd0] sm:$0xff]
  %v458 = vld [vmem:[%s1 + $0xcd8] sm:$0xff]
  %v459 = vld [vmem:[%s1 + $0xce0] sm:$0xff]
  %v460 = vld [vmem:[%s1 + $0xce8] sm:$0xff]
  %v461 = vld [vmem:[%s1 + $0xcf0] sm:$0xff]
  %v462 = vld [vmem:[%s1 + $0xcf8] sm:$0xff]
  %v463 = vld [vmem:[%s1 + $0xd00] sm:$0xff]
  %v464 = vld [vmem:[%s1 + $0xd08] sm:$0xff]
  %v465 = vld [vmem:[%s1 + $0xd10] sm:$0xff]
  %v466 = vld [vmem:[%s1 + $0xd18] sm:$0xff]
  %v467 = vld [vmem:[%s1 + $0xd20] sm:$0xff]
  %v468 = vld [vmem:[%s1 + $0xd28] sm:$0xff]
  %v469 = vld [vmem:[%s1 + $0xd30] sm:$0xff]
  %v470 = vld [vmem:[%s1 + $0xd38] sm:$0xff]
  %v471 = vld [vmem:[%s1 + $0xd40] sm:$0xff]
  %v472 = vld [vmem:[%s1 + $0xd48] sm:$0xff]
  %v473 = vld [vmem:[%s1 + $0xd50] sm:$0xff]
  %v474 = vld [vmem:[%s1 + $0xd58] sm:$0xff]
  %v475 = vld [vmem:[%s1 + $0xd60] sm:$0xff]
  %v476 = vld [vmem:[%s1 + $0xd68] sm:$0xff]
  %v477 = vld [vmem:[%s1 + $0xd70] sm:$0xff]
  %v478 = vld [vmem:[%s1 + $0xd78] sm:$0xff]
  %v479 = vld [vmem:[%s1 + $0xd80] sm:$0xff]
  %v480 = vld [vmem:[%s1 + $0xd88] sm:$0xff]
  %v481 = vld [vmem:[%s1 + $0xd90] sm:$0xff]
  %v482 = vld [vmem:[%s1 + $0xd98] sm:$0xff]
  %v483 = vld [vmem:[%s1 + $0xda0] sm:$0xff]
  %v484 = vld [vmem:[%s1 + $0xda8] sm:$0xff]
  %v485 = vld [vmem:[%s1 + $0xdb0] sm:$0xff]
  %v486 = vld [vmem:[%s1 + $0xdb8] sm:$0xff]
  %v487 = vld [vmem:[%s1 + $0xdc0] sm:$0xff]
  %v488 = vld [vmem:[%s1 + $0xdc8] sm:$0xff]
  %v489 = vld [vmem:[%s1 + $0xdd0] sm:$0xff]
  %v490 = vld [vmem:[%s1 + $0xdd8] sm:$0xff]
  %v491 = vld [vmem:[%s1 + $0xde0] sm:$0xff]
  %v492 = vld [vmem:[%s1 + $0xde8] sm:$0xff]
  %v493 = vld [vmem:[%s1 + $0xdf0] sm:$0xff]
  %v494 = vld [vmem:[%s1 + $0xdf8] sm:$0xff]
  %v495 = vld [vmem:[%s1 + $0xe00] sm:$0xff]
  %v496 = vld [vmem:[%s1 + $0xe08] sm:$0xff]
  %v497 = vld [vmem:[%s1 + $0xe10] sm:$0xff]
  %v498 = vld [vmem:[%s1 + $0xe18] sm:$0xff]
  %v499 = vld [vmem:[%s1 + $0xe20] sm:$0xff]
  %v500 = vld [vmem:[%s1 + $0xe28] sm:$0xff]
  %v501 = vld [vmem:[%s1 + $0xe30] sm:$0xff]
  %v502 = vld [vmem:[%s1 + $0xe38] sm:$0xff]
  %v503 = vld [vmem:[%s1 + $0xe40] sm:$0xff]
  %v504 = vld [vmem:[%s1 + $0xe48] sm:$0xff]
  %v505 = vld [vmem:[%s1 + $0xe50] sm:$0xff]
  %v506 = vld [vmem:[%s1 + $0xe58] sm:$0xff]
  %v507 = vld [vmem:[%s1 + $0xe60] sm:$0xff]
  %v508 = vld [vmem:[%s1 + $0xe68] sm:$0xff]
  %v509 = vld [vmem:[%s1 + $0xe70] sm:$0xff]
  %v510 = vld [vmem:[%s1 + $0xe78] sm:$0xff]
  %v511 = vld [vmem:[%s1 + $0xe80] sm:$0xff]
  %v512 = vld [vmem:[%s1 + $0xe88] sm:$0xff]
  %v513 = vld [vmem:[%s1 + $0xe90] sm:$0xff]
  %v514 = vld [vmem:[%s1 + $0xe98] sm:$0xff]
  %v515 = vld [vmem:[%s1 + $0xea0] sm:$0xff]
  %v516 = vld [vmem:[%s1 + $0xea8] sm:$0xff]
  %v517 = vld [vmem:[%s1 + $0xeb0] sm:$0xff]
  %v518 = vld [vmem:[%s1 + $0xeb8] sm:$0xff]
  %v519 = vld [vmem:[%s1 + $0xec0] sm:$0xff]
  %v520 = vld [vmem:[%s1 + $0xec8] sm:$0xff]
  %v521 = vld [vmem:[%s1 + $0xed0] sm:$0xff]
  %v522 = vld [vmem:[%s1 + $0xed8] sm:$0xff]
  %v523 = vld [vmem:[%s1 + $0xee0] sm:$0xff]
  %v524 = vld [vmem:[%s1 + $0xee8] sm:$0xff]
  %v525 = vld [vmem:[%s1 + $0xef0] sm:$0xff]
  %v526 = vld [vmem:[%s1 + $0xef8] sm:$0xff]
  %v527 = vld [vmem:[%s1 + $0xf00] sm:$0xff]
  %v528 = vld [vmem:[%s1 + $0xf08] sm:$0xff]
  %v529 = vld [vmem:[%s1 + $0xf10] sm:$0xff]
  %v530 = vld [vmem:[%s1 + $0xf18] sm:$0xff]
  %v531 = vld [vmem:[%s1 + $0xf20] sm:$0xff]
  %v532 = vld [vmem:[%s1 + $0xf28] sm:$0xff]
  %v533 = vld [vmem:[%s1 + $0xf30] sm:$0xff]
  %v534 = vld [vmem:[%s1 + $0xf38] sm:$0xff]
  %v535 = vld [vmem:[%s1 + $0xf40] sm:$0xff]
  %v536 = vld [vmem:[%s1 + $0xf48] sm:$0xff]
  %v537 = vld [vmem:[%s1 + $0xf50] sm:$0xff]
  %v538 = vld [vmem:[%s1 + $0xf58] sm:$0xff]
  %v539 = vld [vmem:[%s1 + $0xf60] sm:$0xff]
  %v540 = vld [vmem:[%s1 + $0xf68] sm:$0xff]
  %v541 = vld [vmem:[%s1 + $0xf70] sm:$0xff]
  %v542 = vld [vmem:[%s1 + $0xf78] sm:$0xff]
  %v543 = vld [vmem:[%s1 + $0xf80] sm:$0xff]
  %v544 = vld [vmem:[%s1 + $0xf88] sm:$0xff]
  %v545 = vld [vmem:[%s1 + $0xf90] sm:$0xff]
  %v546 = vld [vmem:[%s1 + $0xf98] sm:$0xff]
  %v547 = vld [vmem:[%s1 + $0xfa0] sm:$0xff]
  %v548 = vld [vmem:[%s1 + $0xfa8] sm:$0xff]
  %v549 = vld [vmem:[%s1 + $0xfb0] sm:$0xff]
  %v550 = vld [vmem:[%s1 + $0xfb8] sm:$0xff]
  %v551 = vld [vmem:[%s1 + $0xfc0] sm:$0xff]
  %v552 = vld [vmem:[%s1 + $0xfc8] sm:$0xff]
  %v553 = vld [vmem:[%s1 + $0xfd0] sm:$0xff]
  %v554 = vld [vmem:[%s1 + $0xfd8] sm:$0xff]
  %v555 = vld [vmem:[%s1 + $0xfe0] sm:$0xff]
  %v556 = vld [vmem:[%s1 + $0xfe8] sm:$0xff]
  %v557 = vld [vmem:[%s1 + $0xff0] sm:$0xff]
  %v558 = vld [vmem:[%s1 + $0xff8] sm:$0xff]
  %v559 = vld [vmem:[%s1 + $0x1000] sm:$0xff]
  %v560 = vld [vmem:[%s1 + $0x1008] sm:$0xff]
  %v561 = vld [vmem:[%s1 + $0x1010] sm:$0xff]
  %v562 = vld [vmem:[%s1 + $0x1018] sm:$0xff]
  %v563 = vld [vmem:[%s1 + $0x1020] sm:$0xff]
  %v564 = vld [vmem:[%s1 + $0x1028] sm:$0xff]
  %v565 = vld [vmem:[%s1 + $0x1030] sm:$0xff]
  %v566 = vld [vmem:[%s1 + $0x1038] sm:$0xff]
  %v567 = vld [vmem:[%s1 + $0x1040] sm:$0xff]
  %v568 = vld [vmem:[%s1 + $0x1048] sm:$0xff]
  %v569 = vld [vmem:[%s1 + $0x1050] sm:$0xff]
  %v570 = vld [vmem:[%s1 + $0x1058] sm:$0xff]
  %v571 = vld [vmem:[%s1 + $0x1060] sm:$0xff]
  %v572 = vld [vmem:[%s1 + $0x1068] sm:$0xff]
  %v573 = vld [vmem:[%s1 + $0x1070] sm:$0xff]
  %v574 = vld [vmem:[%s1 + $0x1078] sm:$0xff]
  %v575 = vld [vmem:[%s1 + $0x1080] sm:$0xff]
  %v576 = vld [vmem:[%s1 + $0x1088] sm:$0xff]
  %v577 = vld [vmem:[%s1 + $0x1090] sm:$0xff]
  %v578 = vld [vmem:[%s1 + $0x1098] sm:$0xff]
  %v579 = vld [vmem:[%s1 + $0x10a0] sm:$0xff]
  %v580 = vld [vmem:[%s1 + $0x10a8] sm:$0xff]
  %v581 = vld [vmem:[%s1 + $0x10b0] sm:$0xff]
  %v582 = vld [vmem:[%s1 + $0x10b8] sm:$0xff]
  %v583 = vld [vmem:[%s1 + $0x10c0] sm:$0xff]
  %v584 = vld [vmem:[%s1 + $0x10c8] sm:$0xff]
  %v585 = vld [vmem:[%s1 + $0x10d0] sm:$0xff]
  %v586 = vld [vmem:[%s1 + $0x10d8] sm:$0xff]
  %v587 = vld [vmem:[%s1 + $0x10e0] sm:$0xff]
  %v588 = vld [vmem:[%s1 + $0x10e8] sm:$0xff]
  %v589 = vld [vmem:[%s1 + $0x10f0] sm:$0xff]
  %v590 = vld [vmem:[%s1 + $0x10f8] sm:$0xff]
  %v591 = vld [vmem:[%s1 + $0x1100] sm:$0xff]
  %v592 = vld [vmem:[%s1 + $0x1108] sm:$0xff]
  %v593 = vld [vmem:[%s1 + $0x1110] sm:$0xff]
  %v594 = vld [vmem:[%s1 + $0x1118] sm:$0xff]
  %v595 = vld [vmem:[%s1 + $0x1120] sm:$0xff]
  %v596 = vld [vmem:[%s1 + $0x1128] sm:$0xff]
  %v597 = vld [vmem:[%s1 + $0x1130] sm:$0xff]
  %v598 = vld [vmem:[%s1 + $0x1138] sm:$0xff]
  %v599 = vld [vmem:[%s1 + $0x1140] sm:$0xff]
  %v600 = vld [vmem:[%s1 + $0x1148] sm:$0xff]
  %v601 = vld [vmem:[%s1 + $0x1150] sm:$0xff]
  %v602 = vld [vmem:[%s1 + $0x1158] sm:$0xff]
  %v603 = vld [vmem:[%s1 + $0x1160] sm:$0xff]
  %v604 = vld [vmem:[%s1 + $0x1168] sm:$0xff]
  %v605 = vld [vmem:[%s1 + $0x1170] sm:$0xff]
  %v606 = vld [vmem:[%s1 + $0x1178] sm:$0xff]
  %v607 = vld [vmem:[%s1 + $0x1180] sm:$0xff]
  %v608 = vld [vmem:[%s1 + $0x1188] sm:$0xff]
  %v609 = vld [vmem:[%s1 + $0x1190] sm:$0xff]
  %v610 = vld [vmem:[%s1 + $0x1198] sm:$0xff]
  %v611 = vld [vmem:[%s1 + $0x11a0] sm:$0xff]
  %v612 = vld [vmem:[%s1 + $0x11a8] sm:$0xff]
  %v613 = vld [vmem:[%s1 + $0x11b0] sm:$0xff]
  %v614 = vld [vmem:[%s1 + $0x11b8] sm:$0xff]
  %v615 = vld [vmem:[%s1 + $0x11c0] sm:$0xff]
  %v616 = vld [vmem:[%s1 + $0x11c8] sm:$0xff]
  %v617 = vld [vmem:[%s1 + $0x11d0] sm:$0xff]
  %v618 = vld [vmem:[%s1 + $0x11d8] sm:$0xff]
  %v619 = vld [vmem:[%s1 + $0x11e0] sm:$0xff]
  %v620 = vld [vmem:[%s1 + $0x11e8] sm:$0xff]
  %v621 = vld [vmem:[%s1 + $0x11f0] sm:$0xff]
  %v622 = vld [vmem:[%s1 + $0x11f8] sm:$0xff]
  %v623 = vld [vmem:[%s1 + $0x1200] sm:$0xff]
  %v624 = vld [vmem:[%s1 + $0x1208] sm:$0xff]
  %v625 = vld [vmem:[%s1 + $0x1210] sm:$0xff]
  %v626 = vld [vmem:[%s1 + $0x1218] sm:$0xff]
  %v627 = vld [vmem:[%s1 + $0x1220] sm:$0xff]
  %v628 = vld [vmem:[%s1 + $0x1228] sm:$0xff]
  %v629 = vld [vmem:[%s1 + $0x1230] sm:$0xff]
  %v630 = vld [vmem:[%s1 + $0x1238] sm:$0xff]
  %v631 = vld [vmem:[%s1 + $0x1240] sm:$0xff]
  %v632 = vld [vmem:[%s1 + $0x1248] sm:$0xff]
  %v633 = vld [vmem:[%s1 + $0x1250] sm:$0xff]
  %v634 = vld [vmem:[%s1 + $0x1258] sm:$0xff]
  %v635 = vld [vmem:[%s1 + $0x1260] sm:$0xff]
  %v636 = vld [vmem:[%s1 + $0x1268] sm:$0xff]
  %v637 = vld [vmem:[%s1 + $0x1270] sm:$0xff]
  %v638 = vld [vmem:[%s1 + $0x1278] sm:$0xff]
  %v639 = vld [vmem:[%s1 + $0x1280] sm:$0xff]
  %v640 = vld [vmem:[%s1 + $0x1288] sm:$0xff]
  %v641 = vld [vmem:[%s1 + $0x1290] sm:$0xff]
  %v642 = vld [vmem:[%s1 + $0x1298] sm:$0xff]
  %v643 = vld [vmem:[%s1 + $0x12a0] sm:$0xff]
  %v644 = vld [vmem:[%s1 + $0x12a8] sm:$0xff]
  %v645 = vld [vmem:[%s1 + $0x12b0] sm:$0xff]
  %v646 = vld [vmem:[%s1 + $0x12b8] sm:$0xff]
  %v647 = vld [vmem:[%s1 + $0x12c0] sm:$0xff]
  %v648 = vld [vmem:[%s1 + $0x12c8] sm:$0xff]
  %v649 = vld [vmem:[%s1 + $0x12d0] sm:$0xff]
  %v650 = vld [vmem:[%s1 + $0x12d8] sm:$0xff]
  %v651 = vld [vmem:[%s1 + $0x12e0] sm:$0xff]
  %v652 = vld [vmem:[%s1 + $0x12e8] sm:$0xff]
  %v653 = vld [vmem:[%s1 + $0x12f0] sm:$0xff]
  %v654 = vld [vmem:[%s1 + $0x12f8] sm:$0xff]
  %v655 = vld [vmem:[%s1 + $0x1300] sm:$0xff]
  %v656 = vld [vmem:[%s1 + $0x1308] sm:$0xff]
  %v657 = vld [vmem:[%s1 + $0x1310] sm:$0xff]
  %v658 = vld [vmem:[%s1 + $0x1318] sm:$0xff]
  %v659 = vld [vmem:[%s1 + $0x1320] sm:$0xff]
  %v660 = vld [vmem:[%s1 + $0x1328] sm:$0xff]
  %v661 = vld [vmem:[%s1 + $0x1330] sm:$0xff]
  %v662 = vld [vmem:[%s1 + $0x1338] sm:$0xff]
  %v663 = vld [vmem:[%s1 + $0x1340] sm:$0xff]
  %v664 = vld [vmem:[%s1 + $0x1348] sm:$0xff]
  %v665 = vld [vmem:[%s1 + $0x1350] sm:$0xff]
  %v666 = vld [vmem:[%s1 + $0x1358] sm:$0xff]
  %v667 = vld [vmem:[%s1 + $0x1360] sm:$0xff]
  %v668 = vld [vmem:[%s1 + $0x1368] sm:$0xff]
  %v669 = vld [vmem:[%s1 + $0x1370] sm:$0xff]
  %v670 = vld [vmem:[%s1 + $0x1378] sm:$0xff]
  %v671 = vld [vmem:[%s1 + $0x1380] sm:$0xff]
  %v672 = vld [vmem:[%s1 + $0x1388] sm:$0xff]
  %v673 = vld [vmem:[%s1 + $0x1390] sm:$0xff]
  %v674 = vld [vmem:[%s1 + $0x1398] sm:$0xff]
  %v675 = vld [vmem:[%s1 + $0x13a0] sm:$0xff]
  %v676 = vld [vmem:[%s1 + $0x13a8] sm:$0xff]
  %v677 = vld [vmem:[%s1 + $0x13b0] sm:$0xff]
  %v678 = vld [vmem:[%s1 + $0x13b8] sm:$0xff]
  %v679 = vld [vmem:[%s1 + $0x13c0] sm:$0xff]
  %v680 = vld [vmem:[%s1 + $0x13c8] sm:$0xff]
  %v681 = vld [vmem:[%s1 + $0x13d0] sm:$0xff]
  %v682 = vld [vmem:[%s1 + $0x13d8] sm:$0xff]
  %v683 = vld [vmem:[%s1 + $0x13e0] sm:$0xff]
  %v684 = vld [vmem:[%s1 + $0x13e8] sm:$0xff]
  %v685 = vld [vmem:[%s1 + $0x13f0] sm:$0xff]
  %v686 = vld [vmem:[%s1 + $0x13f8] sm:$0xff]
  %v687 = vld [vmem:[%s1 + $0x1400] sm:$0xff]
  %v688 = vld [vmem:[%s1 + $0x1408] sm:$0xff]
  %v689 = vld [vmem:[%s1 + $0x1410] sm:$0xff]
  %v690 = vld [vmem:[%s1 + $0x1418] sm:$0xff]
  %v691 = vld [vmem:[%s1 + $0x1420] sm:$0xff]
  %v692 = vld [vmem:[%s1 + $0x1428] sm:$0xff]
  %v693 = vld [vmem:[%s1 + $0x1430] sm:$0xff]
  %v694 = vld [vmem:[%s1 + $0x1438] sm:$0xff]
  %v695 = vld [vmem:[%s1 + $0x1440] sm:$0xff]
  %v696 = vld [vmem:[%s1 + $0x1448] sm:$0xff]
  %v697 = vld [vmem:[%s1 + $0x1450] sm:$0xff]
  %v698 = vld [vmem:[%s1 + $0x1458] sm:$0xff]
  %v699 = vld [vmem:[%s1 + $0x1460] sm:$0xff]
  %v700 = vld [vmem:[%s1 + $0x1468] sm:$0xff]
  %v701 = vld [vmem:[%s1 + $0x1470] sm:$0xff]
  %v702 = vld [vmem:[%s1 + $0x1478] sm:$0xff]
  %v703 = vld [vmem:[%s1 + $0x1480] sm:$0xff]
  %v704 = vld [vmem:[%s1 + $0x1488] sm:$0xff]
  %v705 = vld [vmem:[%s1 + $0x1490] sm:$0xff]
  %v706 = vld [vmem:[%s1 + $0x1498] sm:$0xff]
  %v707 = vld [vmem:[%s1 + $0x14a0] sm:$0xff]
  %v708 = vld [vmem:[%s1 + $0x14a8] sm:$0xff]
  %v709 = vld [vmem:[%s1 + $0x14b0] sm:$0xff]
  %v710 = vld [vmem:[%s1 + $0x14b8] sm:$0xff]
  %v711 = vld [vmem:[%s1 + $0x14c0] sm:$0xff]
  %v712 = vld [vmem:[%s1 + $0x14c8] sm:$0xff]
  %v713 = vld [vmem:[%s1 + $0x14d0] sm:$0xff]
  %v714 = vld [vmem:[%s1 + $0x14d8] sm:$0xff]
  %v715 = vld [vmem:[%s1 + $0x14e0] sm:$0xff]
  %v716 = vld [vmem:[%s1 + $0x14e8] sm:$0xff]
  %v717 = vld [vmem:[%s1 + $0x14f0] sm:$0xff]
  %v718 = vld [vmem:[%s1 + $0x14f8] sm:$0xff]
  %v719 = vld [vmem:[%s1 + $0x1500] sm:$0xff]
  %v720 = vld [vmem:[%s1 + $0x1508] sm:$0xff]
  %v721 = vld [vmem:[%s1 + $0x1510] sm:$0xff]
  %v722 = vld [vmem:[%s1 + $0x1518] sm:$0xff]
  %v723 = vld [vmem:[%s1 + $0x1520] sm:$0xff]
  %v724 = vld [vmem:[%s1 + $0x1528] sm:$0xff]
  %v725 = vld [vmem:[%s1 + $0x1530] sm:$0xff]
  %v726 = vld [vmem:[%s1 + $0x1538] sm:$0xff]
  %v727 = vld [vmem:[%s1 + $0x1540] sm:$0xff]
  %v728 = vld [vmem:[%s1 + $0x1548] sm:$0xff]
  %v729 = vld [vmem:[%s1 + $0x1550] sm:$0xff]
  %v730 = vld [vmem:[%s1 + $0x1558] sm:$0xff]
  %v731 = vld [vmem:[%s1 + $0x1560] sm:$0xff]
  %v732 = vld [vmem:[%s1 + $0x1568] sm:$0xff]
  %v733 = vld [vmem:[%s1 + $0x1570] sm:$0xff]
  %v734 = vld [vmem:[%s1 + $0x1578] sm:$0xff]
  %v735 = vld [vmem:[%s1 + $0x1580] sm:$0xff]
  %v736 = vld [vmem:[%s1 + $0x1588] sm:$0xff]
  %v737 = vld [vmem:[%s1 + $0x1590] sm:$0xff]
  %v738 = vld [vmem:[%s1 + $0x1598] sm:$0xff]
  %v739 = vld [vmem:[%s1 + $0x15a0] sm:$0xff]
  %v740 = vld [vmem:[%s1 + $0x15a8] sm:$0xff]
  %v741 = vld [vmem:[%s1 + $0x15b0] sm:$0xff]
  %v742 = vld [vmem:[%s1 + $0x15b8] sm:$0xff]
  %v743 = vld [vmem:[%s1 + $0x15c0] sm:$0xff]
  %v744 = vld [vmem:[%s1 + $0x15c8] sm:$0xff]
  %v745 = vld [vmem:[%s1 + $0x15d0] sm:$0xff]
  %v746 = vld [vmem:[%s1 + $0x15d8] sm:$0xff]
  %v747 = vld [vmem:[%s1 + $0x15e0] sm:$0xff]
  %v748 = vld [vmem:[%s1 + $0x15e8] sm:$0xff]
  %v749 = vld [vmem:[%s1 + $0x15f0] sm:$0xff]
  %v750 = vld [vmem:[%s1 + $0x15f8] sm:$0xff]
  %v751 = vld [vmem:[%s1 + $0x1600] sm:$0xff]
  %v752 = vld [vmem:[%s1 + $0x1608] sm:$0xff]
  %v753 = vld [vmem:[%s1 + $0x1610] sm:$0xff]
  %v754 = vld [vmem:[%s1 + $0x1618] sm:$0xff]
  %v755 = vld [vmem:[%s1 + $0x1620] sm:$0xff]
  %v756 = vld [vmem:[%s1 + $0x1628] sm:$0xff]
  %v757 = vld [vmem:[%s1 + $0x1630] sm:$0xff]
  %v758 = vld [vmem:[%s1 + $0x1638] sm:$0xff]
  %v759 = vld [vmem:[%s1 + $0x1640] sm:$0xff]
  %v760 = vld [vmem:[%s1 + $0x1648] sm:$0xff]
  %v761 = vld [vmem:[%s1 + $0x1650] sm:$0xff]
  %v762 = vld [vmem:[%s1 + $0x1658] sm:$0xff]
  %v763 = vld [vmem:[%s1 + $0x1660] sm:$0xff]
  %v764 = vld [vmem:[%s1 + $0x1668] sm:$0xff]
  %v765 = vld [vmem:[%s1 + $0x1670] sm:$0xff]
  %v766 = vld [vmem:[%s1 + $0x1678] sm:$0xff]
  %v767 = vld [vmem:[%s1 + $0x1680] sm:$0xff]
  %v768 = vld [vmem:[%s1 + $0x1688] sm:$0xff]
  %v769 = vld [vmem:[%s1 + $0x1690] sm:$0xff]
  %v770 = vld [vmem:[%s1 + $0x1698] sm:$0xff]
  %v771 = vld [vmem:[%s1 + $0x16a0] sm:$0xff]
  %v772 = vld [vmem:[%s1 + $0x16a8] sm:$0xff]
  %v773 = vld [vmem:[%s1 + $0x16b0] sm:$0xff]
  %v774 = vld [vmem:[%s1 + $0x16b8] sm:$0xff]
  %v775 = vld [vmem:[%s1 + $0x16c0] sm:$0xff]
  %v776 = vld [vmem:[%s1 + $0x16c8] sm:$0xff]
  %v777 = vld [vmem:[%s1 + $0x16d0] sm:$0xff]
  %v778 = vld [vmem:[%s1 + $0x16d8] sm:$0xff]
  %v779 = vld [vmem:[%s1 + $0x16e0] sm:$0xff]
  %v780 = vld [vmem:[%s1 + $0x16e8] sm:$0xff]
  %v781 = vld [vmem:[%s1 + $0x16f0] sm:$0xff]
  %v782 = vld [vmem:[%s1 + $0x16f8] sm:$0xff]
  %v783 = vld [vmem:[%s1 + $0x1700] sm:$0xff]
  %v784 = vld [vmem:[%s1 + $0x1708] sm:$0xff]
  %v785 = vld [vmem:[%s1 + $0x1710] sm:$0xff]
  %v786 = vld [vmem:[%s1 + $0x1718] sm:$0xff]
  %v787 = vld [vmem:[%s1 + $0x1720] sm:$0xff]
  %v788 = vld [vmem:[%s1 + $0x1728] sm:$0xff]
  %v789 = vld [vmem:[%s1 + $0x1730] sm:$0xff]
  %v790 = vld [vmem:[%s1 + $0x1738] sm:$0xff]
  %v791 = vld [vmem:[%s1 + $0x1740] sm:$0xff]
  %v792 = vld [vmem:[%s1 + $0x1748] sm:$0xff]
  %v793 = vld [vmem:[%s1 + $0x1750] sm:$0xff]
  %v794 = vld [vmem:[%s1 + $0x1758] sm:$0xff]
  %v795 = vld [vmem:[%s1 + $0x1760] sm:$0xff]
  %v796 = vld [vmem:[%s1 + $0x1768] sm:$0xff]
  %v797 = vld [vmem:[%s1 + $0x1770] sm:$0xff]
  %v798 = vld [vmem:[%s1 + $0x1778] sm:$0xff]
  %v799 = vld [vmem:[%s1 + $0x1780] sm:$0xff]
  %v800 = vld [vmem:[%s1 + $0x1788] sm:$0xff]
  %v801 = vld [vmem:[%s1 + $0x1790] sm:$0xff]
  %v802 = vld [vmem:[%s1 + $0x1798] sm:$0xff]
  %v803 = vld [vmem:[%s1 + $0x17a0] sm:$0xff]
  %v804 = vld [vmem:[%s1 + $0x17a8] sm:$0xff]
  %v805 = vld [vmem:[%s1 + $0x17b0] sm:$0xff]
  %v806 = vld [vmem:[%s1 + $0x17b8] sm:$0xff]
  %v807 = vld [vmem:[%s1 + $0x17c0] sm:$0xff]
  %v808 = vld [vmem:[%s1 + $0x17c8] sm:$0xff]
  %v809 = vld [vmem:[%s1 + $0x17d0] sm:$0xff]
  %v810 = vld [vmem:[%s1 + $0x17d8] sm:$0xff]
  %v811 = vld [vmem:[%s1 + $0x17e0] sm:$0xff]
  %v812 = vld [vmem:[%s1 + $0x17e8] sm:$0xff]
  %v813 = vld [vmem:[%s1 + $0x17f0] sm:$0xff]
  %v814 = vld [vmem:[%s1 + $0x17f8] sm:$0xff]
  %v815 = vld [vmem:[%s1 + $0x1800] sm:$0xff]
  %v816 = vld [vmem:[%s1 + $0x1808] sm:$0xff]
  %v817 = vld [vmem:[%s1 + $0x1810] sm:$0xff]
  %v818 = vld [vmem:[%s1 + $0x1818] sm:$0xff]
  %v819 = vld [vmem:[%s1 + $0x1820] sm:$0xff]
  %v820 = vld [vmem:[%s1 + $0x1828] sm:$0xff]
  %v821 = vld [vmem:[%s1 + $0x1830] sm:$0xff]
  %v822 = vld [vmem:[%s1 + $0x1838] sm:$0xff]
  %v823 = vld [vmem:[%s1 + $0x1840] sm:$0xff]
  %v824 = vld [vmem:[%s1 + $0x1848] sm:$0xff]
  %v825 = vld [vmem:[%s1 + $0x1850] sm:$0xff]
  %v826 = vld [vmem:[%s1 + $0x1858] sm:$0xff]
  %v827 = vld [vmem:[%s1 + $0x1860] sm:$0xff]
  %v828 = vld [vmem:[%s1 + $0x1868] sm:$0xff]
  %v829 = vld [vmem:[%s1 + $0x1870] sm:$0xff]
  %v830 = vld [vmem:[%s1 + $0x1878] sm:$0xff]
  %v831 = vld [vmem:[%s1 + $0x1880] sm:$0xff]
  %v832 = vld [vmem:[%s1 + $0x1888] sm:$0xff]
  %v833 = vld [vmem:[%s1 + $0x1890] sm:$0xff]
  %v834 = vld [vmem:[%s1 + $0x1898] sm:$0xff]
  %v835 = vld [vmem:[%s1 + $0x18a0] sm:$0xff]
  %v836 = vld [vmem:[%s1 + $0x18a8] sm:$0xff]
  %v837 = vld [vmem:[%s1 + $0x18b0] sm:$0xff]
  %v838 = vld [vmem:[%s1 + $0x18b8] sm:$0xff]
  %v839 = vld [vmem:[%s1 + $0x18c0] sm:$0xff]
  %v840 = vld [vmem:[%s1 + $0x18c8] sm:$0xff]
  %v841 = vld [vmem:[%s1 + $0x18d0] sm:$0xff]
  %v842 = vld [vmem:[%s1 + $0x18d8] sm:$0xff]
  %v843 = vld [vmem:[%s1 + $0x18e0] sm:$0xff]
  %v844 = vld [vmem:[%s1 + $0x18e8] sm:$0xff]
  %v845 = vld [vmem:[%s1 + $0x18f0] sm:$0xff]
  %v846 = vld [vmem:[%s1 + $0x18f8] sm:$0xff]
  %v847 = vld [vmem:[%s2] sm:$0x3]
  %v849 = vlaneseq
  %v850 = vshrl.u32 %v849, 7
  %v851 = vsub.s32 0, %v850
  %v852 = vrot.slane %v847, %v851
  %v853 = vlaneseq
  %v854 = vshrl.u32 %v853, 7
  %v855 = vsub.s32 1, %v854
  %v856 = vrot.slane %v847, %v855
  %v884 = vunpack.c.l.b16 %v22
  %v885 = vunpack.c.h.b16 %v22
  %v886 = vunpack.c.l.b16 %v23
  %v887 = vunpack.c.h.b16 %v23
  %v888 = vunpack.c.l.b16 %v24
  %v889 = vunpack.c.h.b16 %v24
  %v890 = vunpack.c.l.b16 %v25
  %v891 = vunpack.c.h.b16 %v25
  %v892 = vunpack.c.l.b16 %v26
  %v893 = vunpack.c.h.b16 %v26
  %v894 = vunpack.c.l.b16 %v27
  %v895 = vunpack.c.h.b16 %v27
  %v896 = vunpack.c.l.b16 %v28
  %v897 = vunpack.c.h.b16 %v28
  %v898 = vunpack.c.l.b16 %v29
  %v899 = vunpack.c.h.b16 %v29
  %v900 = vunpack.c.l.b16 %v30
  %v901 = vunpack.c.h.b16 %v30
  %v902 = vunpack.c.l.b16 %v31
  %v903 = vunpack.c.h.b16 %v31
  %v904 = vunpack.c.l.b16 %v32
  %v905 = vunpack.c.h.b16 %v32
  %v906 = vunpack.c.l.b16 %v33
  %v907 = vunpack.c.h.b16 %v33
  %v908 = vunpack.c.l.b16 %v34
  %v909 = vunpack.c.h.b16 %v34
  %v910 = vunpack.c.l.b16 %v35
  %v911 = vunpack.c.h.b16 %v35
  %v912 = vunpack.c.l.b16 %v36
  %v913 = vunpack.c.h.b16 %v36
  %v914 = vunpack.c.l.b16 %v37
  %v915 = vunpack.c.h.b16 %v37
  %v916 = vunpack.c.l.b16 %v38
  %v917 = vunpack.c.h.b16 %v38
  %v918 = vunpack.c.l.b16 %v39
  %v919 = vunpack.c.h.b16 %v39
  %v920 = vunpack.c.l.b16 %v40
  %v921 = vunpack.c.h.b16 %v40
  %v922 = vunpack.c.l.b16 %v41
  %v923 = vunpack.c.h.b16 %v41
  %v924 = vunpack.c.l.b16 %v42
  %v925 = vunpack.c.h.b16 %v42
  %v926 = vunpack.c.l.b16 %v43
  %v927 = vunpack.c.h.b16 %v43
  %v928 = vunpack.c.l.b16 %v44
  %v929 = vunpack.c.h.b16 %v44
  %v930 = vunpack.c.l.b16 %v45
  %v931 = vunpack.c.h.b16 %v45
  %v932 = vunpack.c.l.b16 %v46
  %v933 = vunpack.c.h.b16 %v46
  %v934 = vpack.c.b16 %v884, %v884
  %v935 = vpack.c.b16 %v885, %v885
  %v936 = vpack.c.b16 %v886, %v886
  %v937 = vpack.c.b16 %v887, %v887
  %v938 = vpack.c.b16 %v888, %v888
  %v939 = vpack.c.b16 %v889, %v889
  %v940 = vpack.c.b16 %v890, %v890
  %v941 = vpack.c.b16 %v891, %v891
  %v942 = vpack.c.b16 %v892, %v892
  %v943 = vpack.c.b16 %v893, %v893
  %v944 = vpack.c.b16 %v894, %v894
  %v945 = vpack.c.b16 %v895, %v895
  %v946 = vpack.c.b16 %v896, %v896
  %v947 = vpack.c.b16 %v897, %v897
  %v948 = vpack.c.b16 %v898, %v898
  %v949 = vpack.c.b16 %v899, %v899
  %v950 = vpack.c.b16 %v900, %v900
  %v951 = vpack.c.b16 %v901, %v901
  %v952 = vpack.c.b16 %v902, %v902
  %v953 = vpack.c.b16 %v903, %v903
  %v954 = vpack.c.b16 %v904, %v904
  %v955 = vpack.c.b16 %v905, %v905
  %v956 = vpack.c.b16 %v906, %v906
  %v957 = vpack.c.b16 %v907, %v907
  %v958 = vpack.c.b16 %v908, %v908
  %v959 = vpack.c.b16 %v909, %v909
  %v960 = vpack.c.b16 %v910, %v910
  %v961 = vpack.c.b16 %v911, %v911
  %v962 = vpack.c.b16 %v912, %v912
  %v963 = vpack.c.b16 %v913, %v913
  %v964 = vpack.c.b16 %v914, %v914
  %v965 = vpack.c.b16 %v915, %v915
  %v966 = vpack.c.b16 %v916, %v916
  %v967 = vpack.c.b16 %v917, %v917
  %v968 = vpack.c.b16 %v918, %v918
  %v969 = vpack.c.b16 %v919, %v919
  %v970 = vpack.c.b16 %v920, %v920
  %v971 = vpack.c.b16 %v921, %v921
  %v972 = vpack.c.b16 %v922, %v922
  %v973 = vpack.c.b16 %v923, %v923
  %v974 = vpack.c.b16 %v924, %v924
  %v975 = vpack.c.b16 %v925, %v925
  %v976 = vpack.c.b16 %v926, %v926
  %v977 = vpack.c.b16 %v927, %v927
  %v978 = vpack.c.b16 %v928, %v928
  %v979 = vpack.c.b16 %v929, %v929
  %v980 = vpack.c.b16 %v930, %v930
  %v981 = vpack.c.b16 %v931, %v931
  %v982 = vpack.c.b16 %v932, %v932
  %v983 = vpack.c.b16 %v933, %v933
  %v1834 = vunpack.c.l.b16 %v47
  %v1835 = vunpack.c.h.b16 %v47
  %v1836 = vunpack.c.l.b16 %v48
  %v1837 = vunpack.c.h.b16 %v48
  %v1838 = vunpack.c.l.b16 %v49
  %v1839 = vunpack.c.h.b16 %v49
  %v1840 = vunpack.c.l.b16 %v50
  %v1841 = vunpack.c.h.b16 %v50
  %v1842 = vunpack.c.l.b16 %v51
  %v1843 = vunpack.c.h.b16 %v51
  %v1844 = vunpack.c.l.b16 %v52
  %v1845 = vunpack.c.h.b16 %v52
  %v1846 = vunpack.c.l.b16 %v53
  %v1847 = vunpack.c.h.b16 %v53
  %v1848 = vunpack.c.l.b16 %v54
  %v1849 = vunpack.c.h.b16 %v54
  %v1850 = vunpack.c.l.b16 %v55
  %v1851 = vunpack.c.h.b16 %v55
  %v1852 = vunpack.c.l.b16 %v56
  %v1853 = vunpack.c.h.b16 %v56
  %v1854 = vunpack.c.l.b16 %v57
  %v1855 = vunpack.c.h.b16 %v57
  %v1856 = vunpack.c.l.b16 %v58
  %v1857 = vunpack.c.h.b16 %v58
  %v1858 = vunpack.c.l.b16 %v59
  %v1859 = vunpack.c.h.b16 %v59
  %v1860 = vunpack.c.l.b16 %v60
  %v1861 = vunpack.c.h.b16 %v60
  %v1862 = vunpack.c.l.b16 %v61
  %v1863 = vunpack.c.h.b16 %v61
  %v1864 = vunpack.c.l.b16 %v62
  %v1865 = vunpack.c.h.b16 %v62
  %v1866 = vunpack.c.l.b16 %v63
  %v1867 = vunpack.c.h.b16 %v63
  %v1868 = vunpack.c.l.b16 %v64
  %v1869 = vunpack.c.h.b16 %v64
  %v1870 = vunpack.c.l.b16 %v65
  %v1871 = vunpack.c.h.b16 %v65
  %v1872 = vunpack.c.l.b16 %v66
  %v1873 = vunpack.c.h.b16 %v66
  %v1874 = vunpack.c.l.b16 %v67
  %v1875 = vunpack.c.h.b16 %v67
  %v1876 = vunpack.c.l.b16 %v68
  %v1877 = vunpack.c.h.b16 %v68
  %v1878 = vunpack.c.l.b16 %v69
  %v1879 = vunpack.c.h.b16 %v69
  %v1880 = vunpack.c.l.b16 %v70
  %v1881 = vunpack.c.h.b16 %v70
  %v1882 = vunpack.c.l.b16 %v71
  %v1883 = vunpack.c.h.b16 %v71
  %v1884 = vunpack.c.l.b16 %v72
  %v1885 = vunpack.c.h.b16 %v72
  %v1886 = vunpack.c.l.b16 %v73
  %v1887 = vunpack.c.h.b16 %v73
  %v1888 = vunpack.c.l.b16 %v74
  %v1889 = vunpack.c.h.b16 %v74
  %v1890 = vunpack.c.l.b16 %v75
  %v1891 = vunpack.c.h.b16 %v75
  %v1892 = vunpack.c.l.b16 %v76
  %v1893 = vunpack.c.h.b16 %v76
  %v1894 = vunpack.c.l.b16 %v77
  %v1895 = vunpack.c.h.b16 %v77
  %v1896 = vunpack.c.l.b16 %v78
  %v1897 = vunpack.c.h.b16 %v78
  %v1898 = vunpack.c.l.b16 %v79
  %v1899 = vunpack.c.h.b16 %v79
  %v1900 = vunpack.c.l.b16 %v80
  %v1901 = vunpack.c.h.b16 %v80
  %v1902 = vunpack.c.l.b16 %v81
  %v1903 = vunpack.c.h.b16 %v81
  %v1904 = vunpack.c.l.b16 %v82
  %v1905 = vunpack.c.h.b16 %v82
  %v1906 = vunpack.c.l.b16 %v83
  %v1907 = vunpack.c.h.b16 %v83
  %v1908 = vunpack.c.l.b16 %v84
  %v1909 = vunpack.c.h.b16 %v84
  %v1910 = vunpack.c.l.b16 %v85
  %v1911 = vunpack.c.h.b16 %v85
  %v1912 = vunpack.c.l.b16 %v86
  %v1913 = vunpack.c.h.b16 %v86
  %v1914 = vunpack.c.l.b16 %v87
  %v1915 = vunpack.c.h.b16 %v87
  %v1916 = vunpack.c.l.b16 %v88
  %v1917 = vunpack.c.h.b16 %v88
  %v1918 = vunpack.c.l.b16 %v89
  %v1919 = vunpack.c.h.b16 %v89
  %v1920 = vunpack.c.l.b16 %v90
  %v1921 = vunpack.c.h.b16 %v90
  %v1922 = vunpack.c.l.b16 %v91
  %v1923 = vunpack.c.h.b16 %v91
  %v1924 = vunpack.c.l.b16 %v92
  %v1925 = vunpack.c.h.b16 %v92
  %v1926 = vunpack.c.l.b16 %v93
  %v1927 = vunpack.c.h.b16 %v93
  %v1928 = vunpack.c.l.b16 %v94
  %v1929 = vunpack.c.h.b16 %v94
  %v1930 = vunpack.c.l.b16 %v95
  %v1931 = vunpack.c.h.b16 %v95
  %v1932 = vunpack.c.l.b16 %v96
  %v1933 = vunpack.c.h.b16 %v96
  %v1934 = vunpack.c.l.b16 %v97
  %v1935 = vunpack.c.h.b16 %v97
  %v1936 = vunpack.c.l.b16 %v98
  %v1937 = vunpack.c.h.b16 %v98
  %v1938 = vunpack.c.l.b16 %v99
  %v1939 = vunpack.c.h.b16 %v99
  %v1940 = vunpack.c.l.b16 %v100
  %v1941 = vunpack.c.h.b16 %v100
  %v1942 = vunpack.c.l.b16 %v101
  %v1943 = vunpack.c.h.b16 %v101
  %v1944 = vunpack.c.l.b16 %v102
  %v1945 = vunpack.c.h.b16 %v102
  %v1946 = vunpack.c.l.b16 %v103
  %v1947 = vunpack.c.h.b16 %v103
  %v1948 = vunpack.c.l.b16 %v104
  %v1949 = vunpack.c.h.b16 %v104
  %v1950 = vunpack.c.l.b16 %v105
  %v1951 = vunpack.c.h.b16 %v105
  %v1952 = vunpack.c.l.b16 %v106
  %v1953 = vunpack.c.h.b16 %v106
  %v1954 = vunpack.c.l.b16 %v107
  %v1955 = vunpack.c.h.b16 %v107
  %v1956 = vunpack.c.l.b16 %v108
  %v1957 = vunpack.c.h.b16 %v108
  %v1958 = vunpack.c.l.b16 %v109
  %v1959 = vunpack.c.h.b16 %v109
  %v1960 = vunpack.c.l.b16 %v110
  %v1961 = vunpack.c.h.b16 %v110
  %v1962 = vunpack.c.l.b16 %v111
  %v1963 = vunpack.c.h.b16 %v111
  %v1964 = vunpack.c.l.b16 %v112
  %v1965 = vunpack.c.h.b16 %v112
  %v1966 = vunpack.c.l.b16 %v113
  %v1967 = vunpack.c.h.b16 %v113
  %v1968 = vunpack.c.l.b16 %v114
  %v1969 = vunpack.c.h.b16 %v114
  %v1970 = vunpack.c.l.b16 %v115
  %v1971 = vunpack.c.h.b16 %v115
  %v1972 = vunpack.c.l.b16 %v116
  %v1973 = vunpack.c.h.b16 %v116
  %v1974 = vunpack.c.l.b16 %v117
  %v1975 = vunpack.c.h.b16 %v117
  %v1976 = vunpack.c.l.b16 %v118
  %v1977 = vunpack.c.h.b16 %v118
  %v1978 = vunpack.c.l.b16 %v119
  %v1979 = vunpack.c.h.b16 %v119
  %v1980 = vunpack.c.l.b16 %v120
  %v1981 = vunpack.c.h.b16 %v120
  %v1982 = vunpack.c.l.b16 %v121
  %v1983 = vunpack.c.h.b16 %v121
  %v1984 = vunpack.c.l.b16 %v122
  %v1985 = vunpack.c.h.b16 %v122
  %v1986 = vunpack.c.l.b16 %v123
  %v1987 = vunpack.c.h.b16 %v123
  %v1988 = vunpack.c.l.b16 %v124
  %v1989 = vunpack.c.h.b16 %v124
  %v1990 = vunpack.c.l.b16 %v125
  %v1991 = vunpack.c.h.b16 %v125
  %v1992 = vunpack.c.l.b16 %v126
  %v1993 = vunpack.c.h.b16 %v126
  %v1994 = vunpack.c.l.b16 %v127
  %v1995 = vunpack.c.h.b16 %v127
  %v1996 = vunpack.c.l.b16 %v128
  %v1997 = vunpack.c.h.b16 %v128
  %v1998 = vunpack.c.l.b16 %v129
  %v1999 = vunpack.c.h.b16 %v129
  %v2000 = vunpack.c.l.b16 %v130
  %v2001 = vunpack.c.h.b16 %v130
  %v2002 = vunpack.c.l.b16 %v131
  %v2003 = vunpack.c.h.b16 %v131
  %v2004 = vunpack.c.l.b16 %v132
  %v2005 = vunpack.c.h.b16 %v132
  %v2006 = vunpack.c.l.b16 %v133
  %v2007 = vunpack.c.h.b16 %v133
  %v2008 = vunpack.c.l.b16 %v134
  %v2009 = vunpack.c.h.b16 %v134
  %v2010 = vunpack.c.l.b16 %v135
  %v2011 = vunpack.c.h.b16 %v135
  %v2012 = vunpack.c.l.b16 %v136
  %v2013 = vunpack.c.h.b16 %v136
  %v2014 = vunpack.c.l.b16 %v137
  %v2015 = vunpack.c.h.b16 %v137
  %v2016 = vunpack.c.l.b16 %v138
  %v2017 = vunpack.c.h.b16 %v138
  %v2018 = vunpack.c.l.b16 %v139
  %v2019 = vunpack.c.h.b16 %v139
  %v2020 = vunpack.c.l.b16 %v140
  %v2021 = vunpack.c.h.b16 %v140
  %v2022 = vunpack.c.l.b16 %v141
  %v2023 = vunpack.c.h.b16 %v141
  %v2024 = vunpack.c.l.b16 %v142
  %v2025 = vunpack.c.h.b16 %v142
  %v2026 = vunpack.c.l.b16 %v143
  %v2027 = vunpack.c.h.b16 %v143
  %v2028 = vunpack.c.l.b16 %v144
  %v2029 = vunpack.c.h.b16 %v144
  %v2030 = vunpack.c.l.b16 %v145
  %v2031 = vunpack.c.h.b16 %v145
  %v2032 = vunpack.c.l.b16 %v146
  %v2033 = vunpack.c.h.b16 %v146
  %v2034 = vunpack.c.l.b16 %v147
  %v2035 = vunpack.c.h.b16 %v147
  %v2036 = vunpack.c.l.b16 %v148
  %v2037 = vunpack.c.h.b16 %v148
  %v2038 = vunpack.c.l.b16 %v149
  %v2039 = vunpack.c.h.b16 %v149
  %v2040 = vunpack.c.l.b16 %v150
  %v2041 = vunpack.c.h.b16 %v150
  %v2042 = vunpack.c.l.b16 %v151
  %v2043 = vunpack.c.h.b16 %v151
  %v2044 = vunpack.c.l.b16 %v152
  %v2045 = vunpack.c.h.b16 %v152
  %v2046 = vunpack.c.l.b16 %v153
  %v2047 = vunpack.c.h.b16 %v153
  %v2048 = vunpack.c.l.b16 %v154
  %v2049 = vunpack.c.h.b16 %v154
  %v2050 = vunpack.c.l.b16 %v155
  %v2051 = vunpack.c.h.b16 %v155
  %v2052 = vunpack.c.l.b16 %v156
  %v2053 = vunpack.c.h.b16 %v156
  %v2054 = vunpack.c.l.b16 %v157
  %v2055 = vunpack.c.h.b16 %v157
  %v2056 = vunpack.c.l.b16 %v158
  %v2057 = vunpack.c.h.b16 %v158
  %v2058 = vunpack.c.l.b16 %v159
  %v2059 = vunpack.c.h.b16 %v159
  %v2060 = vunpack.c.l.b16 %v160
  %v2061 = vunpack.c.h.b16 %v160
  %v2062 = vunpack.c.l.b16 %v161
  %v2063 = vunpack.c.h.b16 %v161
  %v2064 = vunpack.c.l.b16 %v162
  %v2065 = vunpack.c.h.b16 %v162
  %v2066 = vunpack.c.l.b16 %v163
  %v2067 = vunpack.c.h.b16 %v163
  %v2068 = vunpack.c.l.b16 %v164
  %v2069 = vunpack.c.h.b16 %v164
  %v2070 = vunpack.c.l.b16 %v165
  %v2071 = vunpack.c.h.b16 %v165
  %v2072 = vunpack.c.l.b16 %v166
  %v2073 = vunpack.c.h.b16 %v166
  %v2074 = vunpack.c.l.b16 %v167
  %v2075 = vunpack.c.h.b16 %v167
  %v2076 = vunpack.c.l.b16 %v168
  %v2077 = vunpack.c.h.b16 %v168
  %v2078 = vunpack.c.l.b16 %v169
  %v2079 = vunpack.c.h.b16 %v169
  %v2080 = vunpack.c.l.b16 %v170
  %v2081 = vunpack.c.h.b16 %v170
  %v2082 = vunpack.c.l.b16 %v171
  %v2083 = vunpack.c.h.b16 %v171
  %v2084 = vunpack.c.l.b16 %v172
  %v2085 = vunpack.c.h.b16 %v172
  %v2086 = vunpack.c.l.b16 %v173
  %v2087 = vunpack.c.h.b16 %v173
  %v2088 = vunpack.c.l.b16 %v174
  %v2089 = vunpack.c.h.b16 %v174
  %v2090 = vunpack.c.l.b16 %v175
  %v2091 = vunpack.c.h.b16 %v175
  %v2092 = vunpack.c.l.b16 %v176
  %v2093 = vunpack.c.h.b16 %v176
  %v2094 = vunpack.c.l.b16 %v177
  %v2095 = vunpack.c.h.b16 %v177
  %v2096 = vunpack.c.l.b16 %v178
  %v2097 = vunpack.c.h.b16 %v178
  %v2098 = vunpack.c.l.b16 %v179
  %v2099 = vunpack.c.h.b16 %v179
  %v2100 = vunpack.c.l.b16 %v180
  %v2101 = vunpack.c.h.b16 %v180
  %v2102 = vunpack.c.l.b16 %v181
  %v2103 = vunpack.c.h.b16 %v181
  %v2104 = vunpack.c.l.b16 %v182
  %v2105 = vunpack.c.h.b16 %v182
  %v2106 = vunpack.c.l.b16 %v183
  %v2107 = vunpack.c.h.b16 %v183
  %v2108 = vunpack.c.l.b16 %v184
  %v2109 = vunpack.c.h.b16 %v184
  %v2110 = vunpack.c.l.b16 %v185
  %v2111 = vunpack.c.h.b16 %v185
  %v2112 = vunpack.c.l.b16 %v186
  %v2113 = vunpack.c.h.b16 %v186
  %v2114 = vunpack.c.l.b16 %v187
  %v2115 = vunpack.c.h.b16 %v187
  %v2116 = vunpack.c.l.b16 %v188
  %v2117 = vunpack.c.h.b16 %v188
  %v2118 = vunpack.c.l.b16 %v189
  %v2119 = vunpack.c.h.b16 %v189
  %v2120 = vunpack.c.l.b16 %v190
  %v2121 = vunpack.c.h.b16 %v190
  %v2122 = vunpack.c.l.b16 %v191
  %v2123 = vunpack.c.h.b16 %v191
  %v2124 = vunpack.c.l.b16 %v192
  %v2125 = vunpack.c.h.b16 %v192
  %v2126 = vunpack.c.l.b16 %v193
  %v2127 = vunpack.c.h.b16 %v193
  %v2128 = vunpack.c.l.b16 %v194
  %v2129 = vunpack.c.h.b16 %v194
  %v2130 = vunpack.c.l.b16 %v195
  %v2131 = vunpack.c.h.b16 %v195
  %v2132 = vunpack.c.l.b16 %v196
  %v2133 = vunpack.c.h.b16 %v196
  %v2134 = vunpack.c.l.b16 %v197
  %v2135 = vunpack.c.h.b16 %v197
  %v2136 = vunpack.c.l.b16 %v198
  %v2137 = vunpack.c.h.b16 %v198
  %v2138 = vunpack.c.l.b16 %v199
  %v2139 = vunpack.c.h.b16 %v199
  %v2140 = vunpack.c.l.b16 %v200
  %v2141 = vunpack.c.h.b16 %v200
  %v2142 = vunpack.c.l.b16 %v201
  %v2143 = vunpack.c.h.b16 %v201
  %v2144 = vunpack.c.l.b16 %v202
  %v2145 = vunpack.c.h.b16 %v202
  %v2146 = vunpack.c.l.b16 %v203
  %v2147 = vunpack.c.h.b16 %v203
  %v2148 = vunpack.c.l.b16 %v204
  %v2149 = vunpack.c.h.b16 %v204
  %v2150 = vunpack.c.l.b16 %v205
  %v2151 = vunpack.c.h.b16 %v205
  %v2152 = vunpack.c.l.b16 %v206
  %v2153 = vunpack.c.h.b16 %v206
  %v2154 = vunpack.c.l.b16 %v207
  %v2155 = vunpack.c.h.b16 %v207
  %v2156 = vunpack.c.l.b16 %v208
  %v2157 = vunpack.c.h.b16 %v208
  %v2158 = vunpack.c.l.b16 %v209
  %v2159 = vunpack.c.h.b16 %v209
  %v2160 = vunpack.c.l.b16 %v210
  %v2161 = vunpack.c.h.b16 %v210
  %v2162 = vunpack.c.l.b16 %v211
  %v2163 = vunpack.c.h.b16 %v211
  %v2164 = vunpack.c.l.b16 %v212
  %v2165 = vunpack.c.h.b16 %v212
  %v2166 = vunpack.c.l.b16 %v213
  %v2167 = vunpack.c.h.b16 %v213
  %v2168 = vunpack.c.l.b16 %v214
  %v2169 = vunpack.c.h.b16 %v214
  %v2170 = vunpack.c.l.b16 %v215
  %v2171 = vunpack.c.h.b16 %v215
  %v2172 = vunpack.c.l.b16 %v216
  %v2173 = vunpack.c.h.b16 %v216
  %v2174 = vunpack.c.l.b16 %v217
  %v2175 = vunpack.c.h.b16 %v217
  %v2176 = vunpack.c.l.b16 %v218
  %v2177 = vunpack.c.h.b16 %v218
  %v2178 = vunpack.c.l.b16 %v219
  %v2179 = vunpack.c.h.b16 %v219
  %v2180 = vunpack.c.l.b16 %v220
  %v2181 = vunpack.c.h.b16 %v220
  %v2182 = vunpack.c.l.b16 %v221
  %v2183 = vunpack.c.h.b16 %v221
  %v2184 = vunpack.c.l.b16 %v222
  %v2185 = vunpack.c.h.b16 %v222
  %v2186 = vunpack.c.l.b16 %v223
  %v2187 = vunpack.c.h.b16 %v223
  %v2188 = vunpack.c.l.b16 %v224
  %v2189 = vunpack.c.h.b16 %v224
  %v2190 = vunpack.c.l.b16 %v225
  %v2191 = vunpack.c.h.b16 %v225
  %v2192 = vunpack.c.l.b16 %v226
  %v2193 = vunpack.c.h.b16 %v226
  %v2194 = vunpack.c.l.b16 %v227
  %v2195 = vunpack.c.h.b16 %v227
  %v2196 = vunpack.c.l.b16 %v228
  %v2197 = vunpack.c.h.b16 %v228
  %v2198 = vunpack.c.l.b16 %v229
  %v2199 = vunpack.c.h.b16 %v229
  %v2200 = vunpack.c.l.b16 %v230
  %v2201 = vunpack.c.h.b16 %v230
  %v2202 = vunpack.c.l.b16 %v231
  %v2203 = vunpack.c.h.b16 %v231
  %v2204 = vunpack.c.l.b16 %v232
  %v2205 = vunpack.c.h.b16 %v232
  %v2206 = vunpack.c.l.b16 %v233
  %v2207 = vunpack.c.h.b16 %v233
  %v2208 = vunpack.c.l.b16 %v234
  %v2209 = vunpack.c.h.b16 %v234
  %v2210 = vunpack.c.l.b16 %v235
  %v2211 = vunpack.c.h.b16 %v235
  %v2212 = vunpack.c.l.b16 %v236
  %v2213 = vunpack.c.h.b16 %v236
  %v2214 = vunpack.c.l.b16 %v237
  %v2215 = vunpack.c.h.b16 %v237
  %v2216 = vunpack.c.l.b16 %v238
  %v2217 = vunpack.c.h.b16 %v238
  %v2218 = vunpack.c.l.b16 %v239
  %v2219 = vunpack.c.h.b16 %v239
  %v2220 = vunpack.c.l.b16 %v240
  %v2221 = vunpack.c.h.b16 %v240
  %v2222 = vunpack.c.l.b16 %v241
  %v2223 = vunpack.c.h.b16 %v241
  %v2224 = vunpack.c.l.b16 %v242
  %v2225 = vunpack.c.h.b16 %v242
  %v2226 = vunpack.c.l.b16 %v243
  %v2227 = vunpack.c.h.b16 %v243
  %v2228 = vunpack.c.l.b16 %v244
  %v2229 = vunpack.c.h.b16 %v244
  %v2230 = vunpack.c.l.b16 %v245
  %v2231 = vunpack.c.h.b16 %v245
  %v2232 = vunpack.c.l.b16 %v246
  %v2233 = vunpack.c.h.b16 %v246
  %v2234 = vunpack.c.l.b16 %v247
  %v2235 = vunpack.c.h.b16 %v247
  %v2236 = vunpack.c.l.b16 %v248
  %v2237 = vunpack.c.h.b16 %v248
  %v2238 = vunpack.c.l.b16 %v249
  %v2239 = vunpack.c.h.b16 %v249
  %v2240 = vunpack.c.l.b16 %v250
  %v2241 = vunpack.c.h.b16 %v250
  %v2242 = vunpack.c.l.b16 %v251
  %v2243 = vunpack.c.h.b16 %v251
  %v2244 = vunpack.c.l.b16 %v252
  %v2245 = vunpack.c.h.b16 %v252
  %v2246 = vunpack.c.l.b16 %v253
  %v2247 = vunpack.c.h.b16 %v253
  %v2248 = vunpack.c.l.b16 %v254
  %v2249 = vunpack.c.h.b16 %v254
  %v2250 = vunpack.c.l.b16 %v255
  %v2251 = vunpack.c.h.b16 %v255
  %v2252 = vunpack.c.l.b16 %v256
  %v2253 = vunpack.c.h.b16 %v256
  %v2254 = vunpack.c.l.b16 %v257
  %v2255 = vunpack.c.h.b16 %v257
  %v2256 = vunpack.c.l.b16 %v258
  %v2257 = vunpack.c.h.b16 %v258
  %v2258 = vunpack.c.l.b16 %v259
  %v2259 = vunpack.c.h.b16 %v259
  %v2260 = vunpack.c.l.b16 %v260
  %v2261 = vunpack.c.h.b16 %v260
  %v2262 = vunpack.c.l.b16 %v261
  %v2263 = vunpack.c.h.b16 %v261
  %v2264 = vunpack.c.l.b16 %v262
  %v2265 = vunpack.c.h.b16 %v262
  %v2266 = vunpack.c.l.b16 %v263
  %v2267 = vunpack.c.h.b16 %v263
  %v2268 = vunpack.c.l.b16 %v264
  %v2269 = vunpack.c.h.b16 %v264
  %v2270 = vunpack.c.l.b16 %v265
  %v2271 = vunpack.c.h.b16 %v265
  %v2272 = vunpack.c.l.b16 %v266
  %v2273 = vunpack.c.h.b16 %v266
  %v2274 = vunpack.c.l.b16 %v267
  %v2275 = vunpack.c.h.b16 %v267
  %v2276 = vunpack.c.l.b16 %v268
  %v2277 = vunpack.c.h.b16 %v268
  %v2278 = vunpack.c.l.b16 %v269
  %v2279 = vunpack.c.h.b16 %v269
  %v2280 = vunpack.c.l.b16 %v270
  %v2281 = vunpack.c.h.b16 %v270
  %v2282 = vunpack.c.l.b16 %v271
  %v2283 = vunpack.c.h.b16 %v271
  %v2284 = vunpack.c.l.b16 %v272
  %v2285 = vunpack.c.h.b16 %v272
  %v2286 = vunpack.c.l.b16 %v273
  %v2287 = vunpack.c.h.b16 %v273
  %v2288 = vunpack.c.l.b16 %v274
  %v2289 = vunpack.c.h.b16 %v274
  %v2290 = vunpack.c.l.b16 %v275
  %v2291 = vunpack.c.h.b16 %v275
  %v2292 = vunpack.c.l.b16 %v276
  %v2293 = vunpack.c.h.b16 %v276
  %v2294 = vunpack.c.l.b16 %v277
  %v2295 = vunpack.c.h.b16 %v277
  %v2296 = vunpack.c.l.b16 %v278
  %v2297 = vunpack.c.h.b16 %v278
  %v2298 = vunpack.c.l.b16 %v279
  %v2299 = vunpack.c.h.b16 %v279
  %v2300 = vunpack.c.l.b16 %v280
  %v2301 = vunpack.c.h.b16 %v280
  %v2302 = vunpack.c.l.b16 %v281
  %v2303 = vunpack.c.h.b16 %v281
  %v2304 = vunpack.c.l.b16 %v282
  %v2305 = vunpack.c.h.b16 %v282
  %v2306 = vunpack.c.l.b16 %v283
  %v2307 = vunpack.c.h.b16 %v283
  %v2308 = vunpack.c.l.b16 %v284
  %v2309 = vunpack.c.h.b16 %v284
  %v2310 = vunpack.c.l.b16 %v285
  %v2311 = vunpack.c.h.b16 %v285
  %v2312 = vunpack.c.l.b16 %v286
  %v2313 = vunpack.c.h.b16 %v286
  %v2314 = vunpack.c.l.b16 %v287
  %v2315 = vunpack.c.h.b16 %v287
  %v2316 = vunpack.c.l.b16 %v288
  %v2317 = vunpack.c.h.b16 %v288
  %v2318 = vunpack.c.l.b16 %v289
  %v2319 = vunpack.c.h.b16 %v289
  %v2320 = vunpack.c.l.b16 %v290
  %v2321 = vunpack.c.h.b16 %v290
  %v2322 = vunpack.c.l.b16 %v291
  %v2323 = vunpack.c.h.b16 %v291
  %v2324 = vunpack.c.l.b16 %v292
  %v2325 = vunpack.c.h.b16 %v292
  %v2326 = vunpack.c.l.b16 %v293
  %v2327 = vunpack.c.h.b16 %v293
  %v2328 = vunpack.c.l.b16 %v294
  %v2329 = vunpack.c.h.b16 %v294
  %v2330 = vunpack.c.l.b16 %v295
  %v2331 = vunpack.c.h.b16 %v295
  %v2332 = vunpack.c.l.b16 %v296
  %v2333 = vunpack.c.h.b16 %v296
  %v2334 = vunpack.c.l.b16 %v297
  %v2335 = vunpack.c.h.b16 %v297
  %v2336 = vunpack.c.l.b16 %v298
  %v2337 = vunpack.c.h.b16 %v298
  %v2338 = vunpack.c.l.b16 %v299
  %v2339 = vunpack.c.h.b16 %v299
  %v2340 = vunpack.c.l.b16 %v300
  %v2341 = vunpack.c.h.b16 %v300
  %v2342 = vunpack.c.l.b16 %v301
  %v2343 = vunpack.c.h.b16 %v301
  %v2344 = vunpack.c.l.b16 %v302
  %v2345 = vunpack.c.h.b16 %v302
  %v2346 = vunpack.c.l.b16 %v303
  %v2347 = vunpack.c.h.b16 %v303
  %v2348 = vunpack.c.l.b16 %v304
  %v2349 = vunpack.c.h.b16 %v304
  %v2350 = vunpack.c.l.b16 %v305
  %v2351 = vunpack.c.h.b16 %v305
  %v2352 = vunpack.c.l.b16 %v306
  %v2353 = vunpack.c.h.b16 %v306
  %v2354 = vunpack.c.l.b16 %v307
  %v2355 = vunpack.c.h.b16 %v307
  %v2356 = vunpack.c.l.b16 %v308
  %v2357 = vunpack.c.h.b16 %v308
  %v2358 = vunpack.c.l.b16 %v309
  %v2359 = vunpack.c.h.b16 %v309
  %v2360 = vunpack.c.l.b16 %v310
  %v2361 = vunpack.c.h.b16 %v310
  %v2362 = vunpack.c.l.b16 %v311
  %v2363 = vunpack.c.h.b16 %v311
  %v2364 = vunpack.c.l.b16 %v312
  %v2365 = vunpack.c.h.b16 %v312
  %v2366 = vunpack.c.l.b16 %v313
  %v2367 = vunpack.c.h.b16 %v313
  %v2368 = vunpack.c.l.b16 %v314
  %v2369 = vunpack.c.h.b16 %v314
  %v2370 = vunpack.c.l.b16 %v315
  %v2371 = vunpack.c.h.b16 %v315
  %v2372 = vunpack.c.l.b16 %v316
  %v2373 = vunpack.c.h.b16 %v316
  %v2374 = vunpack.c.l.b16 %v317
  %v2375 = vunpack.c.h.b16 %v317
  %v2376 = vunpack.c.l.b16 %v318
  %v2377 = vunpack.c.h.b16 %v318
  %v2378 = vunpack.c.l.b16 %v319
  %v2379 = vunpack.c.h.b16 %v319
  %v2380 = vunpack.c.l.b16 %v320
  %v2381 = vunpack.c.h.b16 %v320
  %v2382 = vunpack.c.l.b16 %v321
  %v2383 = vunpack.c.h.b16 %v321
  %v2384 = vunpack.c.l.b16 %v322
  %v2385 = vunpack.c.h.b16 %v322
  %v2386 = vunpack.c.l.b16 %v323
  %v2387 = vunpack.c.h.b16 %v323
  %v2388 = vunpack.c.l.b16 %v324
  %v2389 = vunpack.c.h.b16 %v324
  %v2390 = vunpack.c.l.b16 %v325
  %v2391 = vunpack.c.h.b16 %v325
  %v2392 = vunpack.c.l.b16 %v326
  %v2393 = vunpack.c.h.b16 %v326
  %v2394 = vunpack.c.l.b16 %v327
  %v2395 = vunpack.c.h.b16 %v327
  %v2396 = vunpack.c.l.b16 %v328
  %v2397 = vunpack.c.h.b16 %v328
  %v2398 = vunpack.c.l.b16 %v329
  %v2399 = vunpack.c.h.b16 %v329
  %v2400 = vunpack.c.l.b16 %v330
  %v2401 = vunpack.c.h.b16 %v330
  %v2402 = vunpack.c.l.b16 %v331
  %v2403 = vunpack.c.h.b16 %v331
  %v2404 = vunpack.c.l.b16 %v332
  %v2405 = vunpack.c.h.b16 %v332
  %v2406 = vunpack.c.l.b16 %v333
  %v2407 = vunpack.c.h.b16 %v333
  %v2408 = vunpack.c.l.b16 %v334
  %v2409 = vunpack.c.h.b16 %v334
  %v2410 = vunpack.c.l.b16 %v335
  %v2411 = vunpack.c.h.b16 %v335
  %v2412 = vunpack.c.l.b16 %v336
  %v2413 = vunpack.c.h.b16 %v336
  %v2414 = vunpack.c.l.b16 %v337
  %v2415 = vunpack.c.h.b16 %v337
  %v2416 = vunpack.c.l.b16 %v338
  %v2417 = vunpack.c.h.b16 %v338
  %v2418 = vunpack.c.l.b16 %v339
  %v2419 = vunpack.c.h.b16 %v339
  %v2420 = vunpack.c.l.b16 %v340
  %v2421 = vunpack.c.h.b16 %v340
  %v2422 = vunpack.c.l.b16 %v341
  %v2423 = vunpack.c.h.b16 %v341
  %v2424 = vunpack.c.l.b16 %v342
  %v2425 = vunpack.c.h.b16 %v342
  %v2426 = vunpack.c.l.b16 %v343
  %v2427 = vunpack.c.h.b16 %v343
  %v2428 = vunpack.c.l.b16 %v344
  %v2429 = vunpack.c.h.b16 %v344
  %v2430 = vunpack.c.l.b16 %v345
  %v2431 = vunpack.c.h.b16 %v345
  %v2432 = vunpack.c.l.b16 %v346
  %v2433 = vunpack.c.h.b16 %v346
  %v2434 = vunpack.c.l.b16 %v347
  %v2435 = vunpack.c.h.b16 %v347
  %v2436 = vunpack.c.l.b16 %v348
  %v2437 = vunpack.c.h.b16 %v348
  %v2438 = vunpack.c.l.b16 %v349
  %v2439 = vunpack.c.h.b16 %v349
  %v2440 = vunpack.c.l.b16 %v350
  %v2441 = vunpack.c.h.b16 %v350
  %v2442 = vunpack.c.l.b16 %v351
  %v2443 = vunpack.c.h.b16 %v351
  %v2444 = vunpack.c.l.b16 %v352
  %v2445 = vunpack.c.h.b16 %v352
  %v2446 = vunpack.c.l.b16 %v353
  %v2447 = vunpack.c.h.b16 %v353
  %v2448 = vunpack.c.l.b16 %v354
  %v2449 = vunpack.c.h.b16 %v354
  %v2450 = vunpack.c.l.b16 %v355
  %v2451 = vunpack.c.h.b16 %v355
  %v2452 = vunpack.c.l.b16 %v356
  %v2453 = vunpack.c.h.b16 %v356
  %v2454 = vunpack.c.l.b16 %v357
  %v2455 = vunpack.c.h.b16 %v357
  %v2456 = vunpack.c.l.b16 %v358
  %v2457 = vunpack.c.h.b16 %v358
  %v2458 = vunpack.c.l.b16 %v359
  %v2459 = vunpack.c.h.b16 %v359
  %v2460 = vunpack.c.l.b16 %v360
  %v2461 = vunpack.c.h.b16 %v360
  %v2462 = vunpack.c.l.b16 %v361
  %v2463 = vunpack.c.h.b16 %v361
  %v2464 = vunpack.c.l.b16 %v362
  %v2465 = vunpack.c.h.b16 %v362
  %v2466 = vunpack.c.l.b16 %v363
  %v2467 = vunpack.c.h.b16 %v363
  %v2468 = vunpack.c.l.b16 %v364
  %v2469 = vunpack.c.h.b16 %v364
  %v2470 = vunpack.c.l.b16 %v365
  %v2471 = vunpack.c.h.b16 %v365
  %v2472 = vunpack.c.l.b16 %v366
  %v2473 = vunpack.c.h.b16 %v366
  %v2474 = vunpack.c.l.b16 %v367
  %v2475 = vunpack.c.h.b16 %v367
  %v2476 = vunpack.c.l.b16 %v368
  %v2477 = vunpack.c.h.b16 %v368
  %v2478 = vunpack.c.l.b16 %v369
  %v2479 = vunpack.c.h.b16 %v369
  %v2480 = vunpack.c.l.b16 %v370
  %v2481 = vunpack.c.h.b16 %v370
  %v2482 = vunpack.c.l.b16 %v371
  %v2483 = vunpack.c.h.b16 %v371
  %v2484 = vunpack.c.l.b16 %v372
  %v2485 = vunpack.c.h.b16 %v372
  %v2486 = vunpack.c.l.b16 %v373
  %v2487 = vunpack.c.h.b16 %v373
  %v2488 = vunpack.c.l.b16 %v374
  %v2489 = vunpack.c.h.b16 %v374
  %v2490 = vunpack.c.l.b16 %v375
  %v2491 = vunpack.c.h.b16 %v375
  %v2492 = vunpack.c.l.b16 %v376
  %v2493 = vunpack.c.h.b16 %v376
  %v2494 = vunpack.c.l.b16 %v377
  %v2495 = vunpack.c.h.b16 %v377
  %v2496 = vunpack.c.l.b16 %v378
  %v2497 = vunpack.c.h.b16 %v378
  %v2498 = vunpack.c.l.b16 %v379
  %v2499 = vunpack.c.h.b16 %v379
  %v2500 = vunpack.c.l.b16 %v380
  %v2501 = vunpack.c.h.b16 %v380
  %v2502 = vunpack.c.l.b16 %v381
  %v2503 = vunpack.c.h.b16 %v381
  %v2504 = vunpack.c.l.b16 %v382
  %v2505 = vunpack.c.h.b16 %v382
  %v2506 = vunpack.c.l.b16 %v383
  %v2507 = vunpack.c.h.b16 %v383
  %v2508 = vunpack.c.l.b16 %v384
  %v2509 = vunpack.c.h.b16 %v384
  %v2510 = vunpack.c.l.b16 %v385
  %v2511 = vunpack.c.h.b16 %v385
  %v2512 = vunpack.c.l.b16 %v386
  %v2513 = vunpack.c.h.b16 %v386
  %v2514 = vunpack.c.l.b16 %v387
  %v2515 = vunpack.c.h.b16 %v387
  %v2516 = vunpack.c.l.b16 %v388
  %v2517 = vunpack.c.h.b16 %v388
  %v2518 = vunpack.c.l.b16 %v389
  %v2519 = vunpack.c.h.b16 %v389
  %v2520 = vunpack.c.l.b16 %v390
  %v2521 = vunpack.c.h.b16 %v390
  %v2522 = vunpack.c.l.b16 %v391
  %v2523 = vunpack.c.h.b16 %v391
  %v2524 = vunpack.c.l.b16 %v392
  %v2525 = vunpack.c.h.b16 %v392
  %v2526 = vunpack.c.l.b16 %v393
  %v2527 = vunpack.c.h.b16 %v393
  %v2528 = vunpack.c.l.b16 %v394
  %v2529 = vunpack.c.h.b16 %v394
  %v2530 = vunpack.c.l.b16 %v395
  %v2531 = vunpack.c.h.b16 %v395
  %v2532 = vunpack.c.l.b16 %v396
  %v2533 = vunpack.c.h.b16 %v396
  %v2534 = vunpack.c.l.b16 %v397
  %v2535 = vunpack.c.h.b16 %v397
  %v2536 = vunpack.c.l.b16 %v398
  %v2537 = vunpack.c.h.b16 %v398
  %v2538 = vunpack.c.l.b16 %v399
  %v2539 = vunpack.c.h.b16 %v399
  %v2540 = vunpack.c.l.b16 %v400
  %v2541 = vunpack.c.h.b16 %v400
  %v2542 = vunpack.c.l.b16 %v401
  %v2543 = vunpack.c.h.b16 %v401
  %v2544 = vunpack.c.l.b16 %v402
  %v2545 = vunpack.c.h.b16 %v402
  %v2546 = vunpack.c.l.b16 %v403
  %v2547 = vunpack.c.h.b16 %v403
  %v2548 = vunpack.c.l.b16 %v404
  %v2549 = vunpack.c.h.b16 %v404
  %v2550 = vunpack.c.l.b16 %v405
  %v2551 = vunpack.c.h.b16 %v405
  %v2552 = vunpack.c.l.b16 %v406
  %v2553 = vunpack.c.h.b16 %v406
  %v2554 = vunpack.c.l.b16 %v407
  %v2555 = vunpack.c.h.b16 %v407
  %v2556 = vunpack.c.l.b16 %v408
  %v2557 = vunpack.c.h.b16 %v408
  %v2558 = vunpack.c.l.b16 %v409
  %v2559 = vunpack.c.h.b16 %v409
  %v2560 = vunpack.c.l.b16 %v410
  %v2561 = vunpack.c.h.b16 %v410
  %v2562 = vunpack.c.l.b16 %v411
  %v2563 = vunpack.c.h.b16 %v411
  %v2564 = vunpack.c.l.b16 %v412
  %v2565 = vunpack.c.h.b16 %v412
  %v2566 = vunpack.c.l.b16 %v413
  %v2567 = vunpack.c.h.b16 %v413
  %v2568 = vunpack.c.l.b16 %v414
  %v2569 = vunpack.c.h.b16 %v414
  %v2570 = vunpack.c.l.b16 %v415
  %v2571 = vunpack.c.h.b16 %v415
  %v2572 = vunpack.c.l.b16 %v416
  %v2573 = vunpack.c.h.b16 %v416
  %v2574 = vunpack.c.l.b16 %v417
  %v2575 = vunpack.c.h.b16 %v417
  %v2576 = vunpack.c.l.b16 %v418
  %v2577 = vunpack.c.h.b16 %v418
  %v2578 = vunpack.c.l.b16 %v419
  %v2579 = vunpack.c.h.b16 %v419
  %v2580 = vunpack.c.l.b16 %v420
  %v2581 = vunpack.c.h.b16 %v420
  %v2582 = vunpack.c.l.b16 %v421
  %v2583 = vunpack.c.h.b16 %v421
  %v2584 = vunpack.c.l.b16 %v422
  %v2585 = vunpack.c.h.b16 %v422
  %v2586 = vunpack.c.l.b16 %v423
  %v2587 = vunpack.c.h.b16 %v423
  %v2588 = vunpack.c.l.b16 %v424
  %v2589 = vunpack.c.h.b16 %v424
  %v2590 = vunpack.c.l.b16 %v425
  %v2591 = vunpack.c.h.b16 %v425
  %v2592 = vunpack.c.l.b16 %v426
  %v2593 = vunpack.c.h.b16 %v426
  %v2594 = vunpack.c.l.b16 %v427
  %v2595 = vunpack.c.h.b16 %v427
  %v2596 = vunpack.c.l.b16 %v428
  %v2597 = vunpack.c.h.b16 %v428
  %v2598 = vunpack.c.l.b16 %v429
  %v2599 = vunpack.c.h.b16 %v429
  %v2600 = vunpack.c.l.b16 %v430
  %v2601 = vunpack.c.h.b16 %v430
  %v2602 = vunpack.c.l.b16 %v431
  %v2603 = vunpack.c.h.b16 %v431
  %v2604 = vunpack.c.l.b16 %v432
  %v2605 = vunpack.c.h.b16 %v432
  %v2606 = vunpack.c.l.b16 %v433
  %v2607 = vunpack.c.h.b16 %v433
  %v2608 = vunpack.c.l.b16 %v434
  %v2609 = vunpack.c.h.b16 %v434
  %v2610 = vunpack.c.l.b16 %v435
  %v2611 = vunpack.c.h.b16 %v435
  %v2612 = vunpack.c.l.b16 %v436
  %v2613 = vunpack.c.h.b16 %v436
  %v2614 = vunpack.c.l.b16 %v437
  %v2615 = vunpack.c.h.b16 %v437
  %v2616 = vunpack.c.l.b16 %v438
  %v2617 = vunpack.c.h.b16 %v438
  %v2618 = vunpack.c.l.b16 %v439
  %v2619 = vunpack.c.h.b16 %v439
  %v2620 = vunpack.c.l.b16 %v440
  %v2621 = vunpack.c.h.b16 %v440
  %v2622 = vunpack.c.l.b16 %v441
  %v2623 = vunpack.c.h.b16 %v441
  %v2624 = vunpack.c.l.b16 %v442
  %v2625 = vunpack.c.h.b16 %v442
  %v2626 = vunpack.c.l.b16 %v443
  %v2627 = vunpack.c.h.b16 %v443
  %v2628 = vunpack.c.l.b16 %v444
  %v2629 = vunpack.c.h.b16 %v444
  %v2630 = vunpack.c.l.b16 %v445
  %v2631 = vunpack.c.h.b16 %v445
  %v2632 = vunpack.c.l.b16 %v446
  %v2633 = vunpack.c.h.b16 %v446
  %v2634 = vunpack.c.l.b16 %v447
  %v2635 = vunpack.c.h.b16 %v447
  %v2636 = vunpack.c.l.b16 %v448
  %v2637 = vunpack.c.h.b16 %v448
  %v2638 = vunpack.c.l.b16 %v449
  %v2639 = vunpack.c.h.b16 %v449
  %v2640 = vunpack.c.l.b16 %v450
  %v2641 = vunpack.c.h.b16 %v450
  %v2642 = vunpack.c.l.b16 %v451
  %v2643 = vunpack.c.h.b16 %v451
  %v2644 = vunpack.c.l.b16 %v452
  %v2645 = vunpack.c.h.b16 %v452
  %v2646 = vunpack.c.l.b16 %v453
  %v2647 = vunpack.c.h.b16 %v453
  %v2648 = vunpack.c.l.b16 %v454
  %v2649 = vunpack.c.h.b16 %v454
  %v2650 = vunpack.c.l.b16 %v455
  %v2651 = vunpack.c.h.b16 %v455
  %v2652 = vunpack.c.l.b16 %v456
  %v2653 = vunpack.c.h.b16 %v456
  %v2654 = vunpack.c.l.b16 %v457
  %v2655 = vunpack.c.h.b16 %v457
  %v2656 = vunpack.c.l.b16 %v458
  %v2657 = vunpack.c.h.b16 %v458
  %v2658 = vunpack.c.l.b16 %v459
  %v2659 = vunpack.c.h.b16 %v459
  %v2660 = vunpack.c.l.b16 %v460
  %v2661 = vunpack.c.h.b16 %v460
  %v2662 = vunpack.c.l.b16 %v461
  %v2663 = vunpack.c.h.b16 %v461
  %v2664 = vunpack.c.l.b16 %v462
  %v2665 = vunpack.c.h.b16 %v462
  %v2666 = vunpack.c.l.b16 %v463
  %v2667 = vunpack.c.h.b16 %v463
  %v2668 = vunpack.c.l.b16 %v464
  %v2669 = vunpack.c.h.b16 %v464
  %v2670 = vunpack.c.l.b16 %v465
  %v2671 = vunpack.c.h.b16 %v465
  %v2672 = vunpack.c.l.b16 %v466
  %v2673 = vunpack.c.h.b16 %v466
  %v2674 = vunpack.c.l.b16 %v467
  %v2675 = vunpack.c.h.b16 %v467
  %v2676 = vunpack.c.l.b16 %v468
  %v2677 = vunpack.c.h.b16 %v468
  %v2678 = vunpack.c.l.b16 %v469
  %v2679 = vunpack.c.h.b16 %v469
  %v2680 = vunpack.c.l.b16 %v470
  %v2681 = vunpack.c.h.b16 %v470
  %v2682 = vunpack.c.l.b16 %v471
  %v2683 = vunpack.c.h.b16 %v471
  %v2684 = vunpack.c.l.b16 %v472
  %v2685 = vunpack.c.h.b16 %v472
  %v2686 = vunpack.c.l.b16 %v473
  %v2687 = vunpack.c.h.b16 %v473
  %v2688 = vunpack.c.l.b16 %v474
  %v2689 = vunpack.c.h.b16 %v474
  %v2690 = vunpack.c.l.b16 %v475
  %v2691 = vunpack.c.h.b16 %v475
  %v2692 = vunpack.c.l.b16 %v476
  %v2693 = vunpack.c.h.b16 %v476
  %v2694 = vunpack.c.l.b16 %v477
  %v2695 = vunpack.c.h.b16 %v477
  %v2696 = vunpack.c.l.b16 %v478
  %v2697 = vunpack.c.h.b16 %v478
  %v2698 = vunpack.c.l.b16 %v479
  %v2699 = vunpack.c.h.b16 %v479
  %v2700 = vunpack.c.l.b16 %v480
  %v2701 = vunpack.c.h.b16 %v480
  %v2702 = vunpack.c.l.b16 %v481
  %v2703 = vunpack.c.h.b16 %v481
  %v2704 = vunpack.c.l.b16 %v482
  %v2705 = vunpack.c.h.b16 %v482
  %v2706 = vunpack.c.l.b16 %v483
  %v2707 = vunpack.c.h.b16 %v483
  %v2708 = vunpack.c.l.b16 %v484
  %v2709 = vunpack.c.h.b16 %v484
  %v2710 = vunpack.c.l.b16 %v485
  %v2711 = vunpack.c.h.b16 %v485
  %v2712 = vunpack.c.l.b16 %v486
  %v2713 = vunpack.c.h.b16 %v486
  %v2714 = vunpack.c.l.b16 %v487
  %v2715 = vunpack.c.h.b16 %v487
  %v2716 = vunpack.c.l.b16 %v488
  %v2717 = vunpack.c.h.b16 %v488
  %v2718 = vunpack.c.l.b16 %v489
  %v2719 = vunpack.c.h.b16 %v489
  %v2720 = vunpack.c.l.b16 %v490
  %v2721 = vunpack.c.h.b16 %v490
  %v2722 = vunpack.c.l.b16 %v491
  %v2723 = vunpack.c.h.b16 %v491
  %v2724 = vunpack.c.l.b16 %v492
  %v2725 = vunpack.c.h.b16 %v492
  %v2726 = vunpack.c.l.b16 %v493
  %v2727 = vunpack.c.h.b16 %v493
  %v2728 = vunpack.c.l.b16 %v494
  %v2729 = vunpack.c.h.b16 %v494
  %v2730 = vunpack.c.l.b16 %v495
  %v2731 = vunpack.c.h.b16 %v495
  %v2732 = vunpack.c.l.b16 %v496
  %v2733 = vunpack.c.h.b16 %v496
  %v2734 = vunpack.c.l.b16 %v497
  %v2735 = vunpack.c.h.b16 %v497
  %v2736 = vunpack.c.l.b16 %v498
  %v2737 = vunpack.c.h.b16 %v498
  %v2738 = vunpack.c.l.b16 %v499
  %v2739 = vunpack.c.h.b16 %v499
  %v2740 = vunpack.c.l.b16 %v500
  %v2741 = vunpack.c.h.b16 %v500
  %v2742 = vunpack.c.l.b16 %v501
  %v2743 = vunpack.c.h.b16 %v501
  %v2744 = vunpack.c.l.b16 %v502
  %v2745 = vunpack.c.h.b16 %v502
  %v2746 = vunpack.c.l.b16 %v503
  %v2747 = vunpack.c.h.b16 %v503
  %v2748 = vunpack.c.l.b16 %v504
  %v2749 = vunpack.c.h.b16 %v504
  %v2750 = vunpack.c.l.b16 %v505
  %v2751 = vunpack.c.h.b16 %v505
  %v2752 = vunpack.c.l.b16 %v506
  %v2753 = vunpack.c.h.b16 %v506
  %v2754 = vunpack.c.l.b16 %v507
  %v2755 = vunpack.c.h.b16 %v507
  %v2756 = vunpack.c.l.b16 %v508
  %v2757 = vunpack.c.h.b16 %v508
  %v2758 = vunpack.c.l.b16 %v509
  %v2759 = vunpack.c.h.b16 %v509
  %v2760 = vunpack.c.l.b16 %v510
  %v2761 = vunpack.c.h.b16 %v510
  %v2762 = vunpack.c.l.b16 %v511
  %v2763 = vunpack.c.h.b16 %v511
  %v2764 = vunpack.c.l.b16 %v512
  %v2765 = vunpack.c.h.b16 %v512
  %v2766 = vunpack.c.l.b16 %v513
  %v2767 = vunpack.c.h.b16 %v513
  %v2768 = vunpack.c.l.b16 %v514
  %v2769 = vunpack.c.h.b16 %v514
  %v2770 = vunpack.c.l.b16 %v515
  %v2771 = vunpack.c.h.b16 %v515
  %v2772 = vunpack.c.l.b16 %v516
  %v2773 = vunpack.c.h.b16 %v516
  %v2774 = vunpack.c.l.b16 %v517
  %v2775 = vunpack.c.h.b16 %v517
  %v2776 = vunpack.c.l.b16 %v518
  %v2777 = vunpack.c.h.b16 %v518
  %v2778 = vunpack.c.l.b16 %v519
  %v2779 = vunpack.c.h.b16 %v519
  %v2780 = vunpack.c.l.b16 %v520
  %v2781 = vunpack.c.h.b16 %v520
  %v2782 = vunpack.c.l.b16 %v521
  %v2783 = vunpack.c.h.b16 %v521
  %v2784 = vunpack.c.l.b16 %v522
  %v2785 = vunpack.c.h.b16 %v522
  %v2786 = vunpack.c.l.b16 %v523
  %v2787 = vunpack.c.h.b16 %v523
  %v2788 = vunpack.c.l.b16 %v524
  %v2789 = vunpack.c.h.b16 %v524
  %v2790 = vunpack.c.l.b16 %v525
  %v2791 = vunpack.c.h.b16 %v525
  %v2792 = vunpack.c.l.b16 %v526
  %v2793 = vunpack.c.h.b16 %v526
  %v2794 = vunpack.c.l.b16 %v527
  %v2795 = vunpack.c.h.b16 %v527
  %v2796 = vunpack.c.l.b16 %v528
  %v2797 = vunpack.c.h.b16 %v528
  %v2798 = vunpack.c.l.b16 %v529
  %v2799 = vunpack.c.h.b16 %v529
  %v2800 = vunpack.c.l.b16 %v530
  %v2801 = vunpack.c.h.b16 %v530
  %v2802 = vunpack.c.l.b16 %v531
  %v2803 = vunpack.c.h.b16 %v531
  %v2804 = vunpack.c.l.b16 %v532
  %v2805 = vunpack.c.h.b16 %v532
  %v2806 = vunpack.c.l.b16 %v533
  %v2807 = vunpack.c.h.b16 %v533
  %v2808 = vunpack.c.l.b16 %v534
  %v2809 = vunpack.c.h.b16 %v534
  %v2810 = vunpack.c.l.b16 %v535
  %v2811 = vunpack.c.h.b16 %v535
  %v2812 = vunpack.c.l.b16 %v536
  %v2813 = vunpack.c.h.b16 %v536
  %v2814 = vunpack.c.l.b16 %v537
  %v2815 = vunpack.c.h.b16 %v537
  %v2816 = vunpack.c.l.b16 %v538
  %v2817 = vunpack.c.h.b16 %v538
  %v2818 = vunpack.c.l.b16 %v539
  %v2819 = vunpack.c.h.b16 %v539
  %v2820 = vunpack.c.l.b16 %v540
  %v2821 = vunpack.c.h.b16 %v540
  %v2822 = vunpack.c.l.b16 %v541
  %v2823 = vunpack.c.h.b16 %v541
  %v2824 = vunpack.c.l.b16 %v542
  %v2825 = vunpack.c.h.b16 %v542
  %v2826 = vunpack.c.l.b16 %v543
  %v2827 = vunpack.c.h.b16 %v543
  %v2828 = vunpack.c.l.b16 %v544
  %v2829 = vunpack.c.h.b16 %v544
  %v2830 = vunpack.c.l.b16 %v545
  %v2831 = vunpack.c.h.b16 %v545
  %v2832 = vunpack.c.l.b16 %v546
  %v2833 = vunpack.c.h.b16 %v546
  %v2834 = vunpack.c.l.b16 %v547
  %v2835 = vunpack.c.h.b16 %v547
  %v2836 = vunpack.c.l.b16 %v548
  %v2837 = vunpack.c.h.b16 %v548
  %v2838 = vunpack.c.l.b16 %v549
  %v2839 = vunpack.c.h.b16 %v549
  %v2840 = vunpack.c.l.b16 %v550
  %v2841 = vunpack.c.h.b16 %v550
  %v2842 = vunpack.c.l.b16 %v551
  %v2843 = vunpack.c.h.b16 %v551
  %v2844 = vunpack.c.l.b16 %v552
  %v2845 = vunpack.c.h.b16 %v552
  %v2846 = vunpack.c.l.b16 %v553
  %v2847 = vunpack.c.h.b16 %v553
  %v2848 = vunpack.c.l.b16 %v554
  %v2849 = vunpack.c.h.b16 %v554
  %v2850 = vunpack.c.l.b16 %v555
  %v2851 = vunpack.c.h.b16 %v555
  %v2852 = vunpack.c.l.b16 %v556
  %v2853 = vunpack.c.h.b16 %v556
  %v2854 = vunpack.c.l.b16 %v557
  %v2855 = vunpack.c.h.b16 %v557
  %v2856 = vunpack.c.l.b16 %v558
  %v2857 = vunpack.c.h.b16 %v558
  %v2858 = vunpack.c.l.b16 %v559
  %v2859 = vunpack.c.h.b16 %v559
  %v2860 = vunpack.c.l.b16 %v560
  %v2861 = vunpack.c.h.b16 %v560
  %v2862 = vunpack.c.l.b16 %v561
  %v2863 = vunpack.c.h.b16 %v561
  %v2864 = vunpack.c.l.b16 %v562
  %v2865 = vunpack.c.h.b16 %v562
  %v2866 = vunpack.c.l.b16 %v563
  %v2867 = vunpack.c.h.b16 %v563
  %v2868 = vunpack.c.l.b16 %v564
  %v2869 = vunpack.c.h.b16 %v564
  %v2870 = vunpack.c.l.b16 %v565
  %v2871 = vunpack.c.h.b16 %v565
  %v2872 = vunpack.c.l.b16 %v566
  %v2873 = vunpack.c.h.b16 %v566
  %v2874 = vunpack.c.l.b16 %v567
  %v2875 = vunpack.c.h.b16 %v567
  %v2876 = vunpack.c.l.b16 %v568
  %v2877 = vunpack.c.h.b16 %v568
  %v2878 = vunpack.c.l.b16 %v569
  %v2879 = vunpack.c.h.b16 %v569
  %v2880 = vunpack.c.l.b16 %v570
  %v2881 = vunpack.c.h.b16 %v570
  %v2882 = vunpack.c.l.b16 %v571
  %v2883 = vunpack.c.h.b16 %v571
  %v2884 = vunpack.c.l.b16 %v572
  %v2885 = vunpack.c.h.b16 %v572
  %v2886 = vunpack.c.l.b16 %v573
  %v2887 = vunpack.c.h.b16 %v573
  %v2888 = vunpack.c.l.b16 %v574
  %v2889 = vunpack.c.h.b16 %v574
  %v2890 = vunpack.c.l.b16 %v575
  %v2891 = vunpack.c.h.b16 %v575
  %v2892 = vunpack.c.l.b16 %v576
  %v2893 = vunpack.c.h.b16 %v576
  %v2894 = vunpack.c.l.b16 %v577
  %v2895 = vunpack.c.h.b16 %v577
  %v2896 = vunpack.c.l.b16 %v578
  %v2897 = vunpack.c.h.b16 %v578
  %v2898 = vunpack.c.l.b16 %v579
  %v2899 = vunpack.c.h.b16 %v579
  %v2900 = vunpack.c.l.b16 %v580
  %v2901 = vunpack.c.h.b16 %v580
  %v2902 = vunpack.c.l.b16 %v581
  %v2903 = vunpack.c.h.b16 %v581
  %v2904 = vunpack.c.l.b16 %v582
  %v2905 = vunpack.c.h.b16 %v582
  %v2906 = vunpack.c.l.b16 %v583
  %v2907 = vunpack.c.h.b16 %v583
  %v2908 = vunpack.c.l.b16 %v584
  %v2909 = vunpack.c.h.b16 %v584
  %v2910 = vunpack.c.l.b16 %v585
  %v2911 = vunpack.c.h.b16 %v585
  %v2912 = vunpack.c.l.b16 %v586
  %v2913 = vunpack.c.h.b16 %v586
  %v2914 = vunpack.c.l.b16 %v587
  %v2915 = vunpack.c.h.b16 %v587
  %v2916 = vunpack.c.l.b16 %v588
  %v2917 = vunpack.c.h.b16 %v588
  %v2918 = vunpack.c.l.b16 %v589
  %v2919 = vunpack.c.h.b16 %v589
  %v2920 = vunpack.c.l.b16 %v590
  %v2921 = vunpack.c.h.b16 %v590
  %v2922 = vunpack.c.l.b16 %v591
  %v2923 = vunpack.c.h.b16 %v591
  %v2924 = vunpack.c.l.b16 %v592
  %v2925 = vunpack.c.h.b16 %v592
  %v2926 = vunpack.c.l.b16 %v593
  %v2927 = vunpack.c.h.b16 %v593
  %v2928 = vunpack.c.l.b16 %v594
  %v2929 = vunpack.c.h.b16 %v594
  %v2930 = vunpack.c.l.b16 %v595
  %v2931 = vunpack.c.h.b16 %v595
  %v2932 = vunpack.c.l.b16 %v596
  %v2933 = vunpack.c.h.b16 %v596
  %v2934 = vunpack.c.l.b16 %v597
  %v2935 = vunpack.c.h.b16 %v597
  %v2936 = vunpack.c.l.b16 %v598
  %v2937 = vunpack.c.h.b16 %v598
  %v2938 = vunpack.c.l.b16 %v599
  %v2939 = vunpack.c.h.b16 %v599
  %v2940 = vunpack.c.l.b16 %v600
  %v2941 = vunpack.c.h.b16 %v600
  %v2942 = vunpack.c.l.b16 %v601
  %v2943 = vunpack.c.h.b16 %v601
  %v2944 = vunpack.c.l.b16 %v602
  %v2945 = vunpack.c.h.b16 %v602
  %v2946 = vunpack.c.l.b16 %v603
  %v2947 = vunpack.c.h.b16 %v603
  %v2948 = vunpack.c.l.b16 %v604
  %v2949 = vunpack.c.h.b16 %v604
  %v2950 = vunpack.c.l.b16 %v605
  %v2951 = vunpack.c.h.b16 %v605
  %v2952 = vunpack.c.l.b16 %v606
  %v2953 = vunpack.c.h.b16 %v606
  %v2954 = vunpack.c.l.b16 %v607
  %v2955 = vunpack.c.h.b16 %v607
  %v2956 = vunpack.c.l.b16 %v608
  %v2957 = vunpack.c.h.b16 %v608
  %v2958 = vunpack.c.l.b16 %v609
  %v2959 = vunpack.c.h.b16 %v609
  %v2960 = vunpack.c.l.b16 %v610
  %v2961 = vunpack.c.h.b16 %v610
  %v2962 = vunpack.c.l.b16 %v611
  %v2963 = vunpack.c.h.b16 %v611
  %v2964 = vunpack.c.l.b16 %v612
  %v2965 = vunpack.c.h.b16 %v612
  %v2966 = vunpack.c.l.b16 %v613
  %v2967 = vunpack.c.h.b16 %v613
  %v2968 = vunpack.c.l.b16 %v614
  %v2969 = vunpack.c.h.b16 %v614
  %v2970 = vunpack.c.l.b16 %v615
  %v2971 = vunpack.c.h.b16 %v615
  %v2972 = vunpack.c.l.b16 %v616
  %v2973 = vunpack.c.h.b16 %v616
  %v2974 = vunpack.c.l.b16 %v617
  %v2975 = vunpack.c.h.b16 %v617
  %v2976 = vunpack.c.l.b16 %v618
  %v2977 = vunpack.c.h.b16 %v618
  %v2978 = vunpack.c.l.b16 %v619
  %v2979 = vunpack.c.h.b16 %v619
  %v2980 = vunpack.c.l.b16 %v620
  %v2981 = vunpack.c.h.b16 %v620
  %v2982 = vunpack.c.l.b16 %v621
  %v2983 = vunpack.c.h.b16 %v621
  %v2984 = vunpack.c.l.b16 %v622
  %v2985 = vunpack.c.h.b16 %v622
  %v2986 = vunpack.c.l.b16 %v623
  %v2987 = vunpack.c.h.b16 %v623
  %v2988 = vunpack.c.l.b16 %v624
  %v2989 = vunpack.c.h.b16 %v624
  %v2990 = vunpack.c.l.b16 %v625
  %v2991 = vunpack.c.h.b16 %v625
  %v2992 = vunpack.c.l.b16 %v626
  %v2993 = vunpack.c.h.b16 %v626
  %v2994 = vunpack.c.l.b16 %v627
  %v2995 = vunpack.c.h.b16 %v627
  %v2996 = vunpack.c.l.b16 %v628
  %v2997 = vunpack.c.h.b16 %v628
  %v2998 = vunpack.c.l.b16 %v629
  %v2999 = vunpack.c.h.b16 %v629
  %v3000 = vunpack.c.l.b16 %v630
  %v3001 = vunpack.c.h.b16 %v630
  %v3002 = vunpack.c.l.b16 %v631
  %v3003 = vunpack.c.h.b16 %v631
  %v3004 = vunpack.c.l.b16 %v632
  %v3005 = vunpack.c.h.b16 %v632
  %v3006 = vunpack.c.l.b16 %v633
  %v3007 = vunpack.c.h.b16 %v633
  %v3008 = vunpack.c.l.b16 %v634
  %v3009 = vunpack.c.h.b16 %v634
  %v3010 = vunpack.c.l.b16 %v635
  %v3011 = vunpack.c.h.b16 %v635
  %v3012 = vunpack.c.l.b16 %v636
  %v3013 = vunpack.c.h.b16 %v636
  %v3014 = vunpack.c.l.b16 %v637
  %v3015 = vunpack.c.h.b16 %v637
  %v3016 = vunpack.c.l.b16 %v638
  %v3017 = vunpack.c.h.b16 %v638
  %v3018 = vunpack.c.l.b16 %v639
  %v3019 = vunpack.c.h.b16 %v639
  %v3020 = vunpack.c.l.b16 %v640
  %v3021 = vunpack.c.h.b16 %v640
  %v3022 = vunpack.c.l.b16 %v641
  %v3023 = vunpack.c.h.b16 %v641
  %v3024 = vunpack.c.l.b16 %v642
  %v3025 = vunpack.c.h.b16 %v642
  %v3026 = vunpack.c.l.b16 %v643
  %v3027 = vunpack.c.h.b16 %v643
  %v3028 = vunpack.c.l.b16 %v644
  %v3029 = vunpack.c.h.b16 %v644
  %v3030 = vunpack.c.l.b16 %v645
  %v3031 = vunpack.c.h.b16 %v645
  %v3032 = vunpack.c.l.b16 %v646
  %v3033 = vunpack.c.h.b16 %v646
  %v3034 = vunpack.c.l.b16 %v647
  %v3035 = vunpack.c.h.b16 %v647
  %v3036 = vunpack.c.l.b16 %v648
  %v3037 = vunpack.c.h.b16 %v648
  %v3038 = vunpack.c.l.b16 %v649
  %v3039 = vunpack.c.h.b16 %v649
  %v3040 = vunpack.c.l.b16 %v650
  %v3041 = vunpack.c.h.b16 %v650
  %v3042 = vunpack.c.l.b16 %v651
  %v3043 = vunpack.c.h.b16 %v651
  %v3044 = vunpack.c.l.b16 %v652
  %v3045 = vunpack.c.h.b16 %v652
  %v3046 = vunpack.c.l.b16 %v653
  %v3047 = vunpack.c.h.b16 %v653
  %v3048 = vunpack.c.l.b16 %v654
  %v3049 = vunpack.c.h.b16 %v654
  %v3050 = vunpack.c.l.b16 %v655
  %v3051 = vunpack.c.h.b16 %v655
  %v3052 = vunpack.c.l.b16 %v656
  %v3053 = vunpack.c.h.b16 %v656
  %v3054 = vunpack.c.l.b16 %v657
  %v3055 = vunpack.c.h.b16 %v657
  %v3056 = vunpack.c.l.b16 %v658
  %v3057 = vunpack.c.h.b16 %v658
  %v3058 = vunpack.c.l.b16 %v659
  %v3059 = vunpack.c.h.b16 %v659
  %v3060 = vunpack.c.l.b16 %v660
  %v3061 = vunpack.c.h.b16 %v660
  %v3062 = vunpack.c.l.b16 %v661
  %v3063 = vunpack.c.h.b16 %v661
  %v3064 = vunpack.c.l.b16 %v662
  %v3065 = vunpack.c.h.b16 %v662
  %v3066 = vunpack.c.l.b16 %v663
  %v3067 = vunpack.c.h.b16 %v663
  %v3068 = vunpack.c.l.b16 %v664
  %v3069 = vunpack.c.h.b16 %v664
  %v3070 = vunpack.c.l.b16 %v665
  %v3071 = vunpack.c.h.b16 %v665
  %v3072 = vunpack.c.l.b16 %v666
  %v3073 = vunpack.c.h.b16 %v666
  %v3074 = vunpack.c.l.b16 %v667
  %v3075 = vunpack.c.h.b16 %v667
  %v3076 = vunpack.c.l.b16 %v668
  %v3077 = vunpack.c.h.b16 %v668
  %v3078 = vunpack.c.l.b16 %v669
  %v3079 = vunpack.c.h.b16 %v669
  %v3080 = vunpack.c.l.b16 %v670
  %v3081 = vunpack.c.h.b16 %v670
  %v3082 = vunpack.c.l.b16 %v671
  %v3083 = vunpack.c.h.b16 %v671
  %v3084 = vunpack.c.l.b16 %v672
  %v3085 = vunpack.c.h.b16 %v672
  %v3086 = vunpack.c.l.b16 %v673
  %v3087 = vunpack.c.h.b16 %v673
  %v3088 = vunpack.c.l.b16 %v674
  %v3089 = vunpack.c.h.b16 %v674
  %v3090 = vunpack.c.l.b16 %v675
  %v3091 = vunpack.c.h.b16 %v675
  %v3092 = vunpack.c.l.b16 %v676
  %v3093 = vunpack.c.h.b16 %v676
  %v3094 = vunpack.c.l.b16 %v677
  %v3095 = vunpack.c.h.b16 %v677
  %v3096 = vunpack.c.l.b16 %v678
  %v3097 = vunpack.c.h.b16 %v678
  %v3098 = vunpack.c.l.b16 %v679
  %v3099 = vunpack.c.h.b16 %v679
  %v3100 = vunpack.c.l.b16 %v680
  %v3101 = vunpack.c.h.b16 %v680
  %v3102 = vunpack.c.l.b16 %v681
  %v3103 = vunpack.c.h.b16 %v681
  %v3104 = vunpack.c.l.b16 %v682
  %v3105 = vunpack.c.h.b16 %v682
  %v3106 = vunpack.c.l.b16 %v683
  %v3107 = vunpack.c.h.b16 %v683
  %v3108 = vunpack.c.l.b16 %v684
  %v3109 = vunpack.c.h.b16 %v684
  %v3110 = vunpack.c.l.b16 %v685
  %v3111 = vunpack.c.h.b16 %v685
  %v3112 = vunpack.c.l.b16 %v686
  %v3113 = vunpack.c.h.b16 %v686
  %v3114 = vunpack.c.l.b16 %v687
  %v3115 = vunpack.c.h.b16 %v687
  %v3116 = vunpack.c.l.b16 %v688
  %v3117 = vunpack.c.h.b16 %v688
  %v3118 = vunpack.c.l.b16 %v689
  %v3119 = vunpack.c.h.b16 %v689
  %v3120 = vunpack.c.l.b16 %v690
  %v3121 = vunpack.c.h.b16 %v690
  %v3122 = vunpack.c.l.b16 %v691
  %v3123 = vunpack.c.h.b16 %v691
  %v3124 = vunpack.c.l.b16 %v692
  %v3125 = vunpack.c.h.b16 %v692
  %v3126 = vunpack.c.l.b16 %v693
  %v3127 = vunpack.c.h.b16 %v693
  %v3128 = vunpack.c.l.b16 %v694
  %v3129 = vunpack.c.h.b16 %v694
  %v3130 = vunpack.c.l.b16 %v695
  %v3131 = vunpack.c.h.b16 %v695
  %v3132 = vunpack.c.l.b16 %v696
  %v3133 = vunpack.c.h.b16 %v696
  %v3134 = vunpack.c.l.b16 %v697
  %v3135 = vunpack.c.h.b16 %v697
  %v3136 = vunpack.c.l.b16 %v698
  %v3137 = vunpack.c.h.b16 %v698
  %v3138 = vunpack.c.l.b16 %v699
  %v3139 = vunpack.c.h.b16 %v699
  %v3140 = vunpack.c.l.b16 %v700
  %v3141 = vunpack.c.h.b16 %v700
  %v3142 = vunpack.c.l.b16 %v701
  %v3143 = vunpack.c.h.b16 %v701
  %v3144 = vunpack.c.l.b16 %v702
  %v3145 = vunpack.c.h.b16 %v702
  %v3146 = vunpack.c.l.b16 %v703
  %v3147 = vunpack.c.h.b16 %v703
  %v3148 = vunpack.c.l.b16 %v704
  %v3149 = vunpack.c.h.b16 %v704
  %v3150 = vunpack.c.l.b16 %v705
  %v3151 = vunpack.c.h.b16 %v705
  %v3152 = vunpack.c.l.b16 %v706
  %v3153 = vunpack.c.h.b16 %v706
  %v3154 = vunpack.c.l.b16 %v707
  %v3155 = vunpack.c.h.b16 %v707
  %v3156 = vunpack.c.l.b16 %v708
  %v3157 = vunpack.c.h.b16 %v708
  %v3158 = vunpack.c.l.b16 %v709
  %v3159 = vunpack.c.h.b16 %v709
  %v3160 = vunpack.c.l.b16 %v710
  %v3161 = vunpack.c.h.b16 %v710
  %v3162 = vunpack.c.l.b16 %v711
  %v3163 = vunpack.c.h.b16 %v711
  %v3164 = vunpack.c.l.b16 %v712
  %v3165 = vunpack.c.h.b16 %v712
  %v3166 = vunpack.c.l.b16 %v713
  %v3167 = vunpack.c.h.b16 %v713
  %v3168 = vunpack.c.l.b16 %v714
  %v3169 = vunpack.c.h.b16 %v714
  %v3170 = vunpack.c.l.b16 %v715
  %v3171 = vunpack.c.h.b16 %v715
  %v3172 = vunpack.c.l.b16 %v716
  %v3173 = vunpack.c.h.b16 %v716
  %v3174 = vunpack.c.l.b16 %v717
  %v3175 = vunpack.c.h.b16 %v717
  %v3176 = vunpack.c.l.b16 %v718
  %v3177 = vunpack.c.h.b16 %v718
  %v3178 = vunpack.c.l.b16 %v719
  %v3179 = vunpack.c.h.b16 %v719
  %v3180 = vunpack.c.l.b16 %v720
  %v3181 = vunpack.c.h.b16 %v720
  %v3182 = vunpack.c.l.b16 %v721
  %v3183 = vunpack.c.h.b16 %v721
  %v3184 = vunpack.c.l.b16 %v722
  %v3185 = vunpack.c.h.b16 %v722
  %v3186 = vunpack.c.l.b16 %v723
  %v3187 = vunpack.c.h.b16 %v723
  %v3188 = vunpack.c.l.b16 %v724
  %v3189 = vunpack.c.h.b16 %v724
  %v3190 = vunpack.c.l.b16 %v725
  %v3191 = vunpack.c.h.b16 %v725
  %v3192 = vunpack.c.l.b16 %v726
  %v3193 = vunpack.c.h.b16 %v726
  %v3194 = vunpack.c.l.b16 %v727
  %v3195 = vunpack.c.h.b16 %v727
  %v3196 = vunpack.c.l.b16 %v728
  %v3197 = vunpack.c.h.b16 %v728
  %v3198 = vunpack.c.l.b16 %v729
  %v3199 = vunpack.c.h.b16 %v729
  %v3200 = vunpack.c.l.b16 %v730
  %v3201 = vunpack.c.h.b16 %v730
  %v3202 = vunpack.c.l.b16 %v731
  %v3203 = vunpack.c.h.b16 %v731
  %v3204 = vunpack.c.l.b16 %v732
  %v3205 = vunpack.c.h.b16 %v732
  %v3206 = vunpack.c.l.b16 %v733
  %v3207 = vunpack.c.h.b16 %v733
  %v3208 = vunpack.c.l.b16 %v734
  %v3209 = vunpack.c.h.b16 %v734
  %v3210 = vunpack.c.l.b16 %v735
  %v3211 = vunpack.c.h.b16 %v735
  %v3212 = vunpack.c.l.b16 %v736
  %v3213 = vunpack.c.h.b16 %v736
  %v3214 = vunpack.c.l.b16 %v737
  %v3215 = vunpack.c.h.b16 %v737
  %v3216 = vunpack.c.l.b16 %v738
  %v3217 = vunpack.c.h.b16 %v738
  %v3218 = vunpack.c.l.b16 %v739
  %v3219 = vunpack.c.h.b16 %v739
  %v3220 = vunpack.c.l.b16 %v740
  %v3221 = vunpack.c.h.b16 %v740
  %v3222 = vunpack.c.l.b16 %v741
  %v3223 = vunpack.c.h.b16 %v741
  %v3224 = vunpack.c.l.b16 %v742
  %v3225 = vunpack.c.h.b16 %v742
  %v3226 = vunpack.c.l.b16 %v743
  %v3227 = vunpack.c.h.b16 %v743
  %v3228 = vunpack.c.l.b16 %v744
  %v3229 = vunpack.c.h.b16 %v744
  %v3230 = vunpack.c.l.b16 %v745
  %v3231 = vunpack.c.h.b16 %v745
  %v3232 = vunpack.c.l.b16 %v746
  %v3233 = vunpack.c.h.b16 %v746
  %v3234 = vunpack.c.l.b16 %v747
  %v3235 = vunpack.c.h.b16 %v747
  %v3236 = vunpack.c.l.b16 %v748
  %v3237 = vunpack.c.h.b16 %v748
  %v3238 = vunpack.c.l.b16 %v749
  %v3239 = vunpack.c.h.b16 %v749
  %v3240 = vunpack.c.l.b16 %v750
  %v3241 = vunpack.c.h.b16 %v750
  %v3242 = vunpack.c.l.b16 %v751
  %v3243 = vunpack.c.h.b16 %v751
  %v3244 = vunpack.c.l.b16 %v752
  %v3245 = vunpack.c.h.b16 %v752
  %v3246 = vunpack.c.l.b16 %v753
  %v3247 = vunpack.c.h.b16 %v753
  %v3248 = vunpack.c.l.b16 %v754
  %v3249 = vunpack.c.h.b16 %v754
  %v3250 = vunpack.c.l.b16 %v755
  %v3251 = vunpack.c.h.b16 %v755
  %v3252 = vunpack.c.l.b16 %v756
  %v3253 = vunpack.c.h.b16 %v756
  %v3254 = vunpack.c.l.b16 %v757
  %v3255 = vunpack.c.h.b16 %v757
  %v3256 = vunpack.c.l.b16 %v758
  %v3257 = vunpack.c.h.b16 %v758
  %v3258 = vunpack.c.l.b16 %v759
  %v3259 = vunpack.c.h.b16 %v759
  %v3260 = vunpack.c.l.b16 %v760
  %v3261 = vunpack.c.h.b16 %v760
  %v3262 = vunpack.c.l.b16 %v761
  %v3263 = vunpack.c.h.b16 %v761
  %v3264 = vunpack.c.l.b16 %v762
  %v3265 = vunpack.c.h.b16 %v762
  %v3266 = vunpack.c.l.b16 %v763
  %v3267 = vunpack.c.h.b16 %v763
  %v3268 = vunpack.c.l.b16 %v764
  %v3269 = vunpack.c.h.b16 %v764
  %v3270 = vunpack.c.l.b16 %v765
  %v3271 = vunpack.c.h.b16 %v765
  %v3272 = vunpack.c.l.b16 %v766
  %v3273 = vunpack.c.h.b16 %v766
  %v3274 = vunpack.c.l.b16 %v767
  %v3275 = vunpack.c.h.b16 %v767
  %v3276 = vunpack.c.l.b16 %v768
  %v3277 = vunpack.c.h.b16 %v768
  %v3278 = vunpack.c.l.b16 %v769
  %v3279 = vunpack.c.h.b16 %v769
  %v3280 = vunpack.c.l.b16 %v770
  %v3281 = vunpack.c.h.b16 %v770
  %v3282 = vunpack.c.l.b16 %v771
  %v3283 = vunpack.c.h.b16 %v771
  %v3284 = vunpack.c.l.b16 %v772
  %v3285 = vunpack.c.h.b16 %v772
  %v3286 = vunpack.c.l.b16 %v773
  %v3287 = vunpack.c.h.b16 %v773
  %v3288 = vunpack.c.l.b16 %v774
  %v3289 = vunpack.c.h.b16 %v774
  %v3290 = vunpack.c.l.b16 %v775
  %v3291 = vunpack.c.h.b16 %v775
  %v3292 = vunpack.c.l.b16 %v776
  %v3293 = vunpack.c.h.b16 %v776
  %v3294 = vunpack.c.l.b16 %v777
  %v3295 = vunpack.c.h.b16 %v777
  %v3296 = vunpack.c.l.b16 %v778
  %v3297 = vunpack.c.h.b16 %v778
  %v3298 = vunpack.c.l.b16 %v779
  %v3299 = vunpack.c.h.b16 %v779
  %v3300 = vunpack.c.l.b16 %v780
  %v3301 = vunpack.c.h.b16 %v780
  %v3302 = vunpack.c.l.b16 %v781
  %v3303 = vunpack.c.h.b16 %v781
  %v3304 = vunpack.c.l.b16 %v782
  %v3305 = vunpack.c.h.b16 %v782
  %v3306 = vunpack.c.l.b16 %v783
  %v3307 = vunpack.c.h.b16 %v783
  %v3308 = vunpack.c.l.b16 %v784
  %v3309 = vunpack.c.h.b16 %v784
  %v3310 = vunpack.c.l.b16 %v785
  %v3311 = vunpack.c.h.b16 %v785
  %v3312 = vunpack.c.l.b16 %v786
  %v3313 = vunpack.c.h.b16 %v786
  %v3314 = vunpack.c.l.b16 %v787
  %v3315 = vunpack.c.h.b16 %v787
  %v3316 = vunpack.c.l.b16 %v788
  %v3317 = vunpack.c.h.b16 %v788
  %v3318 = vunpack.c.l.b16 %v789
  %v3319 = vunpack.c.h.b16 %v789
  %v3320 = vunpack.c.l.b16 %v790
  %v3321 = vunpack.c.h.b16 %v790
  %v3322 = vunpack.c.l.b16 %v791
  %v3323 = vunpack.c.h.b16 %v791
  %v3324 = vunpack.c.l.b16 %v792
  %v3325 = vunpack.c.h.b16 %v792
  %v3326 = vunpack.c.l.b16 %v793
  %v3327 = vunpack.c.h.b16 %v793
  %v3328 = vunpack.c.l.b16 %v794
  %v3329 = vunpack.c.h.b16 %v794
  %v3330 = vunpack.c.l.b16 %v795
  %v3331 = vunpack.c.h.b16 %v795
  %v3332 = vunpack.c.l.b16 %v796
  %v3333 = vunpack.c.h.b16 %v796
  %v3334 = vunpack.c.l.b16 %v797
  %v3335 = vunpack.c.h.b16 %v797
  %v3336 = vunpack.c.l.b16 %v798
  %v3337 = vunpack.c.h.b16 %v798
  %v3338 = vunpack.c.l.b16 %v799
  %v3339 = vunpack.c.h.b16 %v799
  %v3340 = vunpack.c.l.b16 %v800
  %v3341 = vunpack.c.h.b16 %v800
  %v3342 = vunpack.c.l.b16 %v801
  %v3343 = vunpack.c.h.b16 %v801
  %v3344 = vunpack.c.l.b16 %v802
  %v3345 = vunpack.c.h.b16 %v802
  %v3346 = vunpack.c.l.b16 %v803
  %v3347 = vunpack.c.h.b16 %v803
  %v3348 = vunpack.c.l.b16 %v804
  %v3349 = vunpack.c.h.b16 %v804
  %v3350 = vunpack.c.l.b16 %v805
  %v3351 = vunpack.c.h.b16 %v805
  %v3352 = vunpack.c.l.b16 %v806
  %v3353 = vunpack.c.h.b16 %v806
  %v3354 = vunpack.c.l.b16 %v807
  %v3355 = vunpack.c.h.b16 %v807
  %v3356 = vunpack.c.l.b16 %v808
  %v3357 = vunpack.c.h.b16 %v808
  %v3358 = vunpack.c.l.b16 %v809
  %v3359 = vunpack.c.h.b16 %v809
  %v3360 = vunpack.c.l.b16 %v810
  %v3361 = vunpack.c.h.b16 %v810
  %v3362 = vunpack.c.l.b16 %v811
  %v3363 = vunpack.c.h.b16 %v811
  %v3364 = vunpack.c.l.b16 %v812
  %v3365 = vunpack.c.h.b16 %v812
  %v3366 = vunpack.c.l.b16 %v813
  %v3367 = vunpack.c.h.b16 %v813
  %v3368 = vunpack.c.l.b16 %v814
  %v3369 = vunpack.c.h.b16 %v814
  %v3370 = vunpack.c.l.b16 %v815
  %v3371 = vunpack.c.h.b16 %v815
  %v3372 = vunpack.c.l.b16 %v816
  %v3373 = vunpack.c.h.b16 %v816
  %v3374 = vunpack.c.l.b16 %v817
  %v3375 = vunpack.c.h.b16 %v817
  %v3376 = vunpack.c.l.b16 %v818
  %v3377 = vunpack.c.h.b16 %v818
  %v3378 = vunpack.c.l.b16 %v819
  %v3379 = vunpack.c.h.b16 %v819
  %v3380 = vunpack.c.l.b16 %v820
  %v3381 = vunpack.c.h.b16 %v820
  %v3382 = vunpack.c.l.b16 %v821
  %v3383 = vunpack.c.h.b16 %v821
  %v3384 = vunpack.c.l.b16 %v822
  %v3385 = vunpack.c.h.b16 %v822
  %v3386 = vunpack.c.l.b16 %v823
  %v3387 = vunpack.c.h.b16 %v823
  %v3388 = vunpack.c.l.b16 %v824
  %v3389 = vunpack.c.h.b16 %v824
  %v3390 = vunpack.c.l.b16 %v825
  %v3391 = vunpack.c.h.b16 %v825
  %v3392 = vunpack.c.l.b16 %v826
  %v3393 = vunpack.c.h.b16 %v826
  %v3394 = vunpack.c.l.b16 %v827
  %v3395 = vunpack.c.h.b16 %v827
  %v3396 = vunpack.c.l.b16 %v828
  %v3397 = vunpack.c.h.b16 %v828
  %v3398 = vunpack.c.l.b16 %v829
  %v3399 = vunpack.c.h.b16 %v829
  %v3400 = vunpack.c.l.b16 %v830
  %v3401 = vunpack.c.h.b16 %v830
  %v3402 = vunpack.c.l.b16 %v831
  %v3403 = vunpack.c.h.b16 %v831
  %v3404 = vunpack.c.l.b16 %v832
  %v3405 = vunpack.c.h.b16 %v832
  %v3406 = vunpack.c.l.b16 %v833
  %v3407 = vunpack.c.h.b16 %v833
  %v3408 = vunpack.c.l.b16 %v834
  %v3409 = vunpack.c.h.b16 %v834
  %v3410 = vunpack.c.l.b16 %v835
  %v3411 = vunpack.c.h.b16 %v835
  %v3412 = vunpack.c.l.b16 %v836
  %v3413 = vunpack.c.h.b16 %v836
  %v3414 = vunpack.c.l.b16 %v837
  %v3415 = vunpack.c.h.b16 %v837
  %v3416 = vunpack.c.l.b16 %v838
  %v3417 = vunpack.c.h.b16 %v838
  %v3418 = vunpack.c.l.b16 %v839
  %v3419 = vunpack.c.h.b16 %v839
  %v3420 = vunpack.c.l.b16 %v840
  %v3421 = vunpack.c.h.b16 %v840
  %v3422 = vunpack.c.l.b16 %v841
  %v3423 = vunpack.c.h.b16 %v841
  %v3424 = vunpack.c.l.b16 %v842
  %v3425 = vunpack.c.h.b16 %v842
  %v3426 = vunpack.c.l.b16 %v843
  %v3427 = vunpack.c.h.b16 %v843
  %v3428 = vunpack.c.l.b16 %v844
  %v3429 = vunpack.c.h.b16 %v844
  %v3430 = vunpack.c.l.b16 %v845
  %v3431 = vunpack.c.h.b16 %v845
  %v3432 = vunpack.c.l.b16 %v846
  %v3433 = vunpack.c.h.b16 %v846
  %v3434 = vpack.c.b16 %v1836, %v1834
  %v3435 = vpack.c.b16 %v1837, %v1835
  %v3436 = vpack.c.b16 %v1840, %v1838
  %v3437 = vpack.c.b16 %v1841, %v1839
  %v3438 = vpack.c.b16 %v1844, %v1842
  %v3439 = vpack.c.b16 %v1845, %v1843
  %v3440 = vpack.c.b16 %v1848, %v1846
  %v3441 = vpack.c.b16 %v1849, %v1847
  %v3442 = vpack.c.b16 %v1852, %v1850
  %v3443 = vpack.c.b16 %v1853, %v1851
  %v3444 = vpack.c.b16 %v1856, %v1854
  %v3445 = vpack.c.b16 %v1857, %v1855
  %v3446 = vpack.c.b16 %v1860, %v1858
  %v3447 = vpack.c.b16 %v1861, %v1859
  %v3448 = vpack.c.b16 %v1864, %v1862
  %v3449 = vpack.c.b16 %v1865, %v1863
  %v3450 = vpack.c.b16 %v1868, %v1866
  %v3451 = vpack.c.b16 %v1869, %v1867
  %v3452 = vpack.c.b16 %v1872, %v1870
  %v3453 = vpack.c.b16 %v1873, %v1871
  %v3454 = vpack.c.b16 %v1876, %v1874
  %v3455 = vpack.c.b16 %v1877, %v1875
  %v3456 = vpack.c.b16 %v1880, %v1878
  %v3457 = vpack.c.b16 %v1881, %v1879
  %v3458 = vpack.c.b16 %v1884, %v1882
  %v3459 = vpack.c.b16 %v1885, %v1883
  %v3460 = vpack.c.b16 %v1888, %v1886
  %v3461 = vpack.c.b16 %v1889, %v1887
  %v3462 = vpack.c.b16 %v1892, %v1890
  %v3463 = vpack.c.b16 %v1893, %v1891
  %v3464 = vpack.c.b16 %v1896, %v1894
  %v3465 = vpack.c.b16 %v1897, %v1895
  %v3466 = vpack.c.b16 %v1900, %v1898
  %v3467 = vpack.c.b16 %v1901, %v1899
  %v3468 = vpack.c.b16 %v1904, %v1902
  %v3469 = vpack.c.b16 %v1905, %v1903
  %v3470 = vpack.c.b16 %v1908, %v1906
  %v3471 = vpack.c.b16 %v1909, %v1907
  %v3472 = vpack.c.b16 %v1912, %v1910
  %v3473 = vpack.c.b16 %v1913, %v1911
  %v3474 = vpack.c.b16 %v1916, %v1914
  %v3475 = vpack.c.b16 %v1917, %v1915
  %v3476 = vpack.c.b16 %v1920, %v1918
  %v3477 = vpack.c.b16 %v1921, %v1919
  %v3478 = vpack.c.b16 %v1924, %v1922
  %v3479 = vpack.c.b16 %v1925, %v1923
  %v3480 = vpack.c.b16 %v1928, %v1926
  %v3481 = vpack.c.b16 %v1929, %v1927
  %v3482 = vpack.c.b16 %v1932, %v1930
  %v3483 = vpack.c.b16 %v1933, %v1931
  %v3484 = vpack.c.b16 %v1936, %v1934
  %v3485 = vpack.c.b16 %v1937, %v1935
  %v3486 = vpack.c.b16 %v1940, %v1938
  %v3487 = vpack.c.b16 %v1941, %v1939
  %v3488 = vpack.c.b16 %v1944, %v1942
  %v3489 = vpack.c.b16 %v1945, %v1943
  %v3490 = vpack.c.b16 %v1948, %v1946
  %v3491 = vpack.c.b16 %v1949, %v1947
  %v3492 = vpack.c.b16 %v1952, %v1950
  %v3493 = vpack.c.b16 %v1953, %v1951
  %v3494 = vpack.c.b16 %v1956, %v1954
  %v3495 = vpack.c.b16 %v1957, %v1955
  %v3496 = vpack.c.b16 %v1960, %v1958
  %v3497 = vpack.c.b16 %v1961, %v1959
  %v3498 = vpack.c.b16 %v1964, %v1962
  %v3499 = vpack.c.b16 %v1965, %v1963
  %v3500 = vpack.c.b16 %v1968, %v1966
  %v3501 = vpack.c.b16 %v1969, %v1967
  %v3502 = vpack.c.b16 %v1972, %v1970
  %v3503 = vpack.c.b16 %v1973, %v1971
  %v3504 = vpack.c.b16 %v1976, %v1974
  %v3505 = vpack.c.b16 %v1977, %v1975
  %v3506 = vpack.c.b16 %v1980, %v1978
  %v3507 = vpack.c.b16 %v1981, %v1979
  %v3508 = vpack.c.b16 %v1984, %v1982
  %v3509 = vpack.c.b16 %v1985, %v1983
  %v3510 = vpack.c.b16 %v1988, %v1986
  %v3511 = vpack.c.b16 %v1989, %v1987
  %v3512 = vpack.c.b16 %v1992, %v1990
  %v3513 = vpack.c.b16 %v1993, %v1991
  %v3514 = vpack.c.b16 %v1996, %v1994
  %v3515 = vpack.c.b16 %v1997, %v1995
  %v3516 = vpack.c.b16 %v2000, %v1998
  %v3517 = vpack.c.b16 %v2001, %v1999
  %v3518 = vpack.c.b16 %v2004, %v2002
  %v3519 = vpack.c.b16 %v2005, %v2003
  %v3520 = vpack.c.b16 %v2008, %v2006
  %v3521 = vpack.c.b16 %v2009, %v2007
  %v3522 = vpack.c.b16 %v2012, %v2010
  %v3523 = vpack.c.b16 %v2013, %v2011
  %v3524 = vpack.c.b16 %v2016, %v2014
  %v3525 = vpack.c.b16 %v2017, %v2015
  %v3526 = vpack.c.b16 %v2020, %v2018
  %v3527 = vpack.c.b16 %v2021, %v2019
  %v3528 = vpack.c.b16 %v2024, %v2022
  %v3529 = vpack.c.b16 %v2025, %v2023
  %v3530 = vpack.c.b16 %v2028, %v2026
  %v3531 = vpack.c.b16 %v2029, %v2027
  %v3532 = vpack.c.b16 %v2032, %v2030
  %v3533 = vpack.c.b16 %v2033, %v2031
  %v3534 = vpack.c.b16 %v2036, %v2034
  %v3535 = vpack.c.b16 %v2037, %v2035
  %v3536 = vpack.c.b16 %v2040, %v2038
  %v3537 = vpack.c.b16 %v2041, %v2039
  %v3538 = vpack.c.b16 %v2044, %v2042
  %v3539 = vpack.c.b16 %v2045, %v2043
  %v3540 = vpack.c.b16 %v2048, %v2046
  %v3541 = vpack.c.b16 %v2049, %v2047
  %v3542 = vpack.c.b16 %v2052, %v2050
  %v3543 = vpack.c.b16 %v2053, %v2051
  %v3544 = vpack.c.b16 %v2056, %v2054
  %v3545 = vpack.c.b16 %v2057, %v2055
  %v3546 = vpack.c.b16 %v2060, %v2058
  %v3547 = vpack.c.b16 %v2061, %v2059
  %v3548 = vpack.c.b16 %v2064, %v2062
  %v3549 = vpack.c.b16 %v2065, %v2063
  %v3550 = vpack.c.b16 %v2068, %v2066
  %v3551 = vpack.c.b16 %v2069, %v2067
  %v3552 = vpack.c.b16 %v2072, %v2070
  %v3553 = vpack.c.b16 %v2073, %v2071
  %v3554 = vpack.c.b16 %v2076, %v2074
  %v3555 = vpack.c.b16 %v2077, %v2075
  %v3556 = vpack.c.b16 %v2080, %v2078
  %v3557 = vpack.c.b16 %v2081, %v2079
  %v3558 = vpack.c.b16 %v2084, %v2082
  %v3559 = vpack.c.b16 %v2085, %v2083
  %v3560 = vpack.c.b16 %v2088, %v2086
  %v3561 = vpack.c.b16 %v2089, %v2087
  %v3562 = vpack.c.b16 %v2092, %v2090
  %v3563 = vpack.c.b16 %v2093, %v2091
  %v3564 = vpack.c.b16 %v2096, %v2094
  %v3565 = vpack.c.b16 %v2097, %v2095
  %v3566 = vpack.c.b16 %v2100, %v2098
  %v3567 = vpack.c.b16 %v2101, %v2099
  %v3568 = vpack.c.b16 %v2104, %v2102
  %v3569 = vpack.c.b16 %v2105, %v2103
  %v3570 = vpack.c.b16 %v2108, %v2106
  %v3571 = vpack.c.b16 %v2109, %v2107
  %v3572 = vpack.c.b16 %v2112, %v2110
  %v3573 = vpack.c.b16 %v2113, %v2111
  %v3574 = vpack.c.b16 %v2116, %v2114
  %v3575 = vpack.c.b16 %v2117, %v2115
  %v3576 = vpack.c.b16 %v2120, %v2118
  %v3577 = vpack.c.b16 %v2121, %v2119
  %v3578 = vpack.c.b16 %v2124, %v2122
  %v3579 = vpack.c.b16 %v2125, %v2123
  %v3580 = vpack.c.b16 %v2128, %v2126
  %v3581 = vpack.c.b16 %v2129, %v2127
  %v3582 = vpack.c.b16 %v2132, %v2130
  %v3583 = vpack.c.b16 %v2133, %v2131
  %v3584 = vpack.c.b16 %v2136, %v2134
  %v3585 = vpack.c.b16 %v2137, %v2135
  %v3586 = vpack.c.b16 %v2140, %v2138
  %v3587 = vpack.c.b16 %v2141, %v2139
  %v3588 = vpack.c.b16 %v2144, %v2142
  %v3589 = vpack.c.b16 %v2145, %v2143
  %v3590 = vpack.c.b16 %v2148, %v2146
  %v3591 = vpack.c.b16 %v2149, %v2147
  %v3592 = vpack.c.b16 %v2152, %v2150
  %v3593 = vpack.c.b16 %v2153, %v2151
  %v3594 = vpack.c.b16 %v2156, %v2154
  %v3595 = vpack.c.b16 %v2157, %v2155
  %v3596 = vpack.c.b16 %v2160, %v2158
  %v3597 = vpack.c.b16 %v2161, %v2159
  %v3598 = vpack.c.b16 %v2164, %v2162
  %v3599 = vpack.c.b16 %v2165, %v2163
  %v3600 = vpack.c.b16 %v2168, %v2166
  %v3601 = vpack.c.b16 %v2169, %v2167
  %v3602 = vpack.c.b16 %v2172, %v2170
  %v3603 = vpack.c.b16 %v2173, %v2171
  %v3604 = vpack.c.b16 %v2176, %v2174
  %v3605 = vpack.c.b16 %v2177, %v2175
  %v3606 = vpack.c.b16 %v2180, %v2178
  %v3607 = vpack.c.b16 %v2181, %v2179
  %v3608 = vpack.c.b16 %v2184, %v2182
  %v3609 = vpack.c.b16 %v2185, %v2183
  %v3610 = vpack.c.b16 %v2188, %v2186
  %v3611 = vpack.c.b16 %v2189, %v2187
  %v3612 = vpack.c.b16 %v2192, %v2190
  %v3613 = vpack.c.b16 %v2193, %v2191
  %v3614 = vpack.c.b16 %v2196, %v2194
  %v3615 = vpack.c.b16 %v2197, %v2195
  %v3616 = vpack.c.b16 %v2200, %v2198
  %v3617 = vpack.c.b16 %v2201, %v2199
  %v3618 = vpack.c.b16 %v2204, %v2202
  %v3619 = vpack.c.b16 %v2205, %v2203
  %v3620 = vpack.c.b16 %v2208, %v2206
  %v3621 = vpack.c.b16 %v2209, %v2207
  %v3622 = vpack.c.b16 %v2212, %v2210
  %v3623 = vpack.c.b16 %v2213, %v2211
  %v3624 = vpack.c.b16 %v2216, %v2214
  %v3625 = vpack.c.b16 %v2217, %v2215
  %v3626 = vpack.c.b16 %v2220, %v2218
  %v3627 = vpack.c.b16 %v2221, %v2219
  %v3628 = vpack.c.b16 %v2224, %v2222
  %v3629 = vpack.c.b16 %v2225, %v2223
  %v3630 = vpack.c.b16 %v2228, %v2226
  %v3631 = vpack.c.b16 %v2229, %v2227
  %v3632 = vpack.c.b16 %v2232, %v2230
  %v3633 = vpack.c.b16 %v2233, %v2231
  %v3634 = vpack.c.b16 %v2236, %v2234
  %v3635 = vpack.c.b16 %v2237, %v2235
  %v3636 = vpack.c.b16 %v2240, %v2238
  %v3637 = vpack.c.b16 %v2241, %v2239
  %v3638 = vpack.c.b16 %v2244, %v2242
  %v3639 = vpack.c.b16 %v2245, %v2243
  %v3640 = vpack.c.b16 %v2248, %v2246
  %v3641 = vpack.c.b16 %v2249, %v2247
  %v3642 = vpack.c.b16 %v2252, %v2250
  %v3643 = vpack.c.b16 %v2253, %v2251
  %v3644 = vpack.c.b16 %v2256, %v2254
  %v3645 = vpack.c.b16 %v2257, %v2255
  %v3646 = vpack.c.b16 %v2260, %v2258
  %v3647 = vpack.c.b16 %v2261, %v2259
  %v3648 = vpack.c.b16 %v2264, %v2262
  %v3649 = vpack.c.b16 %v2265, %v2263
  %v3650 = vpack.c.b16 %v2268, %v2266
  %v3651 = vpack.c.b16 %v2269, %v2267
  %v3652 = vpack.c.b16 %v2272, %v2270
  %v3653 = vpack.c.b16 %v2273, %v2271
  %v3654 = vpack.c.b16 %v2276, %v2274
  %v3655 = vpack.c.b16 %v2277, %v2275
  %v3656 = vpack.c.b16 %v2280, %v2278
  %v3657 = vpack.c.b16 %v2281, %v2279
  %v3658 = vpack.c.b16 %v2284, %v2282
  %v3659 = vpack.c.b16 %v2285, %v2283
  %v3660 = vpack.c.b16 %v2288, %v2286
  %v3661 = vpack.c.b16 %v2289, %v2287
  %v3662 = vpack.c.b16 %v2292, %v2290
  %v3663 = vpack.c.b16 %v2293, %v2291
  %v3664 = vpack.c.b16 %v2296, %v2294
  %v3665 = vpack.c.b16 %v2297, %v2295
  %v3666 = vpack.c.b16 %v2300, %v2298
  %v3667 = vpack.c.b16 %v2301, %v2299
  %v3668 = vpack.c.b16 %v2304, %v2302
  %v3669 = vpack.c.b16 %v2305, %v2303
  %v3670 = vpack.c.b16 %v2308, %v2306
  %v3671 = vpack.c.b16 %v2309, %v2307
  %v3672 = vpack.c.b16 %v2312, %v2310
  %v3673 = vpack.c.b16 %v2313, %v2311
  %v3674 = vpack.c.b16 %v2316, %v2314
  %v3675 = vpack.c.b16 %v2317, %v2315
  %v3676 = vpack.c.b16 %v2320, %v2318
  %v3677 = vpack.c.b16 %v2321, %v2319
  %v3678 = vpack.c.b16 %v2324, %v2322
  %v3679 = vpack.c.b16 %v2325, %v2323
  %v3680 = vpack.c.b16 %v2328, %v2326
  %v3681 = vpack.c.b16 %v2329, %v2327
  %v3682 = vpack.c.b16 %v2332, %v2330
  %v3683 = vpack.c.b16 %v2333, %v2331
  %v3684 = vpack.c.b16 %v2336, %v2334
  %v3685 = vpack.c.b16 %v2337, %v2335
  %v3686 = vpack.c.b16 %v2340, %v2338
  %v3687 = vpack.c.b16 %v2341, %v2339
  %v3688 = vpack.c.b16 %v2344, %v2342
  %v3689 = vpack.c.b16 %v2345, %v2343
  %v3690 = vpack.c.b16 %v2348, %v2346
  %v3691 = vpack.c.b16 %v2349, %v2347
  %v3692 = vpack.c.b16 %v2352, %v2350
  %v3693 = vpack.c.b16 %v2353, %v2351
  %v3694 = vpack.c.b16 %v2356, %v2354
  %v3695 = vpack.c.b16 %v2357, %v2355
  %v3696 = vpack.c.b16 %v2360, %v2358
  %v3697 = vpack.c.b16 %v2361, %v2359
  %v3698 = vpack.c.b16 %v2364, %v2362
  %v3699 = vpack.c.b16 %v2365, %v2363
  %v3700 = vpack.c.b16 %v2368, %v2366
  %v3701 = vpack.c.b16 %v2369, %v2367
  %v3702 = vpack.c.b16 %v2372, %v2370
  %v3703 = vpack.c.b16 %v2373, %v2371
  %v3704 = vpack.c.b16 %v2376, %v2374
  %v3705 = vpack.c.b16 %v2377, %v2375
  %v3706 = vpack.c.b16 %v2380, %v2378
  %v3707 = vpack.c.b16 %v2381, %v2379
  %v3708 = vpack.c.b16 %v2384, %v2382
  %v3709 = vpack.c.b16 %v2385, %v2383
  %v3710 = vpack.c.b16 %v2388, %v2386
  %v3711 = vpack.c.b16 %v2389, %v2387
  %v3712 = vpack.c.b16 %v2392, %v2390
  %v3713 = vpack.c.b16 %v2393, %v2391
  %v3714 = vpack.c.b16 %v2396, %v2394
  %v3715 = vpack.c.b16 %v2397, %v2395
  %v3716 = vpack.c.b16 %v2400, %v2398
  %v3717 = vpack.c.b16 %v2401, %v2399
  %v3718 = vpack.c.b16 %v2404, %v2402
  %v3719 = vpack.c.b16 %v2405, %v2403
  %v3720 = vpack.c.b16 %v2408, %v2406
  %v3721 = vpack.c.b16 %v2409, %v2407
  %v3722 = vpack.c.b16 %v2412, %v2410
  %v3723 = vpack.c.b16 %v2413, %v2411
  %v3724 = vpack.c.b16 %v2416, %v2414
  %v3725 = vpack.c.b16 %v2417, %v2415
  %v3726 = vpack.c.b16 %v2420, %v2418
  %v3727 = vpack.c.b16 %v2421, %v2419
  %v3728 = vpack.c.b16 %v2424, %v2422
  %v3729 = vpack.c.b16 %v2425, %v2423
  %v3730 = vpack.c.b16 %v2428, %v2426
  %v3731 = vpack.c.b16 %v2429, %v2427
  %v3732 = vpack.c.b16 %v2432, %v2430
  %v3733 = vpack.c.b16 %v2433, %v2431
  %v3734 = vpack.c.b16 %v2436, %v2434
  %v3735 = vpack.c.b16 %v2437, %v2435
  %v3736 = vpack.c.b16 %v2440, %v2438
  %v3737 = vpack.c.b16 %v2441, %v2439
  %v3738 = vpack.c.b16 %v2444, %v2442
  %v3739 = vpack.c.b16 %v2445, %v2443
  %v3740 = vpack.c.b16 %v2448, %v2446
  %v3741 = vpack.c.b16 %v2449, %v2447
  %v3742 = vpack.c.b16 %v2452, %v2450
  %v3743 = vpack.c.b16 %v2453, %v2451
  %v3744 = vpack.c.b16 %v2456, %v2454
  %v3745 = vpack.c.b16 %v2457, %v2455
  %v3746 = vpack.c.b16 %v2460, %v2458
  %v3747 = vpack.c.b16 %v2461, %v2459
  %v3748 = vpack.c.b16 %v2464, %v2462
  %v3749 = vpack.c.b16 %v2465, %v2463
  %v3750 = vpack.c.b16 %v2468, %v2466
  %v3751 = vpack.c.b16 %v2469, %v2467
  %v3752 = vpack.c.b16 %v2472, %v2470
  %v3753 = vpack.c.b16 %v2473, %v2471
  %v3754 = vpack.c.b16 %v2476, %v2474
  %v3755 = vpack.c.b16 %v2477, %v2475
  %v3756 = vpack.c.b16 %v2480, %v2478
  %v3757 = vpack.c.b16 %v2481, %v2479
  %v3758 = vpack.c.b16 %v2484, %v2482
  %v3759 = vpack.c.b16 %v2485, %v2483
  %v3760 = vpack.c.b16 %v2488, %v2486
  %v3761 = vpack.c.b16 %v2489, %v2487
  %v3762 = vpack.c.b16 %v2492, %v2490
  %v3763 = vpack.c.b16 %v2493, %v2491
  %v3764 = vpack.c.b16 %v2496, %v2494
  %v3765 = vpack.c.b16 %v2497, %v2495
  %v3766 = vpack.c.b16 %v2500, %v2498
  %v3767 = vpack.c.b16 %v2501, %v2499
  %v3768 = vpack.c.b16 %v2504, %v2502
  %v3769 = vpack.c.b16 %v2505, %v2503
  %v3770 = vpack.c.b16 %v2508, %v2506
  %v3771 = vpack.c.b16 %v2509, %v2507
  %v3772 = vpack.c.b16 %v2512, %v2510
  %v3773 = vpack.c.b16 %v2513, %v2511
  %v3774 = vpack.c.b16 %v2516, %v2514
  %v3775 = vpack.c.b16 %v2517, %v2515
  %v3776 = vpack.c.b16 %v2520, %v2518
  %v3777 = vpack.c.b16 %v2521, %v2519
  %v3778 = vpack.c.b16 %v2524, %v2522
  %v3779 = vpack.c.b16 %v2525, %v2523
  %v3780 = vpack.c.b16 %v2528, %v2526
  %v3781 = vpack.c.b16 %v2529, %v2527
  %v3782 = vpack.c.b16 %v2532, %v2530
  %v3783 = vpack.c.b16 %v2533, %v2531
  %v3784 = vpack.c.b16 %v2536, %v2534
  %v3785 = vpack.c.b16 %v2537, %v2535
  %v3786 = vpack.c.b16 %v2540, %v2538
  %v3787 = vpack.c.b16 %v2541, %v2539
  %v3788 = vpack.c.b16 %v2544, %v2542
  %v3789 = vpack.c.b16 %v2545, %v2543
  %v3790 = vpack.c.b16 %v2548, %v2546
  %v3791 = vpack.c.b16 %v2549, %v2547
  %v3792 = vpack.c.b16 %v2552, %v2550
  %v3793 = vpack.c.b16 %v2553, %v2551
  %v3794 = vpack.c.b16 %v2556, %v2554
  %v3795 = vpack.c.b16 %v2557, %v2555
  %v3796 = vpack.c.b16 %v2560, %v2558
  %v3797 = vpack.c.b16 %v2561, %v2559
  %v3798 = vpack.c.b16 %v2564, %v2562
  %v3799 = vpack.c.b16 %v2565, %v2563
  %v3800 = vpack.c.b16 %v2568, %v2566
  %v3801 = vpack.c.b16 %v2569, %v2567
  %v3802 = vpack.c.b16 %v2572, %v2570
  %v3803 = vpack.c.b16 %v2573, %v2571
  %v3804 = vpack.c.b16 %v2576, %v2574
  %v3805 = vpack.c.b16 %v2577, %v2575
  %v3806 = vpack.c.b16 %v2580, %v2578
  %v3807 = vpack.c.b16 %v2581, %v2579
  %v3808 = vpack.c.b16 %v2584, %v2582
  %v3809 = vpack.c.b16 %v2585, %v2583
  %v3810 = vpack.c.b16 %v2588, %v2586
  %v3811 = vpack.c.b16 %v2589, %v2587
  %v3812 = vpack.c.b16 %v2592, %v2590
  %v3813 = vpack.c.b16 %v2593, %v2591
  %v3814 = vpack.c.b16 %v2596, %v2594
  %v3815 = vpack.c.b16 %v2597, %v2595
  %v3816 = vpack.c.b16 %v2600, %v2598
  %v3817 = vpack.c.b16 %v2601, %v2599
  %v3818 = vpack.c.b16 %v2604, %v2602
  %v3819 = vpack.c.b16 %v2605, %v2603
  %v3820 = vpack.c.b16 %v2608, %v2606
  %v3821 = vpack.c.b16 %v2609, %v2607
  %v3822 = vpack.c.b16 %v2612, %v2610
  %v3823 = vpack.c.b16 %v2613, %v2611
  %v3824 = vpack.c.b16 %v2616, %v2614
  %v3825 = vpack.c.b16 %v2617, %v2615
  %v3826 = vpack.c.b16 %v2620, %v2618
  %v3827 = vpack.c.b16 %v2621, %v2619
  %v3828 = vpack.c.b16 %v2624, %v2622
  %v3829 = vpack.c.b16 %v2625, %v2623
  %v3830 = vpack.c.b16 %v2628, %v2626
  %v3831 = vpack.c.b16 %v2629, %v2627
  %v3832 = vpack.c.b16 %v2632, %v2630
  %v3833 = vpack.c.b16 %v2633, %v2631
  %v3834 = vpack.c.b16 %v2636, %v2634
  %v3835 = vpack.c.b16 %v2637, %v2635
  %v3836 = vpack.c.b16 %v2640, %v2638
  %v3837 = vpack.c.b16 %v2641, %v2639
  %v3838 = vpack.c.b16 %v2644, %v2642
  %v3839 = vpack.c.b16 %v2645, %v2643
  %v3840 = vpack.c.b16 %v2648, %v2646
  %v3841 = vpack.c.b16 %v2649, %v2647
  %v3842 = vpack.c.b16 %v2652, %v2650
  %v3843 = vpack.c.b16 %v2653, %v2651
  %v3844 = vpack.c.b16 %v2656, %v2654
  %v3845 = vpack.c.b16 %v2657, %v2655
  %v3846 = vpack.c.b16 %v2660, %v2658
  %v3847 = vpack.c.b16 %v2661, %v2659
  %v3848 = vpack.c.b16 %v2664, %v2662
  %v3849 = vpack.c.b16 %v2665, %v2663
  %v3850 = vpack.c.b16 %v2668, %v2666
  %v3851 = vpack.c.b16 %v2669, %v2667
  %v3852 = vpack.c.b16 %v2672, %v2670
  %v3853 = vpack.c.b16 %v2673, %v2671
  %v3854 = vpack.c.b16 %v2676, %v2674
  %v3855 = vpack.c.b16 %v2677, %v2675
  %v3856 = vpack.c.b16 %v2680, %v2678
  %v3857 = vpack.c.b16 %v2681, %v2679
  %v3858 = vpack.c.b16 %v2684, %v2682
  %v3859 = vpack.c.b16 %v2685, %v2683
  %v3860 = vpack.c.b16 %v2688, %v2686
  %v3861 = vpack.c.b16 %v2689, %v2687
  %v3862 = vpack.c.b16 %v2692, %v2690
  %v3863 = vpack.c.b16 %v2693, %v2691
  %v3864 = vpack.c.b16 %v2696, %v2694
  %v3865 = vpack.c.b16 %v2697, %v2695
  %v3866 = vpack.c.b16 %v2700, %v2698
  %v3867 = vpack.c.b16 %v2701, %v2699
  %v3868 = vpack.c.b16 %v2704, %v2702
  %v3869 = vpack.c.b16 %v2705, %v2703
  %v3870 = vpack.c.b16 %v2708, %v2706
  %v3871 = vpack.c.b16 %v2709, %v2707
  %v3872 = vpack.c.b16 %v2712, %v2710
  %v3873 = vpack.c.b16 %v2713, %v2711
  %v3874 = vpack.c.b16 %v2716, %v2714
  %v3875 = vpack.c.b16 %v2717, %v2715
  %v3876 = vpack.c.b16 %v2720, %v2718
  %v3877 = vpack.c.b16 %v2721, %v2719
  %v3878 = vpack.c.b16 %v2724, %v2722
  %v3879 = vpack.c.b16 %v2725, %v2723
  %v3880 = vpack.c.b16 %v2728, %v2726
  %v3881 = vpack.c.b16 %v2729, %v2727
  %v3882 = vpack.c.b16 %v2732, %v2730
  %v3883 = vpack.c.b16 %v2733, %v2731
  %v3884 = vpack.c.b16 %v2736, %v2734
  %v3885 = vpack.c.b16 %v2737, %v2735
  %v3886 = vpack.c.b16 %v2740, %v2738
  %v3887 = vpack.c.b16 %v2741, %v2739
  %v3888 = vpack.c.b16 %v2744, %v2742
  %v3889 = vpack.c.b16 %v2745, %v2743
  %v3890 = vpack.c.b16 %v2748, %v2746
  %v3891 = vpack.c.b16 %v2749, %v2747
  %v3892 = vpack.c.b16 %v2752, %v2750
  %v3893 = vpack.c.b16 %v2753, %v2751
  %v3894 = vpack.c.b16 %v2756, %v2754
  %v3895 = vpack.c.b16 %v2757, %v2755
  %v3896 = vpack.c.b16 %v2760, %v2758
  %v3897 = vpack.c.b16 %v2761, %v2759
  %v3898 = vpack.c.b16 %v2764, %v2762
  %v3899 = vpack.c.b16 %v2765, %v2763
  %v3900 = vpack.c.b16 %v2768, %v2766
  %v3901 = vpack.c.b16 %v2769, %v2767
  %v3902 = vpack.c.b16 %v2772, %v2770
  %v3903 = vpack.c.b16 %v2773, %v2771
  %v3904 = vpack.c.b16 %v2776, %v2774
  %v3905 = vpack.c.b16 %v2777, %v2775
  %v3906 = vpack.c.b16 %v2780, %v2778
  %v3907 = vpack.c.b16 %v2781, %v2779
  %v3908 = vpack.c.b16 %v2784, %v2782
  %v3909 = vpack.c.b16 %v2785, %v2783
  %v3910 = vpack.c.b16 %v2788, %v2786
  %v3911 = vpack.c.b16 %v2789, %v2787
  %v3912 = vpack.c.b16 %v2792, %v2790
  %v3913 = vpack.c.b16 %v2793, %v2791
  %v3914 = vpack.c.b16 %v2796, %v2794
  %v3915 = vpack.c.b16 %v2797, %v2795
  %v3916 = vpack.c.b16 %v2800, %v2798
  %v3917 = vpack.c.b16 %v2801, %v2799
  %v3918 = vpack.c.b16 %v2804, %v2802
  %v3919 = vpack.c.b16 %v2805, %v2803
  %v3920 = vpack.c.b16 %v2808, %v2806
  %v3921 = vpack.c.b16 %v2809, %v2807
  %v3922 = vpack.c.b16 %v2812, %v2810
  %v3923 = vpack.c.b16 %v2813, %v2811
  %v3924 = vpack.c.b16 %v2816, %v2814
  %v3925 = vpack.c.b16 %v2817, %v2815
  %v3926 = vpack.c.b16 %v2820, %v2818
  %v3927 = vpack.c.b16 %v2821, %v2819
  %v3928 = vpack.c.b16 %v2824, %v2822
  %v3929 = vpack.c.b16 %v2825, %v2823
  %v3930 = vpack.c.b16 %v2828, %v2826
  %v3931 = vpack.c.b16 %v2829, %v2827
  %v3932 = vpack.c.b16 %v2832, %v2830
  %v3933 = vpack.c.b16 %v2833, %v2831
  %v3934 = vpack.c.b16 %v2836, %v2834
  %v3935 = vpack.c.b16 %v2837, %v2835
  %v3936 = vpack.c.b16 %v2840, %v2838
  %v3937 = vpack.c.b16 %v2841, %v2839
  %v3938 = vpack.c.b16 %v2844, %v2842
  %v3939 = vpack.c.b16 %v2845, %v2843
  %v3940 = vpack.c.b16 %v2848, %v2846
  %v3941 = vpack.c.b16 %v2849, %v2847
  %v3942 = vpack.c.b16 %v2852, %v2850
  %v3943 = vpack.c.b16 %v2853, %v2851
  %v3944 = vpack.c.b16 %v2856, %v2854
  %v3945 = vpack.c.b16 %v2857, %v2855
  %v3946 = vpack.c.b16 %v2860, %v2858
  %v3947 = vpack.c.b16 %v2861, %v2859
  %v3948 = vpack.c.b16 %v2864, %v2862
  %v3949 = vpack.c.b16 %v2865, %v2863
  %v3950 = vpack.c.b16 %v2868, %v2866
  %v3951 = vpack.c.b16 %v2869, %v2867
  %v3952 = vpack.c.b16 %v2872, %v2870
  %v3953 = vpack.c.b16 %v2873, %v2871
  %v3954 = vpack.c.b16 %v2876, %v2874
  %v3955 = vpack.c.b16 %v2877, %v2875
  %v3956 = vpack.c.b16 %v2880, %v2878
  %v3957 = vpack.c.b16 %v2881, %v2879
  %v3958 = vpack.c.b16 %v2884, %v2882
  %v3959 = vpack.c.b16 %v2885, %v2883
  %v3960 = vpack.c.b16 %v2888, %v2886
  %v3961 = vpack.c.b16 %v2889, %v2887
  %v3962 = vpack.c.b16 %v2892, %v2890
  %v3963 = vpack.c.b16 %v2893, %v2891
  %v3964 = vpack.c.b16 %v2896, %v2894
  %v3965 = vpack.c.b16 %v2897, %v2895
  %v3966 = vpack.c.b16 %v2900, %v2898
  %v3967 = vpack.c.b16 %v2901, %v2899
  %v3968 = vpack.c.b16 %v2904, %v2902
  %v3969 = vpack.c.b16 %v2905, %v2903
  %v3970 = vpack.c.b16 %v2908, %v2906
  %v3971 = vpack.c.b16 %v2909, %v2907
  %v3972 = vpack.c.b16 %v2912, %v2910
  %v3973 = vpack.c.b16 %v2913, %v2911
  %v3974 = vpack.c.b16 %v2916, %v2914
  %v3975 = vpack.c.b16 %v2917, %v2915
  %v3976 = vpack.c.b16 %v2920, %v2918
  %v3977 = vpack.c.b16 %v2921, %v2919
  %v3978 = vpack.c.b16 %v2924, %v2922
  %v3979 = vpack.c.b16 %v2925, %v2923
  %v3980 = vpack.c.b16 %v2928, %v2926
  %v3981 = vpack.c.b16 %v2929, %v2927
  %v3982 = vpack.c.b16 %v2932, %v2930
  %v3983 = vpack.c.b16 %v2933, %v2931
  %v3984 = vpack.c.b16 %v2936, %v2934
  %v3985 = vpack.c.b16 %v2937, %v2935
  %v3986 = vpack.c.b16 %v2940, %v2938
  %v3987 = vpack.c.b16 %v2941, %v2939
  %v3988 = vpack.c.b16 %v2944, %v2942
  %v3989 = vpack.c.b16 %v2945, %v2943
  %v3990 = vpack.c.b16 %v2948, %v2946
  %v3991 = vpack.c.b16 %v2949, %v2947
  %v3992 = vpack.c.b16 %v2952, %v2950
  %v3993 = vpack.c.b16 %v2953, %v2951
  %v3994 = vpack.c.b16 %v2956, %v2954
  %v3995 = vpack.c.b16 %v2957, %v2955
  %v3996 = vpack.c.b16 %v2960, %v2958
  %v3997 = vpack.c.b16 %v2961, %v2959
  %v3998 = vpack.c.b16 %v2964, %v2962
  %v3999 = vpack.c.b16 %v2965, %v2963
  %v4000 = vpack.c.b16 %v2968, %v2966
  %v4001 = vpack.c.b16 %v2969, %v2967
  %v4002 = vpack.c.b16 %v2972, %v2970
  %v4003 = vpack.c.b16 %v2973, %v2971
  %v4004 = vpack.c.b16 %v2976, %v2974
  %v4005 = vpack.c.b16 %v2977, %v2975
  %v4006 = vpack.c.b16 %v2980, %v2978
  %v4007 = vpack.c.b16 %v2981, %v2979
  %v4008 = vpack.c.b16 %v2984, %v2982
  %v4009 = vpack.c.b16 %v2985, %v2983
  %v4010 = vpack.c.b16 %v2988, %v2986
  %v4011 = vpack.c.b16 %v2989, %v2987
  %v4012 = vpack.c.b16 %v2992, %v2990
  %v4013 = vpack.c.b16 %v2993, %v2991
  %v4014 = vpack.c.b16 %v2996, %v2994
  %v4015 = vpack.c.b16 %v2997, %v2995
  %v4016 = vpack.c.b16 %v3000, %v2998
  %v4017 = vpack.c.b16 %v3001, %v2999
  %v4018 = vpack.c.b16 %v3004, %v3002
  %v4019 = vpack.c.b16 %v3005, %v3003
  %v4020 = vpack.c.b16 %v3008, %v3006
  %v4021 = vpack.c.b16 %v3009, %v3007
  %v4022 = vpack.c.b16 %v3012, %v3010
  %v4023 = vpack.c.b16 %v3013, %v3011
  %v4024 = vpack.c.b16 %v3016, %v3014
  %v4025 = vpack.c.b16 %v3017, %v3015
  %v4026 = vpack.c.b16 %v3020, %v3018
  %v4027 = vpack.c.b16 %v3021, %v3019
  %v4028 = vpack.c.b16 %v3024, %v3022
  %v4029 = vpack.c.b16 %v3025, %v3023
  %v4030 = vpack.c.b16 %v3028, %v3026
  %v4031 = vpack.c.b16 %v3029, %v3027
  %v4032 = vpack.c.b16 %v3032, %v3030
  %v4033 = vpack.c.b16 %v3033, %v3031
  %v4034 = vpack.c.b16 %v3036, %v3034
  %v4035 = vpack.c.b16 %v3037, %v3035
  %v4036 = vpack.c.b16 %v3040, %v3038
  %v4037 = vpack.c.b16 %v3041, %v3039
  %v4038 = vpack.c.b16 %v3044, %v3042
  %v4039 = vpack.c.b16 %v3045, %v3043
  %v4040 = vpack.c.b16 %v3048, %v3046
  %v4041 = vpack.c.b16 %v3049, %v3047
  %v4042 = vpack.c.b16 %v3052, %v3050
  %v4043 = vpack.c.b16 %v3053, %v3051
  %v4044 = vpack.c.b16 %v3056, %v3054
  %v4045 = vpack.c.b16 %v3057, %v3055
  %v4046 = vpack.c.b16 %v3060, %v3058
  %v4047 = vpack.c.b16 %v3061, %v3059
  %v4048 = vpack.c.b16 %v3064, %v3062
  %v4049 = vpack.c.b16 %v3065, %v3063
  %v4050 = vpack.c.b16 %v3068, %v3066
  %v4051 = vpack.c.b16 %v3069, %v3067
  %v4052 = vpack.c.b16 %v3072, %v3070
  %v4053 = vpack.c.b16 %v3073, %v3071
  %v4054 = vpack.c.b16 %v3076, %v3074
  %v4055 = vpack.c.b16 %v3077, %v3075
  %v4056 = vpack.c.b16 %v3080, %v3078
  %v4057 = vpack.c.b16 %v3081, %v3079
  %v4058 = vpack.c.b16 %v3084, %v3082
  %v4059 = vpack.c.b16 %v3085, %v3083
  %v4060 = vpack.c.b16 %v3088, %v3086
  %v4061 = vpack.c.b16 %v3089, %v3087
  %v4062 = vpack.c.b16 %v3092, %v3090
  %v4063 = vpack.c.b16 %v3093, %v3091
  %v4064 = vpack.c.b16 %v3096, %v3094
  %v4065 = vpack.c.b16 %v3097, %v3095
  %v4066 = vpack.c.b16 %v3100, %v3098
  %v4067 = vpack.c.b16 %v3101, %v3099
  %v4068 = vpack.c.b16 %v3104, %v3102
  %v4069 = vpack.c.b16 %v3105, %v3103
  %v4070 = vpack.c.b16 %v3108, %v3106
  %v4071 = vpack.c.b16 %v3109, %v3107
  %v4072 = vpack.c.b16 %v3112, %v3110
  %v4073 = vpack.c.b16 %v3113, %v3111
  %v4074 = vpack.c.b16 %v3116, %v3114
  %v4075 = vpack.c.b16 %v3117, %v3115
  %v4076 = vpack.c.b16 %v3120, %v3118
  %v4077 = vpack.c.b16 %v3121, %v3119
  %v4078 = vpack.c.b16 %v3124, %v3122
  %v4079 = vpack.c.b16 %v3125, %v3123
  %v4080 = vpack.c.b16 %v3128, %v3126
  %v4081 = vpack.c.b16 %v3129, %v3127
  %v4082 = vpack.c.b16 %v3132, %v3130
  %v4083 = vpack.c.b16 %v3133, %v3131
  %v4084 = vpack.c.b16 %v3136, %v3134
  %v4085 = vpack.c.b16 %v3137, %v3135
  %v4086 = vpack.c.b16 %v3140, %v3138
  %v4087 = vpack.c.b16 %v3141, %v3139
  %v4088 = vpack.c.b16 %v3144, %v3142
  %v4089 = vpack.c.b16 %v3145, %v3143
  %v4090 = vpack.c.b16 %v3148, %v3146
  %v4091 = vpack.c.b16 %v3149, %v3147
  %v4092 = vpack.c.b16 %v3152, %v3150
  %v4093 = vpack.c.b16 %v3153, %v3151
  %v4094 = vpack.c.b16 %v3156, %v3154
  %v4095 = vpack.c.b16 %v3157, %v3155
  %v4096 = vpack.c.b16 %v3160, %v3158
  %v4097 = vpack.c.b16 %v3161, %v3159
  %v4098 = vpack.c.b16 %v3164, %v3162
  %v4099 = vpack.c.b16 %v3165, %v3163
  %v4100 = vpack.c.b16 %v3168, %v3166
  %v4101 = vpack.c.b16 %v3169, %v3167
  %v4102 = vpack.c.b16 %v3172, %v3170
  %v4103 = vpack.c.b16 %v3173, %v3171
  %v4104 = vpack.c.b16 %v3176, %v3174
  %v4105 = vpack.c.b16 %v3177, %v3175
  %v4106 = vpack.c.b16 %v3180, %v3178
  %v4107 = vpack.c.b16 %v3181, %v3179
  %v4108 = vpack.c.b16 %v3184, %v3182
  %v4109 = vpack.c.b16 %v3185, %v3183
  %v4110 = vpack.c.b16 %v3188, %v3186
  %v4111 = vpack.c.b16 %v3189, %v3187
  %v4112 = vpack.c.b16 %v3192, %v3190
  %v4113 = vpack.c.b16 %v3193, %v3191
  %v4114 = vpack.c.b16 %v3196, %v3194
  %v4115 = vpack.c.b16 %v3197, %v3195
  %v4116 = vpack.c.b16 %v3200, %v3198
  %v4117 = vpack.c.b16 %v3201, %v3199
  %v4118 = vpack.c.b16 %v3204, %v3202
  %v4119 = vpack.c.b16 %v3205, %v3203
  %v4120 = vpack.c.b16 %v3208, %v3206
  %v4121 = vpack.c.b16 %v3209, %v3207
  %v4122 = vpack.c.b16 %v3212, %v3210
  %v4123 = vpack.c.b16 %v3213, %v3211
  %v4124 = vpack.c.b16 %v3216, %v3214
  %v4125 = vpack.c.b16 %v3217, %v3215
  %v4126 = vpack.c.b16 %v3220, %v3218
  %v4127 = vpack.c.b16 %v3221, %v3219
  %v4128 = vpack.c.b16 %v3224, %v3222
  %v4129 = vpack.c.b16 %v3225, %v3223
  %v4130 = vpack.c.b16 %v3228, %v3226
  %v4131 = vpack.c.b16 %v3229, %v3227
  %v4132 = vpack.c.b16 %v3232, %v3230
  %v4133 = vpack.c.b16 %v3233, %v3231
  %v4134 = vpack.c.b16 %v3236, %v3234
  %v4135 = vpack.c.b16 %v3237, %v3235
  %v4136 = vpack.c.b16 %v3240, %v3238
  %v4137 = vpack.c.b16 %v3241, %v3239
  %v4138 = vpack.c.b16 %v3244, %v3242
  %v4139 = vpack.c.b16 %v3245, %v3243
  %v4140 = vpack.c.b16 %v3248, %v3246
  %v4141 = vpack.c.b16 %v3249, %v3247
  %v4142 = vpack.c.b16 %v3252, %v3250
  %v4143 = vpack.c.b16 %v3253, %v3251
  %v4144 = vpack.c.b16 %v3256, %v3254
  %v4145 = vpack.c.b16 %v3257, %v3255
  %v4146 = vpack.c.b16 %v3260, %v3258
  %v4147 = vpack.c.b16 %v3261, %v3259
  %v4148 = vpack.c.b16 %v3264, %v3262
  %v4149 = vpack.c.b16 %v3265, %v3263
  %v4150 = vpack.c.b16 %v3268, %v3266
  %v4151 = vpack.c.b16 %v3269, %v3267
  %v4152 = vpack.c.b16 %v3272, %v3270
  %v4153 = vpack.c.b16 %v3273, %v3271
  %v4154 = vpack.c.b16 %v3276, %v3274
  %v4155 = vpack.c.b16 %v3277, %v3275
  %v4156 = vpack.c.b16 %v3280, %v3278
  %v4157 = vpack.c.b16 %v3281, %v3279
  %v4158 = vpack.c.b16 %v3284, %v3282
  %v4159 = vpack.c.b16 %v3285, %v3283
  %v4160 = vpack.c.b16 %v3288, %v3286
  %v4161 = vpack.c.b16 %v3289, %v3287
  %v4162 = vpack.c.b16 %v3292, %v3290
  %v4163 = vpack.c.b16 %v3293, %v3291
  %v4164 = vpack.c.b16 %v3296, %v3294
  %v4165 = vpack.c.b16 %v3297, %v3295
  %v4166 = vpack.c.b16 %v3300, %v3298
  %v4167 = vpack.c.b16 %v3301, %v3299
  %v4168 = vpack.c.b16 %v3304, %v3302
  %v4169 = vpack.c.b16 %v3305, %v3303
  %v4170 = vpack.c.b16 %v3308, %v3306
  %v4171 = vpack.c.b16 %v3309, %v3307
  %v4172 = vpack.c.b16 %v3312, %v3310
  %v4173 = vpack.c.b16 %v3313, %v3311
  %v4174 = vpack.c.b16 %v3316, %v3314
  %v4175 = vpack.c.b16 %v3317, %v3315
  %v4176 = vpack.c.b16 %v3320, %v3318
  %v4177 = vpack.c.b16 %v3321, %v3319
  %v4178 = vpack.c.b16 %v3324, %v3322
  %v4179 = vpack.c.b16 %v3325, %v3323
  %v4180 = vpack.c.b16 %v3328, %v3326
  %v4181 = vpack.c.b16 %v3329, %v3327
  %v4182 = vpack.c.b16 %v3332, %v3330
  %v4183 = vpack.c.b16 %v3333, %v3331
  %v4184 = vpack.c.b16 %v3336, %v3334
  %v4185 = vpack.c.b16 %v3337, %v3335
  %v4186 = vpack.c.b16 %v3340, %v3338
  %v4187 = vpack.c.b16 %v3341, %v3339
  %v4188 = vpack.c.b16 %v3344, %v3342
  %v4189 = vpack.c.b16 %v3345, %v3343
  %v4190 = vpack.c.b16 %v3348, %v3346
  %v4191 = vpack.c.b16 %v3349, %v3347
  %v4192 = vpack.c.b16 %v3352, %v3350
  %v4193 = vpack.c.b16 %v3353, %v3351
  %v4194 = vpack.c.b16 %v3356, %v3354
  %v4195 = vpack.c.b16 %v3357, %v3355
  %v4196 = vpack.c.b16 %v3360, %v3358
  %v4197 = vpack.c.b16 %v3361, %v3359
  %v4198 = vpack.c.b16 %v3364, %v3362
  %v4199 = vpack.c.b16 %v3365, %v3363
  %v4200 = vpack.c.b16 %v3368, %v3366
  %v4201 = vpack.c.b16 %v3369, %v3367
  %v4202 = vpack.c.b16 %v3372, %v3370
  %v4203 = vpack.c.b16 %v3373, %v3371
  %v4204 = vpack.c.b16 %v3376, %v3374
  %v4205 = vpack.c.b16 %v3377, %v3375
  %v4206 = vpack.c.b16 %v3380, %v3378
  %v4207 = vpack.c.b16 %v3381, %v3379
  %v4208 = vpack.c.b16 %v3384, %v3382
  %v4209 = vpack.c.b16 %v3385, %v3383
  %v4210 = vpack.c.b16 %v3388, %v3386
  %v4211 = vpack.c.b16 %v3389, %v3387
  %v4212 = vpack.c.b16 %v3392, %v3390
  %v4213 = vpack.c.b16 %v3393, %v3391
  %v4214 = vpack.c.b16 %v3396, %v3394
  %v4215 = vpack.c.b16 %v3397, %v3395
  %v4216 = vpack.c.b16 %v3400, %v3398
  %v4217 = vpack.c.b16 %v3401, %v3399
  %v4218 = vpack.c.b16 %v3404, %v3402
  %v4219 = vpack.c.b16 %v3405, %v3403
  %v4220 = vpack.c.b16 %v3408, %v3406
  %v4221 = vpack.c.b16 %v3409, %v3407
  %v4222 = vpack.c.b16 %v3412, %v3410
  %v4223 = vpack.c.b16 %v3413, %v3411
  %v4224 = vpack.c.b16 %v3416, %v3414
  %v4225 = vpack.c.b16 %v3417, %v3415
  %v4226 = vpack.c.b16 %v3420, %v3418
  %v4227 = vpack.c.b16 %v3421, %v3419
  %v4228 = vpack.c.b16 %v3424, %v3422
  %v4229 = vpack.c.b16 %v3425, %v3423
  %v4230 = vpack.c.b16 %v3428, %v3426
  %v4231 = vpack.c.b16 %v3429, %v3427
  %v4232 = vpack.c.b16 %v3432, %v3430
  %v4233 = vpack.c.b16 %v3433, %v3431
  %5034 = vmatprep.subr.bf16.mxu0 %v3435
  %5035 = vmatpush1.bf16.msra.mxu0 %v3434
  %5036 = vmatprep.subr.bf16.mxu0 %v3437
  %5037 = vmatpush1.bf16.msra.mxu0 %v3436
  %5038 = vmatprep.subr.bf16.mxu0 %v3439
  %5039 = vmatpush1.bf16.msra.mxu0 %v3438
  %5040 = vmatprep.subr.bf16.mxu0 %v3441
  %5041 = vmatpush1.bf16.msra.mxu0 %v3440
  %5042 = vmatprep.subr.bf16.mxu0 %v3443
  %5043 = vmatpush1.bf16.msra.mxu0 %v3442
  %5044 = vmatprep.subr.bf16.mxu0 %v3445
  %5045 = vmatpush1.bf16.msra.mxu0 %v3444
  %5046 = vmatprep.subr.bf16.mxu0 %v3447
  %5047 = vmatpush1.bf16.msra.mxu0 %v3446
  %5048 = vmatprep.subr.bf16.mxu0 %v3449
  %5049 = vmatpush1.bf16.msra.mxu0 %v3448
  %5050 = vmatprep.subr.bf16.mxu0 %v3451
  %5051 = vmatpush1.bf16.msra.mxu0 %v3450
  %5052 = vmatprep.subr.bf16.mxu0 %v3453
  %5053 = vmatpush1.bf16.msra.mxu0 %v3452
  %5054 = vmatprep.subr.bf16.mxu0 %v3455
  %5055 = vmatpush1.bf16.msra.mxu0 %v3454
  %5056 = vmatprep.subr.bf16.mxu0 %v3457
  %5057 = vmatpush1.bf16.msra.mxu0 %v3456
  %5058 = vmatprep.subr.bf16.mxu0 %v3459
  %5059 = vmatpush1.bf16.msra.mxu0 %v3458
  %5060 = vmatprep.subr.bf16.mxu0 %v3461
  %5061 = vmatpush1.bf16.msra.mxu0 %v3460
  %5062 = vmatprep.subr.bf16.mxu0 %v3463
  %5063 = vmatpush1.bf16.msra.mxu0 %v3462
  %5064 = vmatprep.subr.bf16.mxu0 %v3465
  %5065 = vmatpush1.bf16.msra.mxu0 %v3464
  %5066 = vmatprep.mubr.bf16.mxu0 %v935
  %5067 = vmatmul.mubr.bf16.gmra.mrb[0].mxu0 %v934
  %v5068 = vpop.f32.mrb[0].mxu0
  %v5069 = vadd.f32 %v852, %v5068
  %v5070 = vpop.f32.mrb[0].mxu0
  %v5071 = vadd.f32 %v856, %v5070
  %v5072 = vpop.f32.mrb[0].mxu0
  %v5073 = vpop.f32.mrb[0].mxu0
  %5074 = vdwg.mxu0
  %5075 = vmatprep.subr.bf16.mxu0 %v3467
  %5076 = vmatpush1.bf16.msra.mxu0 %v3466
  %5077 = vmatprep.subr.bf16.mxu0 %v3469
  %5078 = vmatpush1.bf16.msra.mxu0 %v3468
  %5079 = vmatprep.subr.bf16.mxu0 %v3471
  %5080 = vmatpush1.bf16.msra.mxu0 %v3470
  %5081 = vmatprep.subr.bf16.mxu0 %v3473
  %5082 = vmatpush1.bf16.msra.mxu0 %v3472
  %5083 = vmatprep.subr.bf16.mxu0 %v3475
  %5084 = vmatpush1.bf16.msra.mxu0 %v3474
  %5085 = vmatprep.subr.bf16.mxu0 %v3477
  %5086 = vmatpush1.bf16.msra.mxu0 %v3476
  %5087 = vmatprep.subr.bf16.mxu0 %v3479
  %5088 = vmatpush1.bf16.msra.mxu0 %v3478
  %5089 = vmatprep.subr.bf16.mxu0 %v3481
  %5090 = vmatpush1.bf16.msra.mxu0 %v3480
  %5091 = vmatprep.subr.bf16.mxu0 %v3483
  %5092 = vmatpush1.bf16.msra.mxu0 %v3482
  %5093 = vmatprep.subr.bf16.mxu0 %v3485
  %5094 = vmatpush1.bf16.msra.mxu0 %v3484
  %5095 = vmatprep.subr.bf16.mxu0 %v3487
  %5096 = vmatpush1.bf16.msra.mxu0 %v3486
  %5097 = vmatprep.subr.bf16.mxu0 %v3489
  %5098 = vmatpush1.bf16.msra.mxu0 %v3488
  %5099 = vmatprep.subr.bf16.mxu0 %v3491
  %5100 = vmatpush1.bf16.msra.mxu0 %v3490
  %5101 = vmatprep.subr.bf16.mxu0 %v3493
  %5102 = vmatpush1.bf16.msra.mxu0 %v3492
  %5103 = vmatprep.subr.bf16.mxu0 %v3495
  %5104 = vmatpush1.bf16.msra.mxu0 %v3494
  %5105 = vmatprep.subr.bf16.mxu0 %v3497
  %5106 = vmatpush1.bf16.msra.mxu0 %v3496
  %5107 = vmatprep.mubr.bf16.mxu0 %v937
  %5108 = vmatmul.mubr.bf16.gmra.mrb[0].mxu0 %v936
  %v5109 = vpop.f32.mrb[0].mxu0
  %v5110 = vadd.f32 %v5069, %v5109
  %v5111 = vpop.f32.mrb[0].mxu0
  %v5112 = vadd.f32 %v5071, %v5111
  %v5113 = vpop.f32.mrb[0].mxu0
  %v5114 = vpop.f32.mrb[0].mxu0
  %5115 = vdwg.mxu0
  %5116 = vmatprep.subr.bf16.mxu0 %v3499
  %5117 = vmatpush1.bf16.msra.mxu0 %v3498
  %5118 = vmatprep.subr.bf16.mxu0 %v3501
  %5119 = vmatpush1.bf16.msra.mxu0 %v3500
  %5120 = vmatprep.subr.bf16.mxu0 %v3503
  %5121 = vmatpush1.bf16.msra.mxu0 %v3502
  %5122 = vmatprep.subr.bf16.mxu0 %v3505
  %5123 = vmatpush1.bf16.msra.mxu0 %v3504
  %5124 = vmatprep.subr.bf16.mxu0 %v3507
  %5125 = vmatpush1.bf16.msra.mxu0 %v3506
  %5126 = vmatprep.subr.bf16.mxu0 %v3509
  %5127 = vmatpush1.bf16.msra.mxu0 %v3508
  %5128 = vmatprep.subr.bf16.mxu0 %v3511
  %5129 = vmatpush1.bf16.msra.mxu0 %v3510
  %5130 = vmatprep.subr.bf16.mxu0 %v3513
  %5131 = vmatpush1.bf16.msra.mxu0 %v3512
  %5132 = vmatprep.subr.bf16.mxu0 %v3515
  %5133 = vmatpush1.bf16.msra.mxu0 %v3514
  %5134 = vmatprep.subr.bf16.mxu0 %v3517
  %5135 = vmatpush1.bf16.msra.mxu0 %v3516
  %5136 = vmatprep.subr.bf16.mxu0 %v3519
  %5137 = vmatpush1.bf16.msra.mxu0 %v3518
  %5138 = vmatprep.subr.bf16.mxu0 %v3521
  %5139 = vmatpush1.bf16.msra.mxu0 %v3520
  %5140 = vmatprep.subr.bf16.mxu0 %v3523
  %5141 = vmatpush1.bf16.msra.mxu0 %v3522
  %5142 = vmatprep.subr.bf16.mxu0 %v3525
  %5143 = vmatpush1.bf16.msra.mxu0 %v3524
  %5144 = vmatprep.subr.bf16.mxu0 %v3527
  %5145 = vmatpush1.bf16.msra.mxu0 %v3526
  %5146 = vmatprep.subr.bf16.mxu0 %v3529
  %5147 = vmatpush1.bf16.msra.mxu0 %v3528
  %5148 = vmatprep.mubr.bf16.mxu0 %v939
  %5149 = vmatmul.mubr.bf16.gmra.mrb[0].mxu0 %v938
  %v5150 = vpop.f32.mrb[0].mxu0
  %v5151 = vadd.f32 %v5110, %v5150
  %v5152 = vpop.f32.mrb[0].mxu0
  %v5153 = vadd.f32 %v5112, %v5152
  %v5154 = vpop.f32.mrb[0].mxu0
  %v5155 = vpop.f32.mrb[0].mxu0
  %5156 = vdwg.mxu0
  %5157 = vmatprep.subr.bf16.mxu0 %v3531
  %5158 = vmatpush1.bf16.msra.mxu0 %v3530
  %5159 = vmatprep.subr.bf16.mxu0 %v3533
  %5160 = vmatpush1.bf16.msra.mxu0 %v3532
  %5161 = vmatprep.subr.bf16.mxu0 %v3535
  %5162 = vmatpush1.bf16.msra.mxu0 %v3534
  %5163 = vmatprep.subr.bf16.mxu0 %v3537
  %5164 = vmatpush1.bf16.msra.mxu0 %v3536
  %5165 = vmatprep.subr.bf16.mxu0 %v3539
  %5166 = vmatpush1.bf16.msra.mxu0 %v3538
  %5167 = vmatprep.subr.bf16.mxu0 %v3541
  %5168 = vmatpush1.bf16.msra.mxu0 %v3540
  %5169 = vmatprep.subr.bf16.mxu0 %v3543
  %5170 = vmatpush1.bf16.msra.mxu0 %v3542
  %5171 = vmatprep.subr.bf16.mxu0 %v3545
  %5172 = vmatpush1.bf16.msra.mxu0 %v3544
  %5173 = vmatprep.subr.bf16.mxu0 %v3547
  %5174 = vmatpush1.bf16.msra.mxu0 %v3546
  %5175 = vmatprep.subr.bf16.mxu0 %v3549
  %5176 = vmatpush1.bf16.msra.mxu0 %v3548
  %5177 = vmatprep.subr.bf16.mxu0 %v3551
  %5178 = vmatpush1.bf16.msra.mxu0 %v3550
  %5179 = vmatprep.subr.bf16.mxu0 %v3553
  %5180 = vmatpush1.bf16.msra.mxu0 %v3552
  %5181 = vmatprep.subr.bf16.mxu0 %v3555
  %5182 = vmatpush1.bf16.msra.mxu0 %v3554
  %5183 = vmatprep.subr.bf16.mxu0 %v3557
  %5184 = vmatpush1.bf16.msra.mxu0 %v3556
  %5185 = vmatprep.subr.bf16.mxu0 %v3559
  %5186 = vmatpush1.bf16.msra.mxu0 %v3558
  %5187 = vmatprep.subr.bf16.mxu0 %v3561
  %5188 = vmatpush1.bf16.msra.mxu0 %v3560
  %5189 = vmatprep.mubr.bf16.mxu0 %v941
  %5190 = vmatmul.mubr.bf16.gmra.mrb[0].mxu0 %v940
  %v5191 = vpop.f32.mrb[0].mxu0
  %v5192 = vadd.f32 %v5151, %v5191
  %v5193 = vpop.f32.mrb[0].mxu0
  %v5194 = vadd.f32 %v5153, %v5193
  %v5195 = vpop.f32.mrb[0].mxu0
  %v5196 = vpop.f32.mrb[0].mxu0
  %5197 = vdwg.mxu0
  %5198 = vmatprep.subr.bf16.mxu0 %v3563
  %5199 = vmatpush1.bf16.msra.mxu0 %v3562
  %5200 = vmatprep.subr.bf16.mxu0 %v3565
  %5201 = vmatpush1.bf16.msra.mxu0 %v3564
  %5202 = vmatprep.subr.bf16.mxu0 %v3567
  %5203 = vmatpush1.bf16.msra.mxu0 %v3566
  %5204 = vmatprep.subr.bf16.mxu0 %v3569
  %5205 = vmatpush1.bf16.msra.mxu0 %v3568
  %5206 = vmatprep.subr.bf16.mxu0 %v3571
  %5207 = vmatpush1.bf16.msra.mxu0 %v3570
  %5208 = vmatprep.subr.bf16.mxu0 %v3573
  %5209 = vmatpush1.bf16.msra.mxu0 %v3572
  %5210 = vmatprep.subr.bf16.mxu0 %v3575
  %5211 = vmatpush1.bf16.msra.mxu0 %v3574
  %5212 = vmatprep.subr.bf16.mxu0 %v3577
  %5213 = vmatpush1.bf16.msra.mxu0 %v3576
  %5214 = vmatprep.subr.bf16.mxu0 %v3579
  %5215 = vmatpush1.bf16.msra.mxu0 %v3578
  %5216 = vmatprep.subr.bf16.mxu0 %v3581
  %5217 = vmatpush1.bf16.msra.mxu0 %v3580
  %5218 = vmatprep.subr.bf16.mxu0 %v3583
  %5219 = vmatpush1.bf16.msra.mxu0 %v3582
  %5220 = vmatprep.subr.bf16.mxu0 %v3585
  %5221 = vmatpush1.bf16.msra.mxu0 %v3584
  %5222 = vmatprep.subr.bf16.mxu0 %v3587
  %5223 = vmatpush1.bf16.msra.mxu0 %v3586
  %5224 = vmatprep.subr.bf16.mxu0 %v3589
  %5225 = vmatpush1.bf16.msra.mxu0 %v3588
  %5226 = vmatprep.subr.bf16.mxu0 %v3591
  %5227 = vmatpush1.bf16.msra.mxu0 %v3590
  %5228 = vmatprep.subr.bf16.mxu0 %v3593
  %5229 = vmatpush1.bf16.msra.mxu0 %v3592
  %5230 = vmatprep.mubr.bf16.mxu0 %v943
  %5231 = vmatmul.mubr.bf16.gmra.mrb[0].mxu0 %v942
  %v5232 = vpop.f32.mrb[0].mxu0
  %v5233 = vadd.f32 %v5192, %v5232
  %v5234 = vpop.f32.mrb[0].mxu0
  %v5235 = vadd.f32 %v5194, %v5234
  %v5236 = vpop.f32.mrb[0].mxu0
  %v5237 = vpop.f32.mrb[0].mxu0
  %5238 = vdwg.mxu0
  %5239 = vmatprep.subr.bf16.mxu0 %v3595
  %5240 = vmatpush1.bf16.msra.mxu0 %v3594
  %5241 = vmatprep.subr.bf16.mxu0 %v3597
  %5242 = vmatpush1.bf16.msra.mxu0 %v3596
  %5243 = vmatprep.subr.bf16.mxu0 %v3599
  %5244 = vmatpush1.bf16.msra.mxu0 %v3598
  %5245 = vmatprep.subr.bf16.mxu0 %v3601
  %5246 = vmatpush1.bf16.msra.mxu0 %v3600
  %5247 = vmatprep.subr.bf16.mxu0 %v3603
  %5248 = vmatpush1.bf16.msra.mxu0 %v3602
  %5249 = vmatprep.subr.bf16.mxu0 %v3605
  %5250 = vmatpush1.bf16.msra.mxu0 %v3604
  %5251 = vmatprep.subr.bf16.mxu0 %v3607
  %5252 = vmatpush1.bf16.msra.mxu0 %v3606
  %5253 = vmatprep.subr.bf16.mxu0 %v3609
  %5254 = vmatpush1.bf16.msra.mxu0 %v3608
  %5255 = vmatprep.subr.bf16.mxu0 %v3611
  %5256 = vmatpush1.bf16.msra.mxu0 %v3610
  %5257 = vmatprep.subr.bf16.mxu0 %v3613
  %5258 = vmatpush1.bf16.msra.mxu0 %v3612
  %5259 = vmatprep.subr.bf16.mxu0 %v3615
  %5260 = vmatpush1.bf16.msra.mxu0 %v3614
  %5261 = vmatprep.subr.bf16.mxu0 %v3617
  %5262 = vmatpush1.bf16.msra.mxu0 %v3616
  %5263 = vmatprep.subr.bf16.mxu0 %v3619
  %5264 = vmatpush1.bf16.msra.mxu0 %v3618
  %5265 = vmatprep.subr.bf16.mxu0 %v3621
  %5266 = vmatpush1.bf16.msra.mxu0 %v3620
  %5267 = vmatprep.subr.bf16.mxu0 %v3623
  %5268 = vmatpush1.bf16.msra.mxu0 %v3622
  %5269 = vmatprep.subr.bf16.mxu0 %v3625
  %5270 = vmatpush1.bf16.msra.mxu0 %v3624
  %5271 = vmatprep.mubr.bf16.mxu0 %v945
  %5272 = vmatmul.mubr.bf16.gmra.mrb[0].mxu0 %v944
  %v5273 = vpop.f32.mrb[0].mxu0
  %v5274 = vadd.f32 %v5233, %v5273
  %v5275 = vpop.f32.mrb[0].mxu0
  %v5276 = vadd.f32 %v5235, %v5275
  %v5277 = vpop.f32.mrb[0].mxu0
  %v5278 = vpop.f32.mrb[0].mxu0
  %5279 = vdwg.mxu0
  %5280 = vmatprep.subr.bf16.mxu0 %v3627
  %5281 = vmatpush1.bf16.msra.mxu0 %v3626
  %5282 = vmatprep.subr.bf16.mxu0 %v3629
  %5283 = vmatpush1.bf16.msra.mxu0 %v3628
  %5284 = vmatprep.subr.bf16.mxu0 %v3631
  %5285 = vmatpush1.bf16.msra.mxu0 %v3630
  %5286 = vmatprep.subr.bf16.mxu0 %v3633
  %5287 = vmatpush1.bf16.msra.mxu0 %v3632
  %5288 = vmatprep.subr.bf16.mxu0 %v3635
  %5289 = vmatpush1.bf16.msra.mxu0 %v3634
  %5290 = vmatprep.subr.bf16.mxu0 %v3637
  %5291 = vmatpush1.bf16.msra.mxu0 %v3636
  %5292 = vmatprep.subr.bf16.mxu0 %v3639
  %5293 = vmatpush1.bf16.msra.mxu0 %v3638
  %5294 = vmatprep.subr.bf16.mxu0 %v3641
  %5295 = vmatpush1.bf16.msra.mxu0 %v3640
  %5296 = vmatprep.subr.bf16.mxu0 %v3643
  %5297 = vmatpush1.bf16.msra.mxu0 %v3642
  %5298 = vmatprep.subr.bf16.mxu0 %v3645
  %5299 = vmatpush1.bf16.msra.mxu0 %v3644
  %5300 = vmatprep.subr.bf16.mxu0 %v3647
  %5301 = vmatpush1.bf16.msra.mxu0 %v3646
  %5302 = vmatprep.subr.bf16.mxu0 %v3649
  %5303 = vmatpush1.bf16.msra.mxu0 %v3648
  %5304 = vmatprep.subr.bf16.mxu0 %v3651
  %5305 = vmatpush1.bf16.msra.mxu0 %v3650
  %5306 = vmatprep.subr.bf16.mxu0 %v3653
  %5307 = vmatpush1.bf16.msra.mxu0 %v3652
  %5308 = vmatprep.subr.bf16.mxu0 %v3655
  %5309 = vmatpush1.bf16.msra.mxu0 %v3654
  %5310 = vmatprep.subr.bf16.mxu0 %v3657
  %5311 = vmatpush1.bf16.msra.mxu0 %v3656
  %5312 = vmatprep.mubr.bf16.mxu0 %v947
  %5313 = vmatmul.mubr.bf16.gmra.mrb[0].mxu0 %v946
  %v5314 = vpop.f32.mrb[0].mxu0
  %v5315 = vadd.f32 %v5274, %v5314
  %v5316 = vpop.f32.mrb[0].mxu0
  %v5317 = vadd.f32 %v5276, %v5316
  %v5318 = vpop.f32.mrb[0].mxu0
  %v5319 = vpop.f32.mrb[0].mxu0
  %5320 = vdwg.mxu0
  %5321 = vmatprep.subr.bf16.mxu0 %v3659
  %5322 = vmatpush1.bf16.msra.mxu0 %v3658
  %5323 = vmatprep.subr.bf16.mxu0 %v3661
  %5324 = vmatpush1.bf16.msra.mxu0 %v3660
  %5325 = vmatprep.subr.bf16.mxu0 %v3663
  %5326 = vmatpush1.bf16.msra.mxu0 %v3662
  %5327 = vmatprep.subr.bf16.mxu0 %v3665
  %5328 = vmatpush1.bf16.msra.mxu0 %v3664
  %5329 = vmatprep.subr.bf16.mxu0 %v3667
  %5330 = vmatpush1.bf16.msra.mxu0 %v3666
  %5331 = vmatprep.subr.bf16.mxu0 %v3669
  %5332 = vmatpush1.bf16.msra.mxu0 %v3668
  %5333 = vmatprep.subr.bf16.mxu0 %v3671
  %5334 = vmatpush1.bf16.msra.mxu0 %v3670
  %5335 = vmatprep.subr.bf16.mxu0 %v3673
  %5336 = vmatpush1.bf16.msra.mxu0 %v3672
  %5337 = vmatprep.subr.bf16.mxu0 %v3675
  %5338 = vmatpush1.bf16.msra.mxu0 %v3674
  %5339 = vmatprep.subr.bf16.mxu0 %v3677
  %5340 = vmatpush1.bf16.msra.mxu0 %v3676
  %5341 = vmatprep.subr.bf16.mxu0 %v3679
  %5342 = vmatpush1.bf16.msra.mxu0 %v3678
  %5343 = vmatprep.subr.bf16.mxu0 %v3681
  %5344 = vmatpush1.bf16.msra.mxu0 %v3680
  %5345 = vmatprep.subr.bf16.mxu0 %v3683
  %5346 = vmatpush1.bf16.msra.mxu0 %v3682
  %5347 = vmatprep.subr.bf16.mxu0 %v3685
  %5348 = vmatpush1.bf16.msra.mxu0 %v3684
  %5349 = vmatprep.subr.bf16.mxu0 %v3687
  %5350 = vmatpush1.bf16.msra.mxu0 %v3686
  %5351 = vmatprep.subr.bf16.mxu0 %v3689
  %5352 = vmatpush1.bf16.msra.mxu0 %v3688
  %5353 = vmatprep.mubr.bf16.mxu0 %v949
  %5354 = vmatmul.mubr.bf16.gmra.mrb[0].mxu0 %v948
  %v5355 = vpop.f32.mrb[0].mxu0
  %v5356 = vadd.f32 %v5315, %v5355
  %v5357 = vpop.f32.mrb[0].mxu0
  %v5358 = vadd.f32 %v5317, %v5357
  %v5359 = vpop.f32.mrb[0].mxu0
  %v5360 = vpop.f32.mrb[0].mxu0
  %5361 = vdwg.mxu0
  %5362 = vmatprep.subr.bf16.mxu0 %v3691
  %5363 = vmatpush1.bf16.msra.mxu0 %v3690
  %5364 = vmatprep.subr.bf16.mxu0 %v3693
  %5365 = vmatpush1.bf16.msra.mxu0 %v3692
  %5366 = vmatprep.subr.bf16.mxu0 %v3695
  %5367 = vmatpush1.bf16.msra.mxu0 %v3694
  %5368 = vmatprep.subr.bf16.mxu0 %v3697
  %5369 = vmatpush1.bf16.msra.mxu0 %v3696
  %5370 = vmatprep.subr.bf16.mxu0 %v3699
  %5371 = vmatpush1.bf16.msra.mxu0 %v3698
  %5372 = vmatprep.subr.bf16.mxu0 %v3701
  %5373 = vmatpush1.bf16.msra.mxu0 %v3700
  %5374 = vmatprep.subr.bf16.mxu0 %v3703
  %5375 = vmatpush1.bf16.msra.mxu0 %v3702
  %5376 = vmatprep.subr.bf16.mxu0 %v3705
  %5377 = vmatpush1.bf16.msra.mxu0 %v3704
  %5378 = vmatprep.subr.bf16.mxu0 %v3707
  %5379 = vmatpush1.bf16.msra.mxu0 %v3706
  %5380 = vmatprep.subr.bf16.mxu0 %v3709
  %5381 = vmatpush1.bf16.msra.mxu0 %v3708
  %5382 = vmatprep.subr.bf16.mxu0 %v3711
  %5383 = vmatpush1.bf16.msra.mxu0 %v3710
  %5384 = vmatprep.subr.bf16.mxu0 %v3713
  %5385 = vmatpush1.bf16.msra.mxu0 %v3712
  %5386 = vmatprep.subr.bf16.mxu0 %v3715
  %5387 = vmatpush1.bf16.msra.mxu0 %v3714
  %5388 = vmatprep.subr.bf16.mxu0 %v3717
  %5389 = vmatpush1.bf16.msra.mxu0 %v3716
  %5390 = vmatprep.subr.bf16.mxu0 %v3719
  %5391 = vmatpush1.bf16.msra.mxu0 %v3718
  %5392 = vmatprep.subr.bf16.mxu0 %v3721
  %5393 = vmatpush1.bf16.msra.mxu0 %v3720
  %5394 = vmatprep.mubr.bf16.mxu0 %v951
  %5395 = vmatmul.mubr.bf16.gmra.mrb[0].mxu0 %v950
  %v5396 = vpop.f32.mrb[0].mxu0
  %v5397 = vadd.f32 %v5356, %v5396
  %v5398 = vpop.f32.mrb[0].mxu0
  %v5399 = vadd.f32 %v5358, %v5398
  %v5400 = vpop.f32.mrb[0].mxu0
  %v5401 = vpop.f32.mrb[0].mxu0
  %5402 = vdwg.mxu0
  %5403 = vmatprep.subr.bf16.mxu0 %v3723
  %5404 = vmatpush1.bf16.msra.mxu0 %v3722
  %5405 = vmatprep.subr.bf16.mxu0 %v3725
  %5406 = vmatpush1.bf16.msra.mxu0 %v3724
  %5407 = vmatprep.subr.bf16.mxu0 %v3727
  %5408 = vmatpush1.bf16.msra.mxu0 %v3726
  %5409 = vmatprep.subr.bf16.mxu0 %v3729
  %5410 = vmatpush1.bf16.msra.mxu0 %v3728
  %5411 = vmatprep.subr.bf16.mxu0 %v3731
  %5412 = vmatpush1.bf16.msra.mxu0 %v3730
  %5413 = vmatprep.subr.bf16.mxu0 %v3733
  %5414 = vmatpush1.bf16.msra.mxu0 %v3732
  %5415 = vmatprep.subr.bf16.mxu0 %v3735
  %5416 = vmatpush1.bf16.msra.mxu0 %v3734
  %5417 = vmatprep.subr.bf16.mxu0 %v3737
  %5418 = vmatpush1.bf16.msra.mxu0 %v3736
  %5419 = vmatprep.subr.bf16.mxu0 %v3739
  %5420 = vmatpush1.bf16.msra.mxu0 %v3738
  %5421 = vmatprep.subr.bf16.mxu0 %v3741
  %5422 = vmatpush1.bf16.msra.mxu0 %v3740
  %5423 = vmatprep.subr.bf16.mxu0 %v3743
  %5424 = vmatpush1.bf16.msra.mxu0 %v3742
  %5425 = vmatprep.subr.bf16.mxu0 %v3745
  %5426 = vmatpush1.bf16.msra.mxu0 %v3744
  %5427 = vmatprep.subr.bf16.mxu0 %v3747
  %5428 = vmatpush1.bf16.msra.mxu0 %v3746
  %5429 = vmatprep.subr.bf16.mxu0 %v3749
  %5430 = vmatpush1.bf16.msra.mxu0 %v3748
  %5431 = vmatprep.subr.bf16.mxu0 %v3751
  %5432 = vmatpush1.bf16.msra.mxu0 %v3750
  %5433 = vmatprep.subr.bf16.mxu0 %v3753
  %5434 = vmatpush1.bf16.msra.mxu0 %v3752
  %5435 = vmatprep.mubr.bf16.mxu0 %v953
  %5436 = vmatmul.mubr.bf16.gmra.mrb[0].mxu0 %v952
  %v5437 = vpop.f32.mrb[0].mxu0
  %v5438 = vadd.f32 %v5397, %v5437
  %v5439 = vpop.f32.mrb[0].mxu0
  %v5440 = vadd.f32 %v5399, %v5439
  %v5441 = vpop.f32.mrb[0].mxu0
  %v5442 = vpop.f32.mrb[0].mxu0
  %5443 = vdwg.mxu0
  %5444 = vmatprep.subr.bf16.mxu0 %v3755
  %5445 = vmatpush1.bf16.msra.mxu0 %v3754
  %5446 = vmatprep.subr.bf16.mxu0 %v3757
  %5447 = vmatpush1.bf16.msra.mxu0 %v3756
  %5448 = vmatprep.subr.bf16.mxu0 %v3759
  %5449 = vmatpush1.bf16.msra.mxu0 %v3758
  %5450 = vmatprep.subr.bf16.mxu0 %v3761
  %5451 = vmatpush1.bf16.msra.mxu0 %v3760
  %5452 = vmatprep.subr.bf16.mxu0 %v3763
  %5453 = vmatpush1.bf16.msra.mxu0 %v3762
  %5454 = vmatprep.subr.bf16.mxu0 %v3765
  %5455 = vmatpush1.bf16.msra.mxu0 %v3764
  %5456 = vmatprep.subr.bf16.mxu0 %v3767
  %5457 = vmatpush1.bf16.msra.mxu0 %v3766
  %5458 = vmatprep.subr.bf16.mxu0 %v3769
  %5459 = vmatpush1.bf16.msra.mxu0 %v3768
  %5460 = vmatprep.subr.bf16.mxu0 %v3771
  %5461 = vmatpush1.bf16.msra.mxu0 %v3770
  %5462 = vmatprep.subr.bf16.mxu0 %v3773
  %5463 = vmatpush1.bf16.msra.mxu0 %v3772
  %5464 = vmatprep.subr.bf16.mxu0 %v3775
  %5465 = vmatpush1.bf16.msra.mxu0 %v3774
  %5466 = vmatprep.subr.bf16.mxu0 %v3777
  %5467 = vmatpush1.bf16.msra.mxu0 %v3776
  %5468 = vmatprep.subr.bf16.mxu0 %v3779
  %5469 = vmatpush1.bf16.msra.mxu0 %v3778
  %5470 = vmatprep.subr.bf16.mxu0 %v3781
  %5471 = vmatpush1.bf16.msra.mxu0 %v3780
  %5472 = vmatprep.subr.bf16.mxu0 %v3783
  %5473 = vmatpush1.bf16.msra.mxu0 %v3782
  %5474 = vmatprep.subr.bf16.mxu0 %v3785
  %5475 = vmatpush1.bf16.msra.mxu0 %v3784
  %5476 = vmatprep.mubr.bf16.mxu0 %v955
  %5477 = vmatmul.mubr.bf16.gmra.mrb[0].mxu0 %v954
  %v5478 = vpop.f32.mrb[0].mxu0
  %v5479 = vadd.f32 %v5438, %v5478
  %v5480 = vpop.f32.mrb[0].mxu0
  %v5481 = vadd.f32 %v5440, %v5480
  %v5482 = vpop.f32.mrb[0].mxu0
  %v5483 = vpop.f32.mrb[0].mxu0
  %5484 = vdwg.mxu0
  %5485 = vmatprep.subr.bf16.mxu0 %v3787
  %5486 = vmatpush1.bf16.msra.mxu0 %v3786
  %5487 = vmatprep.subr.bf16.mxu0 %v3789
  %5488 = vmatpush1.bf16.msra.mxu0 %v3788
  %5489 = vmatprep.subr.bf16.mxu0 %v3791
  %5490 = vmatpush1.bf16.msra.mxu0 %v3790
  %5491 = vmatprep.subr.bf16.mxu0 %v3793
  %5492 = vmatpush1.bf16.msra.mxu0 %v3792
  %5493 = vmatprep.subr.bf16.mxu0 %v3795
  %5494 = vmatpush1.bf16.msra.mxu0 %v3794
  %5495 = vmatprep.subr.bf16.mxu0 %v3797
  %5496 = vmatpush1.bf16.msra.mxu0 %v3796
  %5497 = vmatprep.subr.bf16.mxu0 %v3799
  %5498 = vmatpush1.bf16.msra.mxu0 %v3798
  %5499 = vmatprep.subr.bf16.mxu0 %v3801
  %5500 = vmatpush1.bf16.msra.mxu0 %v3800
  %5501 = vmatprep.subr.bf16.mxu0 %v3803
  %5502 = vmatpush1.bf16.msra.mxu0 %v3802
  %5503 = vmatprep.subr.bf16.mxu0 %v3805
  %5504 = vmatpush1.bf16.msra.mxu0 %v3804
  %5505 = vmatprep.subr.bf16.mxu0 %v3807
  %5506 = vmatpush1.bf16.msra.mxu0 %v3806
  %5507 = vmatprep.subr.bf16.mxu0 %v3809
  %5508 = vmatpush1.bf16.msra.mxu0 %v3808
  %5509 = vmatprep.subr.bf16.mxu0 %v3811
  %5510 = vmatpush1.bf16.msra.mxu0 %v3810
  %5511 = vmatprep.subr.bf16.mxu0 %v3813
  %5512 = vmatpush1.bf16.msra.mxu0 %v3812
  %5513 = vmatprep.subr.bf16.mxu0 %v3815
  %5514 = vmatpush1.bf16.msra.mxu0 %v3814
  %5515 = vmatprep.subr.bf16.mxu0 %v3817
  %5516 = vmatpush1.bf16.msra.mxu0 %v3816
  %5517 = vmatprep.mubr.bf16.mxu0 %v957
  %5518 = vmatmul.mubr.bf16.gmra.mrb[0].mxu0 %v956
  %v5519 = vpop.f32.mrb[0].mxu0
  %v5520 = vadd.f32 %v5479, %v5519
  %v5521 = vpop.f32.mrb[0].mxu0
  %v5522 = vadd.f32 %v5481, %v5521
  %v5523 = vpop.f32.mrb[0].mxu0
  %v5524 = vpop.f32.mrb[0].mxu0
  %5525 = vdwg.mxu0
  %5526 = vmatprep.subr.bf16.mxu0 %v3819
  %5527 = vmatpush1.bf16.msra.mxu0 %v3818
  %5528 = vmatprep.subr.bf16.mxu0 %v3821
  %5529 = vmatpush1.bf16.msra.mxu0 %v3820
  %5530 = vmatprep.subr.bf16.mxu0 %v3823
  %5531 = vmatpush1.bf16.msra.mxu0 %v3822
  %5532 = vmatprep.subr.bf16.mxu0 %v3825
  %5533 = vmatpush1.bf16.msra.mxu0 %v3824
  %5534 = vmatprep.subr.bf16.mxu0 %v3827
  %5535 = vmatpush1.bf16.msra.mxu0 %v3826
  %5536 = vmatprep.subr.bf16.mxu0 %v3829
  %5537 = vmatpush1.bf16.msra.mxu0 %v3828
  %5538 = vmatprep.subr.bf16.mxu0 %v3831
  %5539 = vmatpush1.bf16.msra.mxu0 %v3830
  %5540 = vmatprep.subr.bf16.mxu0 %v3833
  %5541 = vmatpush1.bf16.msra.mxu0 %v3832
  %5542 = vmatprep.subr.bf16.mxu0 %v3835
  %5543 = vmatpush1.bf16.msra.mxu0 %v3834
  %5544 = vmatprep.subr.bf16.mxu0 %v3837
  %5545 = vmatpush1.bf16.msra.mxu0 %v3836
  %5546 = vmatprep.subr.bf16.mxu0 %v3839
  %5547 = vmatpush1.bf16.msra.mxu0 %v3838
  %5548 = vmatprep.subr.bf16.mxu0 %v3841
  %5549 = vmatpush1.bf16.msra.mxu0 %v3840
  %5550 = vmatprep.subr.bf16.mxu0 %v3843
  %5551 = vmatpush1.bf16.msra.mxu0 %v3842
  %5552 = vmatprep.subr.bf16.mxu0 %v3845
  %5553 = vmatpush1.bf16.msra.mxu0 %v3844
  %5554 = vmatprep.subr.bf16.mxu0 %v3847
  %5555 = vmatpush1.bf16.msra.mxu0 %v3846
  %5556 = vmatprep.subr.bf16.mxu0 %v3849
  %5557 = vmatpush1.bf16.msra.mxu0 %v3848
  %5558 = vmatprep.mubr.bf16.mxu0 %v959
  %5559 = vmatmul.mubr.bf16.gmra.mrb[0].mxu0 %v958
  %v5560 = vpop.f32.mrb[0].mxu0
  %v5561 = vadd.f32 %v5520, %v5560
  %v5562 = vpop.f32.mrb[0].mxu0
  %v5563 = vadd.f32 %v5522, %v5562
  %v5564 = vpop.f32.mrb[0].mxu0
  %v5565 = vpop.f32.mrb[0].mxu0
  %5566 = vdwg.mxu0
  %5567 = vmatprep.subr.bf16.mxu0 %v3851
  %5568 = vmatpush1.bf16.msra.mxu0 %v3850
  %5569 = vmatprep.subr.bf16.mxu0 %v3853
  %5570 = vmatpush1.bf16.msra.mxu0 %v3852
  %5571 = vmatprep.subr.bf16.mxu0 %v3855
  %5572 = vmatpush1.bf16.msra.mxu0 %v3854
  %5573 = vmatprep.subr.bf16.mxu0 %v3857
  %5574 = vmatpush1.bf16.msra.mxu0 %v3856
  %5575 = vmatprep.subr.bf16.mxu0 %v3859
  %5576 = vmatpush1.bf16.msra.mxu0 %v3858
  %5577 = vmatprep.subr.bf16.mxu0 %v3861
  %5578 = vmatpush1.bf16.msra.mxu0 %v3860
  %5579 = vmatprep.subr.bf16.mxu0 %v3863
  %5580 = vmatpush1.bf16.msra.mxu0 %v3862
  %5581 = vmatprep.subr.bf16.mxu0 %v3865
  %5582 = vmatpush1.bf16.msra.mxu0 %v3864
  %5583 = vmatprep.subr.bf16.mxu0 %v3867
  %5584 = vmatpush1.bf16.msra.mxu0 %v3866
  %5585 = vmatprep.subr.bf16.mxu0 %v3869
  %5586 = vmatpush1.bf16.msra.mxu0 %v3868
  %5587 = vmatprep.subr.bf16.mxu0 %v3871
  %5588 = vmatpush1.bf16.msra.mxu0 %v3870
  %5589 = vmatprep.subr.bf16.mxu0 %v3873
  %5590 = vmatpush1.bf16.msra.mxu0 %v3872
  %5591 = vmatprep.subr.bf16.mxu0 %v3875
  %5592 = vmatpush1.bf16.msra.mxu0 %v3874
  %5593 = vmatprep.subr.bf16.mxu0 %v3877
  %5594 = vmatpush1.bf16.msra.mxu0 %v3876
  %5595 = vmatprep.subr.bf16.mxu0 %v3879
  %5596 = vmatpush1.bf16.msra.mxu0 %v3878
  %5597 = vmatprep.subr.bf16.mxu0 %v3881
  %5598 = vmatpush1.bf16.msra.mxu0 %v3880
  %5599 = vmatprep.mubr.bf16.mxu0 %v961
  %5600 = vmatmul.mubr.bf16.gmra.mrb[0].mxu0 %v960
  %v5601 = vpop.f32.mrb[0].mxu0
  %v5602 = vadd.f32 %v5561, %v5601
  %v5603 = vpop.f32.mrb[0].mxu0
  %v5604 = vadd.f32 %v5563, %v5603
  %v5605 = vpop.f32.mrb[0].mxu0
  %v5606 = vpop.f32.mrb[0].mxu0
  %5607 = vdwg.mxu0
  %5608 = vmatprep.subr.bf16.mxu0 %v3883
  %5609 = vmatpush1.bf16.msra.mxu0 %v3882
  %5610 = vmatprep.subr.bf16.mxu0 %v3885
  %5611 = vmatpush1.bf16.msra.mxu0 %v3884
  %5612 = vmatprep.subr.bf16.mxu0 %v3887
  %5613 = vmatpush1.bf16.msra.mxu0 %v3886
  %5614 = vmatprep.subr.bf16.mxu0 %v3889
  %5615 = vmatpush1.bf16.msra.mxu0 %v3888
  %5616 = vmatprep.subr.bf16.mxu0 %v3891
  %5617 = vmatpush1.bf16.msra.mxu0 %v3890
  %5618 = vmatprep.subr.bf16.mxu0 %v3893
  %5619 = vmatpush1.bf16.msra.mxu0 %v3892
  %5620 = vmatprep.subr.bf16.mxu0 %v3895
  %5621 = vmatpush1.bf16.msra.mxu0 %v3894
  %5622 = vmatprep.subr.bf16.mxu0 %v3897
  %5623 = vmatpush1.bf16.msra.mxu0 %v3896
  %5624 = vmatprep.subr.bf16.mxu0 %v3899
  %5625 = vmatpush1.bf16.msra.mxu0 %v3898
  %5626 = vmatprep.subr.bf16.mxu0 %v3901
  %5627 = vmatpush1.bf16.msra.mxu0 %v3900
  %5628 = vmatprep.subr.bf16.mxu0 %v3903
  %5629 = vmatpush1.bf16.msra.mxu0 %v3902
  %5630 = vmatprep.subr.bf16.mxu0 %v3905
  %5631 = vmatpush1.bf16.msra.mxu0 %v3904
  %5632 = vmatprep.subr.bf16.mxu0 %v3907
  %5633 = vmatpush1.bf16.msra.mxu0 %v3906
  %5634 = vmatprep.subr.bf16.mxu0 %v3909
  %5635 = vmatpush1.bf16.msra.mxu0 %v3908
  %5636 = vmatprep.subr.bf16.mxu0 %v3911
  %5637 = vmatpush1.bf16.msra.mxu0 %v3910
  %5638 = vmatprep.subr.bf16.mxu0 %v3913
  %5639 = vmatpush1.bf16.msra.mxu0 %v3912
  %5640 = vmatprep.mubr.bf16.mxu0 %v963
  %5641 = vmatmul.mubr.bf16.gmra.mrb[0].mxu0 %v962
  %v5642 = vpop.f32.mrb[0].mxu0
  %v5643 = vadd.f32 %v5602, %v5642
  %v5644 = vpop.f32.mrb[0].mxu0
  %v5645 = vadd.f32 %v5604, %v5644
  %v5646 = vpop.f32.mrb[0].mxu0
  %v5647 = vpop.f32.mrb[0].mxu0
  %5648 = vdwg.mxu0
  %5649 = vmatprep.subr.bf16.mxu0 %v3915
  %5650 = vmatpush1.bf16.msra.mxu0 %v3914
  %5651 = vmatprep.subr.bf16.mxu0 %v3917
  %5652 = vmatpush1.bf16.msra.mxu0 %v3916
  %5653 = vmatprep.subr.bf16.mxu0 %v3919
  %5654 = vmatpush1.bf16.msra.mxu0 %v3918
  %5655 = vmatprep.subr.bf16.mxu0 %v3921
  %5656 = vmatpush1.bf16.msra.mxu0 %v3920
  %5657 = vmatprep.subr.bf16.mxu0 %v3923
  %5658 = vmatpush1.bf16.msra.mxu0 %v3922
  %5659 = vmatprep.subr.bf16.mxu0 %v3925
  %5660 = vmatpush1.bf16.msra.mxu0 %v3924
  %5661 = vmatprep.subr.bf16.mxu0 %v3927
  %5662 = vmatpush1.bf16.msra.mxu0 %v3926
  %5663 = vmatprep.subr.bf16.mxu0 %v3929
  %5664 = vmatpush1.bf16.msra.mxu0 %v3928
  %5665 = vmatprep.subr.bf16.mxu0 %v3931
  %5666 = vmatpush1.bf16.msra.mxu0 %v3930
  %5667 = vmatprep.subr.bf16.mxu0 %v3933
  %5668 = vmatpush1.bf16.msra.mxu0 %v3932
  %5669 = vmatprep.subr.bf16.mxu0 %v3935
  %5670 = vmatpush1.bf16.msra.mxu0 %v3934
  %5671 = vmatprep.subr.bf16.mxu0 %v3937
  %5672 = vmatpush1.bf16.msra.mxu0 %v3936
  %5673 = vmatprep.subr.bf16.mxu0 %v3939
  %5674 = vmatpush1.bf16.msra.mxu0 %v3938
  %5675 = vmatprep.subr.bf16.mxu0 %v3941
  %5676 = vmatpush1.bf16.msra.mxu0 %v3940
  %5677 = vmatprep.subr.bf16.mxu0 %v3943
  %5678 = vmatpush1.bf16.msra.mxu0 %v3942
  %5679 = vmatprep.subr.bf16.mxu0 %v3945
  %5680 = vmatpush1.bf16.msra.mxu0 %v3944
  %5681 = vmatprep.mubr.bf16.mxu0 %v965
  %5682 = vmatmul.mubr.bf16.gmra.mrb[0].mxu0 %v964
  %v5683 = vpop.f32.mrb[0].mxu0
  %v5684 = vadd.f32 %v5643, %v5683
  %v5685 = vpop.f32.mrb[0].mxu0
  %v5686 = vadd.f32 %v5645, %v5685
  %v5687 = vpop.f32.mrb[0].mxu0
  %v5688 = vpop.f32.mrb[0].mxu0
  %5689 = vdwg.mxu0
  %5690 = vmatprep.subr.bf16.mxu0 %v3947
  %5691 = vmatpush1.bf16.msra.mxu0 %v3946
  %5692 = vmatprep.subr.bf16.mxu0 %v3949
  %5693 = vmatpush1.bf16.msra.mxu0 %v3948
  %5694 = vmatprep.subr.bf16.mxu0 %v3951
  %5695 = vmatpush1.bf16.msra.mxu0 %v3950
  %5696 = vmatprep.subr.bf16.mxu0 %v3953
  %5697 = vmatpush1.bf16.msra.mxu0 %v3952
  %5698 = vmatprep.subr.bf16.mxu0 %v3955
  %5699 = vmatpush1.bf16.msra.mxu0 %v3954
  %5700 = vmatprep.subr.bf16.mxu0 %v3957
  %5701 = vmatpush1.bf16.msra.mxu0 %v3956
  %5702 = vmatprep.subr.bf16.mxu0 %v3959
  %5703 = vmatpush1.bf16.msra.mxu0 %v3958
  %5704 = vmatprep.subr.bf16.mxu0 %v3961
  %5705 = vmatpush1.bf16.msra.mxu0 %v3960
  %5706 = vmatprep.subr.bf16.mxu0 %v3963
  %5707 = vmatpush1.bf16.msra.mxu0 %v3962
  %5708 = vmatprep.subr.bf16.mxu0 %v3965
  %5709 = vmatpush1.bf16.msra.mxu0 %v3964
  %5710 = vmatprep.subr.bf16.mxu0 %v3967
  %5711 = vmatpush1.bf16.msra.mxu0 %v3966
  %5712 = vmatprep.subr.bf16.mxu0 %v3969
  %5713 = vmatpush1.bf16.msra.mxu0 %v3968
  %5714 = vmatprep.subr.bf16.mxu0 %v3971
  %5715 = vmatpush1.bf16.msra.mxu0 %v3970
  %5716 = vmatprep.subr.bf16.mxu0 %v3973
  %5717 = vmatpush1.bf16.msra.mxu0 %v3972
  %5718 = vmatprep.subr.bf16.mxu0 %v3975
  %5719 = vmatpush1.bf16.msra.mxu0 %v3974
  %5720 = vmatprep.subr.bf16.mxu0 %v3977
  %5721 = vmatpush1.bf16.msra.mxu0 %v3976
  %5722 = vmatprep.mubr.bf16.mxu0 %v967
  %5723 = vmatmul.mubr.bf16.gmra.mrb[0].mxu0 %v966
  %v5724 = vpop.f32.mrb[0].mxu0
  %v5725 = vadd.f32 %v5684, %v5724
  %v5726 = vpop.f32.mrb[0].mxu0
  %v5727 = vadd.f32 %v5686, %v5726
  %v5728 = vpop.f32.mrb[0].mxu0
  %v5729 = vpop.f32.mrb[0].mxu0
  %5730 = vdwg.mxu0
  %5731 = vmatprep.subr.bf16.mxu0 %v3979
  %5732 = vmatpush1.bf16.msra.mxu0 %v3978
  %5733 = vmatprep.subr.bf16.mxu0 %v3981
  %5734 = vmatpush1.bf16.msra.mxu0 %v3980
  %5735 = vmatprep.subr.bf16.mxu0 %v3983
  %5736 = vmatpush1.bf16.msra.mxu0 %v3982
  %5737 = vmatprep.subr.bf16.mxu0 %v3985
  %5738 = vmatpush1.bf16.msra.mxu0 %v3984
  %5739 = vmatprep.subr.bf16.mxu0 %v3987
  %5740 = vmatpush1.bf16.msra.mxu0 %v3986
  %5741 = vmatprep.subr.bf16.mxu0 %v3989
  %5742 = vmatpush1.bf16.msra.mxu0 %v3988
  %5743 = vmatprep.subr.bf16.mxu0 %v3991
  %5744 = vmatpush1.bf16.msra.mxu0 %v3990
  %5745 = vmatprep.subr.bf16.mxu0 %v3993
  %5746 = vmatpush1.bf16.msra.mxu0 %v3992
  %5747 = vmatprep.subr.bf16.mxu0 %v3995
  %5748 = vmatpush1.bf16.msra.mxu0 %v3994
  %5749 = vmatprep.subr.bf16.mxu0 %v3997
  %5750 = vmatpush1.bf16.msra.mxu0 %v3996
  %5751 = vmatprep.subr.bf16.mxu0 %v3999
  %5752 = vmatpush1.bf16.msra.mxu0 %v3998
  %5753 = vmatprep.subr.bf16.mxu0 %v4001
  %5754 = vmatpush1.bf16.msra.mxu0 %v4000
  %5755 = vmatprep.subr.bf16.mxu0 %v4003
  %5756 = vmatpush1.bf16.msra.mxu0 %v4002
  %5757 = vmatprep.subr.bf16.mxu0 %v4005
  %5758 = vmatpush1.bf16.msra.mxu0 %v4004
  %5759 = vmatprep.subr.bf16.mxu0 %v4007
  %5760 = vmatpush1.bf16.msra.mxu0 %v4006
  %5761 = vmatprep.subr.bf16.mxu0 %v4009
  %5762 = vmatpush1.bf16.msra.mxu0 %v4008
  %5763 = vmatprep.mubr.bf16.mxu0 %v969
  %5764 = vmatmul.mubr.bf16.gmra.mrb[0].mxu0 %v968
  %v5765 = vpop.f32.mrb[0].mxu0
  %v5766 = vadd.f32 %v5725, %v5765
  %v5767 = vpop.f32.mrb[0].mxu0
  %v5768 = vadd.f32 %v5727, %v5767
  %v5769 = vpop.f32.mrb[0].mxu0
  %v5770 = vpop.f32.mrb[0].mxu0
  %5771 = vdwg.mxu0
  %5772 = vmatprep.subr.bf16.mxu0 %v4011
  %5773 = vmatpush1.bf16.msra.mxu0 %v4010
  %5774 = vmatprep.subr.bf16.mxu0 %v4013
  %5775 = vmatpush1.bf16.msra.mxu0 %v4012
  %5776 = vmatprep.subr.bf16.mxu0 %v4015
  %5777 = vmatpush1.bf16.msra.mxu0 %v4014
  %5778 = vmatprep.subr.bf16.mxu0 %v4017
  %5779 = vmatpush1.bf16.msra.mxu0 %v4016
  %5780 = vmatprep.subr.bf16.mxu0 %v4019
  %5781 = vmatpush1.bf16.msra.mxu0 %v4018
  %5782 = vmatprep.subr.bf16.mxu0 %v4021
  %5783 = vmatpush1.bf16.msra.mxu0 %v4020
  %5784 = vmatprep.subr.bf16.mxu0 %v4023
  %5785 = vmatpush1.bf16.msra.mxu0 %v4022
  %5786 = vmatprep.subr.bf16.mxu0 %v4025
  %5787 = vmatpush1.bf16.msra.mxu0 %v4024
  %5788 = vmatprep.subr.bf16.mxu0 %v4027
  %5789 = vmatpush1.bf16.msra.mxu0 %v4026
  %5790 = vmatprep.subr.bf16.mxu0 %v4029
  %5791 = vmatpush1.bf16.msra.mxu0 %v4028
  %5792 = vmatprep.subr.bf16.mxu0 %v4031
  %5793 = vmatpush1.bf16.msra.mxu0 %v4030
  %5794 = vmatprep.subr.bf16.mxu0 %v4033
  %5795 = vmatpush1.bf16.msra.mxu0 %v4032
  %5796 = vmatprep.subr.bf16.mxu0 %v4035
  %5797 = vmatpush1.bf16.msra.mxu0 %v4034
  %5798 = vmatprep.subr.bf16.mxu0 %v4037
  %5799 = vmatpush1.bf16.msra.mxu0 %v4036
  %5800 = vmatprep.subr.bf16.mxu0 %v4039
  %5801 = vmatpush1.bf16.msra.mxu0 %v4038
  %5802 = vmatprep.subr.bf16.mxu0 %v4041
  %5803 = vmatpush1.bf16.msra.mxu0 %v4040
  %5804 = vmatprep.mubr.bf16.mxu0 %v971
  %5805 = vmatmul.mubr.bf16.gmra.mrb[0].mxu0 %v970
  %v5806 = vpop.f32.mrb[0].mxu0
  %v5807 = vadd.f32 %v5766, %v5806
  %v5808 = vpop.f32.mrb[0].mxu0
  %v5809 = vadd.f32 %v5768, %v5808
  %v5810 = vpop.f32.mrb[0].mxu0
  %v5811 = vpop.f32.mrb[0].mxu0
  %5812 = vdwg.mxu0
  %5813 = vmatprep.subr.bf16.mxu0 %v4043
  %5814 = vmatpush1.bf16.msra.mxu0 %v4042
  %5815 = vmatprep.subr.bf16.mxu0 %v4045
  %5816 = vmatpush1.bf16.msra.mxu0 %v4044
  %5817 = vmatprep.subr.bf16.mxu0 %v4047
  %5818 = vmatpush1.bf16.msra.mxu0 %v4046
  %5819 = vmatprep.subr.bf16.mxu0 %v4049
  %5820 = vmatpush1.bf16.msra.mxu0 %v4048
  %5821 = vmatprep.subr.bf16.mxu0 %v4051
  %5822 = vmatpush1.bf16.msra.mxu0 %v4050
  %5823 = vmatprep.subr.bf16.mxu0 %v4053
  %5824 = vmatpush1.bf16.msra.mxu0 %v4052
  %5825 = vmatprep.subr.bf16.mxu0 %v4055
  %5826 = vmatpush1.bf16.msra.mxu0 %v4054
  %5827 = vmatprep.subr.bf16.mxu0 %v4057
  %5828 = vmatpush1.bf16.msra.mxu0 %v4056
  %5829 = vmatprep.subr.bf16.mxu0 %v4059
  %5830 = vmatpush1.bf16.msra.mxu0 %v4058
  %5831 = vmatprep.subr.bf16.mxu0 %v4061
  %5832 = vmatpush1.bf16.msra.mxu0 %v4060
  %5833 = vmatprep.subr.bf16.mxu0 %v4063
  %5834 = vmatpush1.bf16.msra.mxu0 %v4062
  %5835 = vmatprep.subr.bf16.mxu0 %v4065
  %5836 = vmatpush1.bf16.msra.mxu0 %v4064
  %5837 = vmatprep.subr.bf16.mxu0 %v4067
  %5838 = vmatpush1.bf16.msra.mxu0 %v4066
  %5839 = vmatprep.subr.bf16.mxu0 %v4069
  %5840 = vmatpush1.bf16.msra.mxu0 %v4068
  %5841 = vmatprep.subr.bf16.mxu0 %v4071
  %5842 = vmatpush1.bf16.msra.mxu0 %v4070
  %5843 = vmatprep.subr.bf16.mxu0 %v4073
  %5844 = vmatpush1.bf16.msra.mxu0 %v4072
  %5845 = vmatprep.mubr.bf16.mxu0 %v973
  %5846 = vmatmul.mubr.bf16.gmra.mrb[0].mxu0 %v972
  %v5847 = vpop.f32.mrb[0].mxu0
  %v5848 = vadd.f32 %v5807, %v5847
  %v5849 = vpop.f32.mrb[0].mxu0
  %v5850 = vadd.f32 %v5809, %v5849
  %v5851 = vpop.f32.mrb[0].mxu0
  %v5852 = vpop.f32.mrb[0].mxu0
  %5853 = vdwg.mxu0
  %5854 = vmatprep.subr.bf16.mxu0 %v4075
  %5855 = vmatpush1.bf16.msra.mxu0 %v4074
  %5856 = vmatprep.subr.bf16.mxu0 %v4077
  %5857 = vmatpush1.bf16.msra.mxu0 %v4076
  %5858 = vmatprep.subr.bf16.mxu0 %v4079
  %5859 = vmatpush1.bf16.msra.mxu0 %v4078
  %5860 = vmatprep.subr.bf16.mxu0 %v4081
  %5861 = vmatpush1.bf16.msra.mxu0 %v4080
  %5862 = vmatprep.subr.bf16.mxu0 %v4083
  %5863 = vmatpush1.bf16.msra.mxu0 %v4082
  %5864 = vmatprep.subr.bf16.mxu0 %v4085
  %5865 = vmatpush1.bf16.msra.mxu0 %v4084
  %5866 = vmatprep.subr.bf16.mxu0 %v4087
  %5867 = vmatpush1.bf16.msra.mxu0 %v4086
  %5868 = vmatprep.subr.bf16.mxu0 %v4089
  %5869 = vmatpush1.bf16.msra.mxu0 %v4088
  %5870 = vmatprep.subr.bf16.mxu0 %v4091
  %5871 = vmatpush1.bf16.msra.mxu0 %v4090
  %5872 = vmatprep.subr.bf16.mxu0 %v4093
  %5873 = vmatpush1.bf16.msra.mxu0 %v4092
  %5874 = vmatprep.subr.bf16.mxu0 %v4095
  %5875 = vmatpush1.bf16.msra.mxu0 %v4094
  %5876 = vmatprep.subr.bf16.mxu0 %v4097
  %5877 = vmatpush1.bf16.msra.mxu0 %v4096
  %5878 = vmatprep.subr.bf16.mxu0 %v4099
  %5879 = vmatpush1.bf16.msra.mxu0 %v4098
  %5880 = vmatprep.subr.bf16.mxu0 %v4101
  %5881 = vmatpush1.bf16.msra.mxu0 %v4100
  %5882 = vmatprep.subr.bf16.mxu0 %v4103
  %5883 = vmatpush1.bf16.msra.mxu0 %v4102
  %5884 = vmatprep.subr.bf16.mxu0 %v4105
  %5885 = vmatpush1.bf16.msra.mxu0 %v4104
  %5886 = vmatprep.mubr.bf16.mxu0 %v975
  %5887 = vmatmul.mubr.bf16.gmra.mrb[0].mxu0 %v974
  %v5888 = vpop.f32.mrb[0].mxu0
  %v5889 = vadd.f32 %v5848, %v5888
  %v5890 = vpop.f32.mrb[0].mxu0
  %v5891 = vadd.f32 %v5850, %v5890
  %v5892 = vpop.f32.mrb[0].mxu0
  %v5893 = vpop.f32.mrb[0].mxu0
  %5894 = vdwg.mxu0
  %5895 = vmatprep.subr.bf16.mxu0 %v4107
  %5896 = vmatpush1.bf16.msra.mxu0 %v4106
  %5897 = vmatprep.subr.bf16.mxu0 %v4109
  %5898 = vmatpush1.bf16.msra.mxu0 %v4108
  %5899 = vmatprep.subr.bf16.mxu0 %v4111
  %5900 = vmatpush1.bf16.msra.mxu0 %v4110
  %5901 = vmatprep.subr.bf16.mxu0 %v4113
  %5902 = vmatpush1.bf16.msra.mxu0 %v4112
  %5903 = vmatprep.subr.bf16.mxu0 %v4115
  %5904 = vmatpush1.bf16.msra.mxu0 %v4114
  %5905 = vmatprep.subr.bf16.mxu0 %v4117
  %5906 = vmatpush1.bf16.msra.mxu0 %v4116
  %5907 = vmatprep.subr.bf16.mxu0 %v4119
  %5908 = vmatpush1.bf16.msra.mxu0 %v4118
  %5909 = vmatprep.subr.bf16.mxu0 %v4121
  %5910 = vmatpush1.bf16.msra.mxu0 %v4120
  %5911 = vmatprep.subr.bf16.mxu0 %v4123
  %5912 = vmatpush1.bf16.msra.mxu0 %v4122
  %5913 = vmatprep.subr.bf16.mxu0 %v4125
  %5914 = vmatpush1.bf16.msra.mxu0 %v4124
  %5915 = vmatprep.subr.bf16.mxu0 %v4127
  %5916 = vmatpush1.bf16.msra.mxu0 %v4126
  %5917 = vmatprep.subr.bf16.mxu0 %v4129
  %5918 = vmatpush1.bf16.msra.mxu0 %v4128
  %5919 = vmatprep.subr.bf16.mxu0 %v4131
  %5920 = vmatpush1.bf16.msra.mxu0 %v4130
  %5921 = vmatprep.subr.bf16.mxu0 %v4133
  %5922 = vmatpush1.bf16.msra.mxu0 %v4132
  %5923 = vmatprep.subr.bf16.mxu0 %v4135
  %5924 = vmatpush1.bf16.msra.mxu0 %v4134
  %5925 = vmatprep.subr.bf16.mxu0 %v4137
  %5926 = vmatpush1.bf16.msra.mxu0 %v4136
  %5927 = vmatprep.mubr.bf16.mxu0 %v977
  %5928 = vmatmul.mubr.bf16.gmra.mrb[0].mxu0 %v976
  %v5929 = vpop.f32.mrb[0].mxu0
  %v5930 = vadd.f32 %v5889, %v5929
  %v5931 = vpop.f32.mrb[0].mxu0
  %v5932 = vadd.f32 %v5891, %v5931
  %v5933 = vpop.f32.mrb[0].mxu0
  %v5934 = vpop.f32.mrb[0].mxu0
  %5935 = vdwg.mxu0
  %5936 = vmatprep.subr.bf16.mxu0 %v4139
  %5937 = vmatpush1.bf16.msra.mxu0 %v4138
  %5938 = vmatprep.subr.bf16.mxu0 %v4141
  %5939 = vmatpush1.bf16.msra.mxu0 %v4140
  %5940 = vmatprep.subr.bf16.mxu0 %v4143
  %5941 = vmatpush1.bf16.msra.mxu0 %v4142
  %5942 = vmatprep.subr.bf16.mxu0 %v4145
  %5943 = vmatpush1.bf16.msra.mxu0 %v4144
  %5944 = vmatprep.subr.bf16.mxu0 %v4147
  %5945 = vmatpush1.bf16.msra.mxu0 %v4146
  %5946 = vmatprep.subr.bf16.mxu0 %v4149
  %5947 = vmatpush1.bf16.msra.mxu0 %v4148
  %5948 = vmatprep.subr.bf16.mxu0 %v4151
  %5949 = vmatpush1.bf16.msra.mxu0 %v4150
  %5950 = vmatprep.subr.bf16.mxu0 %v4153
  %5951 = vmatpush1.bf16.msra.mxu0 %v4152
  %5952 = vmatprep.subr.bf16.mxu0 %v4155
  %5953 = vmatpush1.bf16.msra.mxu0 %v4154
  %5954 = vmatprep.subr.bf16.mxu0 %v4157
  %5955 = vmatpush1.bf16.msra.mxu0 %v4156
  %5956 = vmatprep.subr.bf16.mxu0 %v4159
  %5957 = vmatpush1.bf16.msra.mxu0 %v4158
  %5958 = vmatprep.subr.bf16.mxu0 %v4161
  %5959 = vmatpush1.bf16.msra.mxu0 %v4160
  %5960 = vmatprep.subr.bf16.mxu0 %v4163
  %5961 = vmatpush1.bf16.msra.mxu0 %v4162
  %5962 = vmatprep.subr.bf16.mxu0 %v4165
  %5963 = vmatpush1.bf16.msra.mxu0 %v4164
  %5964 = vmatprep.subr.bf16.mxu0 %v4167
  %5965 = vmatpush1.bf16.msra.mxu0 %v4166
  %5966 = vmatprep.subr.bf16.mxu0 %v4169
  %5967 = vmatpush1.bf16.msra.mxu0 %v4168
  %5968 = vmatprep.mubr.bf16.mxu0 %v979
  %5969 = vmatmul.mubr.bf16.gmra.mrb[0].mxu0 %v978
  %v5970 = vpop.f32.mrb[0].mxu0
  %v5971 = vadd.f32 %v5930, %v5970
  %v5972 = vpop.f32.mrb[0].mxu0
  %v5973 = vadd.f32 %v5932, %v5972
  %v5974 = vpop.f32.mrb[0].mxu0
  %v5975 = vpop.f32.mrb[0].mxu0
  %5976 = vdwg.mxu0
  %5977 = vmatprep.subr.bf16.mxu0 %v4171
  %5978 = vmatpush1.bf16.msra.mxu0 %v4170
  %5979 = vmatprep.subr.bf16.mxu0 %v4173
  %5980 = vmatpush1.bf16.msra.mxu0 %v4172
  %5981 = vmatprep.subr.bf16.mxu0 %v4175
  %5982 = vmatpush1.bf16.msra.mxu0 %v4174
  %5983 = vmatprep.subr.bf16.mxu0 %v4177
  %5984 = vmatpush1.bf16.msra.mxu0 %v4176
  %5985 = vmatprep.subr.bf16.mxu0 %v4179
  %5986 = vmatpush1.bf16.msra.mxu0 %v4178
  %5987 = vmatprep.subr.bf16.mxu0 %v4181
  %5988 = vmatpush1.bf16.msra.mxu0 %v4180
  %5989 = vmatprep.subr.bf16.mxu0 %v4183
  %5990 = vmatpush1.bf16.msra.mxu0 %v4182
  %5991 = vmatprep.subr.bf16.mxu0 %v4185
  %5992 = vmatpush1.bf16.msra.mxu0 %v4184
  %5993 = vmatprep.subr.bf16.mxu0 %v4187
  %5994 = vmatpush1.bf16.msra.mxu0 %v4186
  %5995 = vmatprep.subr.bf16.mxu0 %v4189
  %5996 = vmatpush1.bf16.msra.mxu0 %v4188
  %5997 = vmatprep.subr.bf16.mxu0 %v4191
  %5998 = vmatpush1.bf16.msra.mxu0 %v4190
  %5999 = vmatprep.subr.bf16.mxu0 %v4193
  %6000 = vmatpush1.bf16.msra.mxu0 %v4192
  %6001 = vmatprep.subr.bf16.mxu0 %v4195
  %6002 = vmatpush1.bf16.msra.mxu0 %v4194
  %6003 = vmatprep.subr.bf16.mxu0 %v4197
  %6004 = vmatpush1.bf16.msra.mxu0 %v4196
  %6005 = vmatprep.subr.bf16.mxu0 %v4199
  %6006 = vmatpush1.bf16.msra.mxu0 %v4198
  %6007 = vmatprep.subr.bf16.mxu0 %v4201
  %6008 = vmatpush1.bf16.msra.mxu0 %v4200
  %6009 = vmatprep.mubr.bf16.mxu0 %v981
  %6010 = vmatmul.mubr.bf16.gmra.mrb[0].mxu0 %v980
  %v6011 = vpop.f32.mrb[0].mxu0
  %v6012 = vadd.f32 %v5971, %v6011
  %v6013 = vpop.f32.mrb[0].mxu0
  %v6014 = vadd.f32 %v5973, %v6013
  %v6015 = vpop.f32.mrb[0].mxu0
  %v6016 = vpop.f32.mrb[0].mxu0
  %6017 = vdwg.mxu0
  %6018 = vmatprep.subr.bf16.mxu0 %v4203
  %6019 = vmatpush1.bf16.msra.mxu0 %v4202
  %6020 = vmatprep.subr.bf16.mxu0 %v4205
  %6021 = vmatpush1.bf16.msra.mxu0 %v4204
  %6022 = vmatprep.subr.bf16.mxu0 %v4207
  %6023 = vmatpush1.bf16.msra.mxu0 %v4206
  %6024 = vmatprep.subr.bf16.mxu0 %v4209
  %6025 = vmatpush1.bf16.msra.mxu0 %v4208
  %6026 = vmatprep.subr.bf16.mxu0 %v4211
  %6027 = vmatpush1.bf16.msra.mxu0 %v4210
  %6028 = vmatprep.subr.bf16.mxu0 %v4213
  %6029 = vmatpush1.bf16.msra.mxu0 %v4212
  %6030 = vmatprep.subr.bf16.mxu0 %v4215
  %6031 = vmatpush1.bf16.msra.mxu0 %v4214
  %6032 = vmatprep.subr.bf16.mxu0 %v4217
  %6033 = vmatpush1.bf16.msra.mxu0 %v4216
  %6034 = vmatprep.subr.bf16.mxu0 %v4219
  %6035 = vmatpush1.bf16.msra.mxu0 %v4218
  %6036 = vmatprep.subr.bf16.mxu0 %v4221
  %6037 = vmatpush1.bf16.msra.mxu0 %v4220
  %6038 = vmatprep.subr.bf16.mxu0 %v4223
  %6039 = vmatpush1.bf16.msra.mxu0 %v4222
  %6040 = vmatprep.subr.bf16.mxu0 %v4225
  %6041 = vmatpush1.bf16.msra.mxu0 %v4224
  %6042 = vmatprep.subr.bf16.mxu0 %v4227
  %6043 = vmatpush1.bf16.msra.mxu0 %v4226
  %6044 = vmatprep.subr.bf16.mxu0 %v4229
  %6045 = vmatpush1.bf16.msra.mxu0 %v4228
  %6046 = vmatprep.subr.bf16.mxu0 %v4231
  %6047 = vmatpush1.bf16.msra.mxu0 %v4230
  %6048 = vmatprep.subr.bf16.mxu0 %v4233
  %6049 = vmatpush1.bf16.msra.mxu0 %v4232
  %6050 = vmatprep.mubr.bf16.mxu0 %v983
  %6051 = vmatmul.mubr.bf16.gmra.mrb[0].mxu0 %v982
  %v6052 = vpop.f32.mrb[0].mxu0
  %v6053 = vadd.f32 %v6012, %v6052
  %v6054 = vpop.f32.mrb[0].mxu0
  %v6055 = vadd.f32 %v6014, %v6054
  %v6056 = vpop.f32.mrb[0].mxu0
  %v6057 = vpop.f32.mrb[0].mxu0
  %6058 = vdwg.mxu0
  %v6059 = vld [vmem:[%s3] sm:$0xff]
  %v6060 = vld [vmem:[%s3 + $0x8] sm:$0xff]
  %v6061 = vld [vmem:[%s3 + $0x10] sm:$0xff]
  %v6062 = vld [vmem:[%s3 + $0x18] sm:$0xff]
  %v6063 = vld [vmem:[%s3 + $0x20] sm:$0xff]
  %v6064 = vld [vmem:[%s3 + $0x28] sm:$0xff]
  %v6065 = vld [vmem:[%s3 + $0x30] sm:$0xff]
  %v6066 = vld [vmem:[%s3 + $0x38] sm:$0xff]
  %v6067 = vld [vmem:[%s3 + $0x40] sm:$0xff]
  %v6068 = vld [vmem:[%s3 + $0x48] sm:$0xff]
  %v6069 = vld [vmem:[%s3 + $0x50] sm:$0xff]
  %v6070 = vld [vmem:[%s3 + $0x58] sm:$0xff]
  %v6071 = vld [vmem:[%s3 + $0x60] sm:$0xff]
  %v6072 = vld [vmem:[%s3 + $0x68] sm:$0xff]
  %v6073 = vld [vmem:[%s3 + $0x70] sm:$0xff]
  %v6074 = vld [vmem:[%s3 + $0x78] sm:$0xff]
  %v6075 = vld [vmem:[%s3 + $0x80] sm:$0xff]
  %v6076 = vld [vmem:[%s3 + $0x88] sm:$0xff]
  %v6077 = vld [vmem:[%s3 + $0x90] sm:$0xff]
  %v6078 = vld [vmem:[%s3 + $0x98] sm:$0xff]
  %v6079 = vld [vmem:[%s3 + $0xa0] sm:$0xff]
  %v6080 = vld [vmem:[%s3 + $0xa8] sm:$0xff]
  %v6081 = vld [vmem:[%s3 + $0xb0] sm:$0xff]
  %v6082 = vld [vmem:[%s3 + $0xb8] sm:$0xff]
  %v6083 = vld [vmem:[%s3 + $0xc0] sm:$0xff]
  %v6084 = vld [vmem:[%s4] sm:$0x1]
  %v6086 = vlaneseq
  %v6087 = vshrl.u32 %v6086, 7
  %v6088 = vsub.s32 0, %v6087
  %v6089 = vrot.slane %v6084, %v6088
  %vm6091 = vcmask 588800
  %v6093 = vsel %vm6091, %v6055, 0
  %6095 = vmatprep.subr.mxu0 0.0
  %6096 = vmatpush1.msra.mxu0 %v6059
  %6097 = vmatprep.subr.mxu0 0.0
  %6098 = vmatpush1.msra.mxu0 %v6060
  %6099 = vmatprep.subr.mxu0 0.0
  %6100 = vmatpush1.msra.mxu0 %v6061
  %6101 = vmatprep.subr.mxu0 0.0
  %6102 = vmatpush1.msra.mxu0 %v6062
  %6103 = vmatprep.subr.mxu0 0.0
  %6104 = vmatpush1.msra.mxu0 %v6063
  %6105 = vmatprep.subr.mxu0 0.0
  %6106 = vmatpush1.msra.mxu0 %v6064
  %6107 = vmatprep.subr.mxu0 0.0
  %6108 = vmatpush1.msra.mxu0 %v6065
  %6109 = vmatprep.subr.mxu0 0.0
  %6110 = vmatpush1.msra.mxu0 %v6066
  %6111 = vmatprep.subr.mxu0 0.0
  %6112 = vmatpush1.msra.mxu0 %v6067
  %6113 = vmatprep.subr.mxu0 0.0
  %6114 = vmatpush1.msra.mxu0 %v6068
  %6115 = vmatprep.subr.mxu0 0.0
  %6116 = vmatpush1.msra.mxu0 %v6069
  %6117 = vmatprep.subr.mxu0 0.0
  %6118 = vmatpush1.msra.mxu0 %v6070
  %6119 = vmatprep.subr.mxu0 0.0
  %6120 = vmatpush1.msra.mxu0 %v6071
  %6121 = vmatprep.subr.mxu0 0.0
  %6122 = vmatpush1.msra.mxu0 %v6072
  %6123 = vmatprep.subr.mxu0 0.0
  %6124 = vmatpush1.msra.mxu0 %v6073
  %6125 = vmatprep.subr.mxu0 0.0
  %6126 = vmatpush1.msra.mxu0 %v6074
  %6127 = vmatprep.subr.mxu0 0.0
  %6128 = vmatpush1.msra.mxu0 %v6075
  %6129 = vmatprep.subr.mxu0 0.0
  %6130 = vmatpush1.msra.mxu0 %v6076
  %6131 = vmatprep.subr.mxu0 0.0
  %6132 = vmatpush1.msra.mxu0 %v6077
  %6133 = vmatprep.subr.mxu0 0.0
  %6134 = vmatpush1.msra.mxu0 %v6078
  %6135 = vmatprep.subr.mxu0 0.0
  %6136 = vmatpush1.msra.mxu0 %v6079
  %6137 = vmatprep.subr.mxu0 0.0
  %6138 = vmatpush1.msra.mxu0 %v6080
  %6139 = vmatprep.subr.mxu0 0.0
  %6140 = vmatpush1.msra.mxu0 %v6081
  %6141 = vmatprep.subr.mxu0 0.0
  %6142 = vmatpush1.msra.mxu0 %v6082
  %6143 = vmatprep.subr.mxu0 0.0
  %6144 = vmatpush1.msra.mxu0 %v6083
  %6145 = vmatprep.subr.mxu0 0.0
  %6146 = vmatpush1.msra.mxu0 0.0
  %6147 = vmatprep.subr.mxu0 0.0
  %6148 = vmatpush1.msra.mxu0 0.0
  %6149 = vmatprep.subr.mxu0 0.0
  %6150 = vmatpush1.msra.mxu0 0.0
  %6151 = vmatprep.subr.mxu0 0.0
  %6152 = vmatpush1.msra.mxu0 0.0
  %6153 = vmatprep.subr.mxu0 0.0
  %6154 = vmatpush1.msra.mxu0 0.0
  %6155 = vmatprep.subr.mxu0 0.0
  %6156 = vmatpush1.msra.mxu0 0.0
  %6157 = vmatprep.subr.mxu0 0.0
  %6158 = vmatpush1.msra.mxu0 0.0
  %6159 = vmatprep.mubr.f32.mxu0 %v6093
  %6160 = vmatmul.mubr.f32.gmra.mrb[0].mxu0 %v6053
  %v6161 = vpop.f32.mrb[0].mxu0
  %v6162 = vadd.f32 %v6089, %v6161
  %v6163 = vpop.f32.mrb[0].mxu0
  %6164 = vdwg.mxu0
  %6165 = vst [vmem:[%s5] sm:$0xff] %v6162
  %6166 = vmax.xlane.f32.xlu0 %v6162
  %v6167 = vpop.xlane.xlu0 %6166
  %v6168 = vsub.f32 %v6162, %v6167
  %v6169 = vmul.f32 %v6168, 1.442695
  %v6170 = vpow.pop %v6169
  %6171 = vadd.xlane.f32.xlu0 %v6170
  %v6172 = vpop.xlane.xlu0 %6171
  %v6173 = vlog2.pop %v6172
  %v6174 = vmul.f32 %v6173, 0.6931472
  %v6175 = vsub.f32 %v6168, %v6174
  %6176 = vst [vmem:[%s6] sm:$0xff] %v6175
  // Predicated region
  $region22: #{mlp_policy_forward.1} parent=0 // pred_check
    _
  $region23: #{mlp_policy_forward.1} parent=0 // pred_check_branch
    %6178 = sbr.rel (0) target = $region25
  $region24: #{mlp_policy_forward.1} parent=0 // pred_region
    _
  $region25: #{mlp_policy_forward.1} parent=0 // pred_fallthru
    _
  // Predicated region
  $region26: #{mlp_policy_forward.1} parent=0 // pred_check
    _
  $region27: #{mlp_policy_forward.1} parent=0 // pred_check_branch
    %6180 = sbr.rel (0) target = $region29
  $region28: #{mlp_policy_forward.1} parent=0 // pred_region
    _
  $region29: #{mlp_policy_forward.1} parent=0 // pred_fallthru
    _
  // Predicated region
  $region30: #{mlp_policy_forward.1} parent=0 // pred_check
    _
  $region31: #{mlp_policy_forward.1} parent=0 // pred_check_branch
    %6182 = sbr.rel (0) target = $region33
  $region32: #{mlp_policy_forward.1} parent=0 // pred_region
    _
  $region33: #{mlp_policy_forward.1} parent=0 // pred_fallthru
    _
  // Predicated region
  $region34: #{mlp_policy_forward.1} parent=0 // pred_check
    _
  $region35: #{mlp_policy_forward.1} parent=0 // pred_check_branch
    %6184 = sbr.rel (0) target = $region37
  $region36: #{mlp_policy_forward.1} parent=0 // pred_region
    _
  $region37: #{mlp_policy_forward.1} parent=0 // pred_fallthru
    _

</llo_original>
